<compile_context>
chip_gen: v7x
topology: tpu7x:2x2x1
jax: 0.10.0
libtpu: 0.0.40
codegen_flags: <defaults>
</compile_context>

<pallas_src>
import math
from functools import partial

import jax
import jax.numpy as jnp
from jax.experimental import pallas as pl
from jax.experimental.pallas import tpu as pltpu

LN_EPS = 1e-5
FFN_CHUNK = 512


# ----------------------------- shared helpers ------------------------------ #
def _layernorm(y, gamma, beta):
    mu = jnp.mean(y, axis=-1, keepdims=True)
    var = jnp.mean((y - mu) ** 2, axis=-1, keepdims=True)
    return (y - mu) * jax.lax.rsqrt(var + LN_EPS) * gamma + beta


def _softmax_last(s):
    s = s - jnp.max(s, axis=-1, keepdims=True)
    p = jnp.exp(s)
    return p * pl.reciprocal(jnp.sum(p, axis=-1, keepdims=True), approx=True)


# ----------------------- fused DeFUM forward kernel ------------------------- #
# Grid = (batch_blocks, num_layers). Per batch block (bb samples, M = bb*N rows):
#   step l==0: depth-aware semantic fusion
#       A = (xWq)(xWk)^T / sqrt(d),  V = xWv,  R = |log dv_i - log dv_j|
#       y = LayerNorm(x + softmax(A + R) @ V)      -> VMEM scratch
#   every step l: one post-norm encoder layer (relu FFN) with layer-l weights
#       y = LN1(y + MHA(y));  y = LN2(y + W2 relu(W1 y))
#   last step: write y to the output block.
def _defum_kernel(x_ref, ldvc_ref, ldvr_ref,
                  # fusion (semantic attention + LayerNorm), loop-invariant
                  fwqkv_ref, fbqkv_ref, fg_ref, fb_ref,
                  # encoder layer l weights (streamed over the layer grid axis)
                  win_ref, bin_ref, wo_ref, bo_ref, g1_ref, b1_ref,
                  w1_ref, bf1_ref, w2_ref, bf2_ref, g2_ref, b2_ref,
                  o_ref, y_scr, *, nhead):
    l = pl.program_id(1)
    bb, n, d = x_ref.shape
    m = bb * n
    dh = d // nhead
    nchunks = w1_ref.shape[0]

    # ---- depth-aware semantic fusion (first layer step only) ----
    @pl.when(l == 0)
    def _fuse():
        x = x_ref[...].reshape(m, d)                             # f32
        qkv = jnp.dot(x.astype(jnp.bfloat16), fwqkv_ref[...],
                      preferred_element_type=jnp.float32) + fbqkv_ref[...]
        qkv_b = qkv.astype(jnp.bfloat16)
        q = qkv_b[:, 0 * d:1 * d].reshape(bb, n, d)
        k = qkv_b[:, 1 * d:2 * d].reshape(bb, n, d)
        v = qkv_b[:, 2 * d:3 * d].reshape(bb, n, d)
        a = jnp.einsum('bqd,bkd->bqk', q, k,
                       preferred_element_type=jnp.float32) * (1.0 / math.sqrt(d))
        # log(max/min) == |log dv_i - log dv_j| for positive depths
        r = jnp.abs(ldvc_ref[...] - ldvr_ref[...])               # (bb, n, n)
        p = _softmax_last(a + r).astype(jnp.bfloat16)
        ctx = jnp.einsum('bqk,bkd->bqd', p, v,
                         preferred_element_type=jnp.float32).reshape(m, d)
        y_scr[...] = _layernorm(x + ctx, fg_ref[...], fb_ref[...])

    # ---- one transformer encoder layer (post-norm, relu FFN) ----
    y = y_scr[...]                                               # (m, d) f32
    yb = y.astype(jnp.bfloat16)

    # fused QKV projection: one dense (m, d) x (d, 3d) bf16 matmul, f32 acc
    qkv = jnp.dot(yb, win_ref[...], preferred_element_type=jnp.float32) + bin_ref[...]
    qkv_b = qkv.astype(jnp.bfloat16)

    scale = 1.0 / math.sqrt(dh)
    ctx_heads = []
    for h in range(nhead):                                       # static loop
        qh = qkv_b[:, 0 * d + h * dh:0 * d + (h + 1) * dh].reshape(bb, n, dh)
        kh = qkv_b[:, 1 * d + h * dh:1 * d + (h + 1) * dh].reshape(bb, n, dh)
        vh = qkv_b[:, 2 * d + h * dh:2 * d + (h + 1) * dh].reshape(bb, n, dh)
        s = jnp.einsum('bqd,bkd->bqk', qh, kh,
                       preferred_element_type=jnp.float32) * scale
        ph = _softmax_last(s).astype(jnp.bfloat16)
        ctx_heads.append(jnp.einsum('bqk,bkd->bqd', ph, vh,
                                    preferred_element_type=jnp.float32))
    # lane-concatenate heads (XLU has slack) -> single dense out-projection
    ctx = jnp.concatenate(ctx_heads, axis=-1).reshape(m, d).astype(jnp.bfloat16)
    attn = jnp.dot(ctx, wo_ref[...], preferred_element_type=jnp.float32) + bo_ref[...]
    y1 = _layernorm(y + attn, g1_ref[...], b1_ref[...])

    # FFN chunked over dim_ff: relu output never materializes as (m, dim_ff)
    y1b = y1.astype(jnp.bfloat16)
    ff = jnp.zeros((m, d), jnp.float32)
    for c in range(nchunks):                                     # static loop
        h = jnp.dot(y1b, w1_ref[c], preferred_element_type=jnp.float32) + bf1_ref[c]
        h = jnp.maximum(h, 0.0).astype(jnp.bfloat16)
        ff = ff + jnp.dot(h, w2_ref[c], preferred_element_type=jnp.float32)
    y2 = _layernorm(y1 + ff + bf2_ref[...], g2_ref[...], b2_ref[...])

    y_scr[...] = y2

    @pl.when(l == pl.num_programs(1) - 1)
    def _emit():
        o_ref[...] = y2.reshape(bb, n, d)


def defum_forward(ocr_feats, obj_feats, ocr_dvs, obj_dvs,
                  fusion_params, layer_params, nhead, batch_blocks=None):
    # glue: concat OCR + object visual entities along the sequence dim
    x = jnp.concatenate([ocr_feats, obj_feats], axis=1).astype(jnp.float32)   # (BS, N, d)
    dv = jnp.concatenate([ocr_dvs, obj_dvs], axis=1).astype(jnp.float32)      # (BS, N, 1)
    bs, n, d = x.shape
    num_layers = len(layer_params)
    assert num_layers >= 1

    ldv = jnp.log(dv)                           # (BS, N, 1)
    ldv_r = jnp.swapaxes(ldv, 1, 2)             # (BS, 1, N)  (avoids in-kernel transpose)

    if batch_blocks is None:
        # 2 parallel blocks keep both v7x TCs busy; on v6e/v5e this is a 2-step loop.
        batch_blocks = 2 if (bs >= 2 and bs % 2 == 0) else 1
    assert bs % batch_blocks == 0
    bb = bs // batch_blocks

    # ---- pack fusion (SemanticAttentionDeFUM + LayerNorm) params: fused QKV, bf16 ----
    wq, bq, wk, bk, wv, bv, fgamma, fbeta = fusion_params
    fwqkv = jnp.concatenate([wq, wk, wv], axis=1).astype(jnp.bfloat16)        # (d, 3d)
    fbqkv = jnp.concatenate([bq, bk, bv], axis=1).astype(jnp.float32)         # (1, 3d)
    fgamma = fgamma.astype(jnp.float32)
    fbeta = fbeta.astype(jnp.float32)

    # ---- pack encoder layer weights, stacked over L, bf16, FFN pre-chunked ----
    dim_ff = layer_params[0][6].shape[1]
    chunk = FFN_CHUNK if dim_ff % FFN_CHUNK == 0 else dim_ff
    nchunks = dim_ff // chunk

    packs = [[] for _ in range(12)]
    for (win, b_in, wout, bout, g1, b1, w1, bf1, w2, bf2, g2, b2) in layer_params:
        w1c = w1.reshape(d, nchunks, chunk).transpose(1, 0, 2)     # (nchunks, d, C)
        b1c = bf1.reshape(1, nchunks, chunk).transpose(1, 0, 2)    # (nchunks, 1, C)
        w2c = w2.reshape(nchunks, chunk, d)                        # (nchunks, C, d)
        vals = (win.astype(jnp.bfloat16), b_in.astype(jnp.float32),
                wout.astype(jnp.bfloat16), bout.astype(jnp.float32),
                g1.astype(jnp.float32), b1.astype(jnp.float32),
                w1c.astype(jnp.bfloat16), b1c.astype(jnp.float32),
                w2c.astype(jnp.bfloat16), bf2.astype(jnp.float32),
                g2.astype(jnp.float32), b2.astype(jnp.float32))
        for lst, val in zip(packs, vals):
            lst.append(val)
    stacked = tuple(jnp.stack(lst, axis=0) for lst in packs)

    # ---- BlockSpecs ----
    def const_spec(arr):          # grid-invariant weights: single-buffered, fetched once
        nd = arr.ndim
        return pl.BlockSpec(arr.shape, lambda b, l, _nd=nd: (0,) * _nd,
                            pipeline_mode=pl.Buffered(1))

    def layer_spec(arr):          # streamed per layer step (default double-buffer prefetch)
        shp = (None,) + arr.shape[1:]
        nd = arr.ndim
        return pl.BlockSpec(shp, lambda b, l, _nd=nd: (l,) + (0,) * (_nd - 1))

    x_spec = pl.BlockSpec((bb, n, d), lambda b, l: (b, 0, 0))
    dvc_spec = pl.BlockSpec((bb, n, 1), lambda b, l: (b, 0, 0))
    dvr_spec = pl.BlockSpec((bb, 1, n), lambda b, l: (b, 0, 0))
    out_spec = pl.BlockSpec((bb, n, d), lambda b, l: (b, 0, 0))

    in_specs = ([x_spec, dvc_spec, dvr_spec]
                + [const_spec(a) for a in (fwqkv, fbqkv, fgamma, fbeta)]
                + [layer_spec(a) for a in stacked])

    # ---- VMEM budget: streamed layer weights (x2 buffers) + constants + IO + activations ----
    nbytes = lambda a: a.size * a.dtype.itemsize
    per_layer = sum(nbytes(a) // num_layers for a in stacked)
    const_b = sum(nbytes(a) for a in (fwqkv, fbqkv, fgamma, fbeta))
    io_b = 2 * (bb * n * d * 4 + bb * n * 4 + bb * n * 4 + bb * n * d * 4)
    act_b = 4 * bb * n * (3 * d + chunk + nhead * n + 2 * d) * 4
    scratch_b = bb * n * d * 4
    est = 2 * per_layer + const_b + io_b + act_b + scratch_b
    vmem_limit = int(min(max(2 * est, 32 << 20), 64 << 20))

    return pl.pallas_call(
        partial(_defum_kernel, nhead=nhead),
        out_shape=jax.ShapeDtypeStruct((bs, n, d), jnp.float32),
        grid=(batch_blocks, num_layers),
        in_specs=in_specs,
        out_specs=out_spec,
        scratch_shapes=[pltpu.VMEM((bb * n, d), jnp.float32)],
        compiler_params=pltpu.CompilerParams(
            dimension_semantics=("parallel", "arbitrary"),
            vmem_limit_bytes=vmem_limit),
    )(x, ldv, ldv_r, fwqkv, fbqkv, fgamma, fbeta, *stacked)


# ------------------------- pure-JAX reference ------------------------------- #
def defum_reference(ocr_feats, obj_feats, ocr_dvs, obj_dvs,
                    fusion_params, layer_params, nhead):
    x = jnp.concatenate([ocr_feats, obj_feats], axis=1)
    dv = jnp.concatenate([ocr_dvs, obj_dvs], axis=1)
    wq, bq, wk, bk, wv, bv, g, beta = fusion_params
    d = x.shape[-1]
    q = x @ wq + bq
    k = x @ wk + bk
    v = x @ wv + bv
    a = jnp.einsum('bnd,bmd->bnm', q, k) / math.sqrt(d)
    dvt = jnp.swapaxes(dv, 1, 2)
    r = jnp.log(jnp.maximum(dv, dvt) / jnp.minimum(dv, dvt))
    p = jax.nn.softmax(a + r, axis=-1)
    y = _layernorm(x + jnp.einsum('bnm,bmd->bnd', p, v), g, beta)
    dh = d // nhead
    for (win, b_in, wout, bout, g1, b1, w1, bf1, w2, bf2, g2, b2) in layer_params:
        bs, n, _ = y.shape
        qkv = y @ win + b_in
        qh = qkv[..., :d].reshape(bs, n, nhead, dh)
        kh = qkv[..., d:2 * d].reshape(bs, n, nhead, dh)
        vh = qkv[..., 2 * d:].reshape(bs, n, nhead, dh)
        s = jnp.einsum('bnhd,bmhd->bhnm', qh, kh) / math.sqrt(dh)
        pp = jax.nn.softmax(s, axis=-1)
        ctx = jnp.einsum('bhnm,bmhd->bnhd', pp, vh).reshape(bs, n, d)
        y1 = _layernorm(y + ctx @ wout + bout, g1, b1)
        ff = jax.nn.relu(y1 @ w1 + bf1) @ w2 + bf2
        y = _layernorm(y1 + ff, g2, b2)
    return y


def init_params(key, d, nhead, num_layers, dim_ff):
    def w(k, shape, scale=0.1):
        return jax.random.normal(k, shape, dtype=jnp.float32) * scale

    k_fuse, k_layers = jax.random.split(key)
    kq, kk, kv, kbq, kbk, kbv = jax.random.split(k_fuse, 6)
    ones = jnp.ones((1, d), jnp.float32)
    zeros = jnp.zeros((1, d), jnp.float32)
    fusion = (
        w(kq, (d, d)), w(kbq, (1, d), 0.02),
        w(kk, (d, d)), w(kbk, (1, d), 0.02),
        w(kv, (d, d)), w(kbv, (1, d), 0.02),
        ones, zeros,                                  # self.LayerNorm
    )
    layers = []
    for lk in jax.random.split(k_layers, num_layers):
        k1, k2, k3, k4, k5, k6, k7, k8 = jax.random.split(lk, 8)
        layers.append((
            w(k1, (d, 3 * d)), w(k2, (1, 3 * d), 0.02),    # MHA in_proj
            w(k3, (d, d)), w(k4, (1, d), 0.02),            # MHA out_proj
            ones, zeros,                                   # norm1
            w(k5, (d, dim_ff)), w(k6, (1, dim_ff), 0.02),  # linear1
            w(k7, (dim_ff, d)), w(k8, (1, d), 0.02),       # linear2
            ones, zeros,                                   # norm2
        ))
    return fusion, layers


if __name__ == "__main__":
    key = jax.random.PRNGKey(0)
    BS, NUM_OCR, NUM_OBJ, HIDDEN = 2, 6, 10, 32
    NHEAD, NUM_LAYERS, DIM_FF = 4, 2, 2048   # PyTorch TransformerEncoderLayer default ffn

    k_in, k_par = jax.random.split(key)
    k1, k2, k3, k4 = jax.random.split(k_in, 4)
    ocr_feats = jax.random.normal(k1, (BS, NUM_OCR, HIDDEN), jnp.float32)
    obj_feats = jax.random.normal(k2, (BS, NUM_OBJ, HIDDEN), jnp.float32)
    # depth values are strictly positive (log of ratio must be defined)
    ocr_dvs = jax.random.uniform(k3, (BS, NUM_OCR, 1), jnp.float32, 0.5, 5.0)
    obj_dvs = jax.random.uniform(k4, (BS, NUM_OBJ, 1), jnp.float32, 0.5, 5.0)

    fusion_params, layer_params = init_params(k_par, HIDDEN, NHEAD, NUM_LAYERS, DIM_FF)

    out = defum_forward(ocr_feats, obj_feats, ocr_dvs, obj_dvs,
                        fusion_params, layer_params, NHEAD)
    out = jax.block_until_ready(out)

    ref = defum_reference(ocr_feats, obj_feats, ocr_dvs, obj_dvs,
                          fusion_params, layer_params, NHEAD)
    ref = jax.block_until_ready(ref)

    assert out.shape == (BS, NUM_OCR + NUM_OBJ, HIDDEN)
    # bf16 matmul operands (intentional, per perf review) vs f32 reference -> modest tolerance
    assert jnp.allclose(out, ref, atol=5e-2, rtol=5e-2), (
        f"max abs diff {float(jnp.max(jnp.abs(out - ref)))}")
    print("KERNEL_OK")
</pallas_src>

<mosaic_0001>
module attributes {stable_mosaic.version = 11 : i64} {
  func.func @_defum_kernel(%arg0: i32, %arg1: i32, %arg2: memref<1x16x32xf32, #tpu.memory_space<vmem>>, %arg3: memref<1x16x1xf32, #tpu.memory_space<vmem>>, %arg4: memref<1x1x16xf32, #tpu.memory_space<vmem>>, %arg5: memref<32x96xbf16, #tpu.memory_space<vmem>>, %arg6: memref<1x96xf32, #tpu.memory_space<vmem>>, %arg7: memref<1x32xf32, #tpu.memory_space<vmem>>, %arg8: memref<1x32xf32, #tpu.memory_space<vmem>>, %arg9: memref<1x32x96xbf16, #tpu.memory_space<vmem>>, %arg10: memref<1x1x96xf32, #tpu.memory_space<vmem>>, %arg11: memref<1x32x32xbf16, #tpu.memory_space<vmem>>, %arg12: memref<1x1x32xf32, #tpu.memory_space<vmem>>, %arg13: memref<1x1x32xf32, #tpu.memory_space<vmem>>, %arg14: memref<1x1x32xf32, #tpu.memory_space<vmem>>, %arg15: memref<1x4x32x512xbf16, #tpu.memory_space<vmem>>, %arg16: memref<1x4x1x512xf32, #tpu.memory_space<vmem>>, %arg17: memref<1x4x512x32xbf16, #tpu.memory_space<vmem>>, %arg18: memref<1x1x32xf32, #tpu.memory_space<vmem>>, %arg19: memref<1x1x32xf32, #tpu.memory_space<vmem>>, %arg20: memref<1x1x32xf32, #tpu.memory_space<vmem>>, %arg21: memref<1x16x32xf32, #tpu.memory_space<vmem>>, %arg22: memref<16x32xf32, #tpu.memory_space<vmem>>) attributes {dimension_semantics = [#tpu.dimension_semantics<parallel>, #tpu.dimension_semantics<arbitrary>], iteration_bounds = array<i64: 2, 2>, scalar_prefetch = 0 : i64, scratch_operands = 1 : i64, tpu.core_type = #tpu.core_type<tc>, window_params = [{transform_indices = @transform_0, window_bounds = array<i64: 1, 16, 32>}, {transform_indices = @transform_1, window_bounds = array<i64: 1, 16, 1>}, {transform_indices = @transform_2, window_bounds = array<i64: 1, 1, 16>}, {pipeline_mode = #tpu.pipeline_mode<synchronous>, transform_indices = @transform_3, window_bounds = array<i64: 32, 96>}, {pipeline_mode = #tpu.pipeline_mode<synchronous>, transform_indices = @transform_4, window_bounds = array<i64: 1, 96>}, {pipeline_mode = #tpu.pipeline_mode<synchronous>, transform_indices = @transform_5, window_bounds = array<i64: 1, 32>}, {pipeline_mode = #tpu.pipeline_mode<synchronous>, transform_indices = @transform_6, window_bounds = array<i64: 1, 32>}, {transform_indices = @transform_7, window_bounds = array<i64: 1, 32, 96>}, {transform_indices = @transform_8, window_bounds = array<i64: 1, 1, 96>}, {transform_indices = @transform_9, window_bounds = array<i64: 1, 32, 32>}, {transform_indices = @transform_10, window_bounds = array<i64: 1, 1, 32>}, {transform_indices = @transform_11, window_bounds = array<i64: 1, 1, 32>}, {transform_indices = @transform_12, window_bounds = array<i64: 1, 1, 32>}, {transform_indices = @transform_13, window_bounds = array<i64: 1, 4, 32, 512>}, {transform_indices = @transform_14, window_bounds = array<i64: 1, 4, 1, 512>}, {transform_indices = @transform_15, window_bounds = array<i64: 1, 4, 512, 32>}, {transform_indices = @transform_16, window_bounds = array<i64: 1, 1, 32>}, {transform_indices = @transform_17, window_bounds = array<i64: 1, 1, 32>}, {transform_indices = @transform_18, window_bounds = array<i64: 1, 1, 32>}, {transform_indices = @transform_19, window_bounds = array<i64: 1, 16, 32>}]} {
    %c0_i32 = arith.constant 0 : i32
    %0 = arith.cmpi eq, %arg1, %c0_i32 : i32
    %1 = arith.extui %0 : i1 to i32
    %c0_i32_0 = arith.constant 0 : i32
    %2 = arith.cmpi ne, %1, %c0_i32_0 : i32
    scf.if %2 {
      %c0_121 = arith.constant 0 : index
      %c0_122 = arith.constant 0 : index
      %c0_123 = arith.constant 0 : index
      %227 = vector.load %arg2[%c0_121, %c0_122, %c0_123] : memref<1x16x32xf32, #tpu.memory_space<vmem>>, vector<1x16x32xf32>
      %228 = vector.shape_cast %227 : vector<1x16x32xf32> to vector<16x32xf32>
      %229 = arith.truncf %228 : vector<16x32xf32> to vector<16x32xbf16>
      %c0_124 = arith.constant 0 : index
      %c0_125 = arith.constant 0 : index
      %230 = vector.load %arg5[%c0_124, %c0_125] : memref<32x96xbf16, #tpu.memory_space<vmem>>, vector<32x96xbf16>
      %cst_126 = arith.constant dense<0.000000e+00> : vector<16x96xf32>
      %231 = tpu.matmul %229, %230, %cst_126 {dimension_numbers = #tpu.dot_dimension_numbers<[1], [0], [0], [1], [0, 0, 1, 1], [], []>} : vector<16x32xbf16>, vector<32x96xbf16>, vector<16x96xf32> -> vector<16x96xf32>
      %c0_127 = arith.constant 0 : index
      %c0_128 = arith.constant 0 : index
      %232 = vector.load %arg6[%c0_127, %c0_128] : memref<1x96xf32, #tpu.memory_space<vmem>>, vector<1x96xf32>
      %233 = vector.broadcast %232 : vector<1x96xf32> to vector<16x96xf32>
      %234 = arith.addf %231, %233 : vector<16x96xf32>
      %235 = arith.truncf %234 : vector<16x96xf32> to vector<16x96xbf16>
      %236 = vector.extract_strided_slice %235 {offsets = [0, 0], sizes = [16, 32], strides = [1, 1]} : vector<16x96xbf16> to vector<16x32xbf16>
      %237 = vector.shape_cast %236 : vector<16x32xbf16> to vector<1x16x32xbf16>
      %238 = vector.extract_strided_slice %235 {offsets = [0, 32], sizes = [16, 32], strides = [1, 1]} : vector<16x96xbf16> to vector<16x32xbf16>
      %239 = vector.shape_cast %238 : vector<16x32xbf16> to vector<1x16x32xbf16>
      %240 = vector.extract_strided_slice %235 {offsets = [0, 64], sizes = [16, 32], strides = [1, 1]} : vector<16x96xbf16> to vector<16x32xbf16>
      %241 = vector.shape_cast %240 : vector<16x32xbf16> to vector<1x16x32xbf16>
      "tpu.trace_start"() <{level = 10 : i32, message = "bqd,bkd->bqk"}> : () -> ()
      %cst_129 = arith.constant dense<0.000000e+00> : vector<1x16x16xf32>
      %242 = tpu.matmul %237, %239, %cst_129 {dimension_numbers = #tpu.dot_dimension_numbers<[2], [2], [1], [1], [0, 0, 0, 1, 1, 1], [0], [0]>} : vector<1x16x32xbf16>, vector<1x16x32xbf16>, vector<1x16x16xf32> -> vector<1x16x16xf32>
      "tpu.trace_stop"() : () -> ()
      %cst_130 = arith.constant 0.176776692 : f32
      %243 = vector.broadcast %cst_130 : f32 to vector<1x16x16xf32>
      %244 = arith.mulf %242, %243 : vector<1x16x16xf32>
      %c0_131 = arith.constant 0 : index
      %c0_132 = arith.constant 0 : index
      %c0_133 = arith.constant 0 : index
      %245 = vector.load %arg3[%c0_131, %c0_132, %c0_133] : memref<1x16x1xf32, #tpu.memory_space<vmem>>, vector<1x16x1xf32>
      %c0_134 = arith.constant 0 : index
      %c0_135 = arith.constant 0 : index
      %c0_136 = arith.constant 0 : index
      %246 = vector.load %arg4[%c0_134, %c0_135, %c0_136] : memref<1x1x16xf32, #tpu.memory_space<vmem>>, vector<1x1x16xf32>
      %247 = vector.broadcast %245 : vector<1x16x1xf32> to vector<1x16x16xf32>
      %248 = vector.broadcast %246 : vector<1x1x16xf32> to vector<1x16x16xf32>
      %249 = arith.subf %247, %248 : vector<1x16x16xf32>
      %250 = math.absf %249 : vector<1x16x16xf32>
      %251 = arith.addf %244, %250 : vector<1x16x16xf32>
      %cst_137 = arith.constant dense<0xFF800000> : vector<1x16xf32>
      %252 = vector.multi_reduction <maximumf>, %251, %cst_137 [2] : vector<1x16x16xf32> to vector<1x16xf32>
      %253 = vector.shape_cast %252 : vector<1x16xf32> to vector<1x16x1xf32>
      %254 = vector.broadcast %253 : vector<1x16x1xf32> to vector<1x16x16xf32>
      %255 = arith.subf %251, %254 : vector<1x16x16xf32>
      %256 = math.exp %255 : vector<1x16x16xf32>
      %cst_138 = arith.constant dense<0.000000e+00> : vector<1x16xf32>
      %257 = vector.multi_reduction <add>, %256, %cst_138 [2] : vector<1x16x16xf32> to vector<1x16xf32>
      %258 = vector.shape_cast %257 : vector<1x16xf32> to vector<1x16x1xf32>
      %259 = tpu.reciprocal %258 {approx = true} : vector<1x16x1xf32> -> vector<1x16x1xf32>
      %260 = vector.broadcast %259 : vector<1x16x1xf32> to vector<1x16x16xf32>
      %261 = arith.mulf %256, %260 : vector<1x16x16xf32>
      %262 = arith.truncf %261 : vector<1x16x16xf32> to vector<1x16x16xbf16>
      "tpu.trace_start"() <{level = 10 : i32, message = "bqk,bkd->bqd"}> : () -> ()
      %cst_139 = arith.constant dense<0.000000e+00> : vector<1x16x32xf32>
      %263 = tpu.matmul %262, %241, %cst_139 {dimension_numbers = #tpu.dot_dimension_numbers<[2], [1], [1], [2], [0, 0, 0, 1, 1, 2], [0], [0]>} : vector<1x16x16xbf16>, vector<1x16x32xbf16>, vector<1x16x32xf32> -> vector<1x16x32xf32>
      "tpu.trace_stop"() : () -> ()
      %264 = vector.shape_cast %263 : vector<1x16x32xf32> to vector<16x32xf32>
      %265 = arith.addf %228, %264 : vector<16x32xf32>
      %c0_140 = arith.constant 0 : index
      %c0_141 = arith.constant 0 : index
      %266 = vector.load %arg7[%c0_140, %c0_141] : memref<1x32xf32, #tpu.memory_space<vmem>>, vector<1x32xf32>
      %c0_142 = arith.constant 0 : index
      %c0_143 = arith.constant 0 : index
      %267 = vector.load %arg8[%c0_142, %c0_143] : memref<1x32xf32, #tpu.memory_space<vmem>>, vector<1x32xf32>
      %cst_144 = arith.constant dense<0.000000e+00> : vector<16xf32>
      %268 = vector.multi_reduction <add>, %265, %cst_144 [1] : vector<16x32xf32> to vector<16xf32>
      %269 = vector.shape_cast %268 : vector<16xf32> to vector<16x1xf32>
      %cst_145 = arith.constant 3.200000e+01 : f32
      %270 = vector.broadcast %cst_145 : f32 to vector<16x1xf32>
      %271 = arith.divf %269, %270 : vector<16x1xf32>
      %272 = vector.broadcast %271 : vector<16x1xf32> to vector<16x32xf32>
      %273 = arith.subf %265, %272 : vector<16x32xf32>
      %274 = arith.mulf %273, %273 : vector<16x32xf32>
      %cst_146 = arith.constant dense<0.000000e+00> : vector<16xf32>
      %275 = vector.multi_reduction <add>, %274, %cst_146 [1] : vector<16x32xf32> to vector<16xf32>
      %276 = vector.shape_cast %275 : vector<16xf32> to vector<16x1xf32>
      %cst_147 = arith.constant 3.200000e+01 : f32
      %277 = vector.broadcast %cst_147 : f32 to vector<16x1xf32>
      %278 = arith.divf %276, %277 : vector<16x1xf32>
      %279 = vector.broadcast %271 : vector<16x1xf32> to vector<16x32xf32>
      %280 = arith.subf %265, %279 : vector<16x32xf32>
      %cst_148 = arith.constant 9.99999974E-6 : f32
      %281 = vector.broadcast %cst_148 : f32 to vector<16x1xf32>
      %282 = arith.addf %278, %281 : vector<16x1xf32>
      %283 = math.rsqrt %282 : vector<16x1xf32>
      %284 = vector.broadcast %283 : vector<16x1xf32> to vector<16x32xf32>
      %285 = arith.mulf %280, %284 : vector<16x32xf32>
      %286 = vector.broadcast %266 : vector<1x32xf32> to vector<16x32xf32>
      %287 = arith.mulf %285, %286 : vector<16x32xf32>
      %288 = vector.broadcast %267 : vector<1x32xf32> to vector<16x32xf32>
      %289 = arith.addf %287, %288 : vector<16x32xf32>
      %c0_149 = arith.constant 0 : index
      %c0_150 = arith.constant 0 : index
      %290 = vector.load %arg22[%c0_149, %c0_150] : memref<16x32xf32, #tpu.memory_space<vmem>>, vector<16x32xf32>
      tpu.vector_store %arg22[%c0_149, %c0_150], %289 {strides = array<i32>} : memref<16x32xf32, #tpu.memory_space<vmem>>, vector<16x32xf32>,
    } else {
    }
    %c0 = arith.constant 0 : index
    %c0_1 = arith.constant 0 : index
    %3 = vector.load %arg22[%c0, %c0_1] : memref<16x32xf32, #tpu.memory_space<vmem>>, vector<16x32xf32>
    %4 = arith.truncf %3 : vector<16x32xf32> to vector<16x32xbf16>
    %c0_2 = arith.constant 0 : index
    %c0_3 = arith.constant 0 : index
    %c0_4 = arith.constant 0 : index
    %5 = vector.load %arg9[%c0_2, %c0_3, %c0_4] : memref<1x32x96xbf16, #tpu.memory_space<vmem>>, vector<1x32x96xbf16>
    %6 = vector.shape_cast %5 : vector<1x32x96xbf16> to vector<32x96xbf16>
    %cst = arith.constant dense<0.000000e+00> : vector<16x96xf32>
    %7 = tpu.matmul %4, %6, %cst {dimension_numbers = #tpu.dot_dimension_numbers<[1], [0], [0], [1], [0, 0, 1, 1], [], []>} : vector<16x32xbf16>, vector<32x96xbf16>, vector<16x96xf32> -> vector<16x96xf32>
    %c0_5 = arith.constant 0 : index
    %c0_6 = arith.constant 0 : index
    %c0_7 = arith.constant 0 : index
    %8 = vector.load %arg10[%c0_5, %c0_6, %c0_7] : memref<1x1x96xf32, #tpu.memory_space<vmem>>, vector<1x1x96xf32>
    %9 = vector.shape_cast %8 : vector<1x1x96xf32> to vector<1x96xf32>
    %10 = vector.broadcast %9 : vector<1x96xf32> to vector<16x96xf32>
    %11 = arith.addf %7, %10 : vector<16x96xf32>
    %12 = arith.truncf %11 : vector<16x96xf32> to vector<16x96xbf16>
    %13 = vector.extract_strided_slice %12 {offsets = [0, 0], sizes = [16, 8], strides = [1, 1]} : vector<16x96xbf16> to vector<16x8xbf16>
    %14 = vector.shape_cast %13 : vector<16x8xbf16> to vector<1x16x8xbf16>
    %15 = vector.extract_strided_slice %12 {offsets = [0, 32], sizes = [16, 8], strides = [1, 1]} : vector<16x96xbf16> to vector<16x8xbf16>
    %16 = vector.shape_cast %15 : vector<16x8xbf16> to vector<1x16x8xbf16>
    %17 = vector.extract_strided_slice %12 {offsets = [0, 64], sizes = [16, 8], strides = [1, 1]} : vector<16x96xbf16> to vector<16x8xbf16>
    %18 = vector.shape_cast %17 : vector<16x8xbf16> to vector<1x16x8xbf16>
    "tpu.trace_start"() <{level = 10 : i32, message = "bqd,bkd->bqk"}> : () -> ()
    %cst_8 = arith.constant dense<0.000000e+00> : vector<1x16x16xf32>
    %19 = tpu.matmul %14, %16, %cst_8 {dimension_numbers = #tpu.dot_dimension_numbers<[2], [2], [1], [1], [0, 0, 0, 1, 1, 1], [0], [0]>} : vector<1x16x8xbf16>, vector<1x16x8xbf16>, vector<1x16x16xf32> -> vector<1x16x16xf32>
    "tpu.trace_stop"() : () -> ()
    %cst_9 = arith.constant 0.353553385 : f32
    %20 = vector.broadcast %cst_9 : f32 to vector<1x16x16xf32>
    %21 = arith.mulf %19, %20 : vector<1x16x16xf32>
    %cst_10 = arith.constant dense<0xFF800000> : vector<1x16xf32>
    %22 = vector.multi_reduction <maximumf>, %21, %cst_10 [2] : vector<1x16x16xf32> to vector<1x16xf32>
    %23 = vector.shape_cast %22 : vector<1x16xf32> to vector<1x16x1xf32>
    %24 = vector.broadcast %23 : vector<1x16x1xf32> to vector<1x16x16xf32>
    %25 = arith.subf %21, %24 : vector<1x16x16xf32>
    %26 = math.exp %25 : vector<1x16x16xf32>
    %cst_11 = arith.constant dense<0.000000e+00> : vector<1x16xf32>
    %27 = vector.multi_reduction <add>, %26, %cst_11 [2] : vector<1x16x16xf32> to vector<1x16xf32>
    %28 = vector.shape_cast %27 : vector<1x16xf32> to vector<1x16x1xf32>
    %29 = tpu.reciprocal %28 {approx = true} : vector<1x16x1xf32> -> vector<1x16x1xf32>
    %30 = vector.broadcast %29 : vector<1x16x1xf32> to vector<1x16x16xf32>
    %31 = arith.mulf %26, %30 : vector<1x16x16xf32>
    %32 = arith.truncf %31 : vector<1x16x16xf32> to vector<1x16x16xbf16>
    "tpu.trace_start"() <{level = 10 : i32, message = "bqk,bkd->bqd"}> : () -> ()
    %cst_12 = arith.constant dense<0.000000e+00> : vector<1x16x8xf32>
    %33 = tpu.matmul %32, %18, %cst_12 {dimension_numbers = #tpu.dot_dimension_numbers<[2], [1], [1], [2], [0, 0, 0, 1, 1, 2], [0], [0]>} : vector<1x16x16xbf16>, vector<1x16x8xbf16>, vector<1x16x8xf32> -> vector<1x16x8xf32>
    "tpu.trace_stop"() : () -> ()
    %34 = vector.extract_strided_slice %12 {offsets = [0, 8], sizes = [16, 8], strides = [1, 1]} : vector<16x96xbf16> to vector<16x8xbf16>
    %35 = vector.shape_cast %34 : vector<16x8xbf16> to vector<1x16x8xbf16>
    %36 = vector.extract_strided_slice %12 {offsets = [0, 40], sizes = [16, 8], strides = [1, 1]} : vector<16x96xbf16> to vector<16x8xbf16>
    %37 = vector.shape_cast %36 : vector<16x8xbf16> to vector<1x16x8xbf16>
    %38 = vector.extract_strided_slice %12 {offsets = [0, 72], sizes = [16, 8], strides = [1, 1]} : vector<16x96xbf16> to vector<16x8xbf16>
    %39 = vector.shape_cast %38 : vector<16x8xbf16> to vector<1x16x8xbf16>
    "tpu.trace_start"() <{level = 10 : i32, message = "bqd,bkd->bqk"}> : () -> ()
    %cst_13 = arith.constant dense<0.000000e+00> : vector<1x16x16xf32>
    %40 = tpu.matmul %35, %37, %cst_13 {dimension_numbers = #tpu.dot_dimension_numbers<[2], [2], [1], [1], [0, 0, 0, 1, 1, 1], [0], [0]>} : vector<1x16x8xbf16>, vector<1x16x8xbf16>, vector<1x16x16xf32> -> vector<1x16x16xf32>
    "tpu.trace_stop"() : () -> ()
    %cst_14 = arith.constant 0.353553385 : f32
    %41 = vector.broadcast %cst_14 : f32 to vector<1x16x16xf32>
    %42 = arith.mulf %40, %41 : vector<1x16x16xf32>
    %cst_15 = arith.constant dense<0xFF800000> : vector<1x16xf32>
    %43 = vector.multi_reduction <maximumf>, %42, %cst_15 [2] : vector<1x16x16xf32> to vector<1x16xf32>
    %44 = vector.shape_cast %43 : vector<1x16xf32> to vector<1x16x1xf32>
    %45 = vector.broadcast %44 : vector<1x16x1xf32> to vector<1x16x16xf32>
    %46 = arith.subf %42, %45 : vector<1x16x16xf32>
    %47 = math.exp %46 : vector<1x16x16xf32>
    %cst_16 = arith.constant dense<0.000000e+00> : vector<1x16xf32>
    %48 = vector.multi_reduction <add>, %47, %cst_16 [2] : vector<1x16x16xf32> to vector<1x16xf32>
    %49 = vector.shape_cast %48 : vector<1x16xf32> to vector<1x16x1xf32>
    %50 = tpu.reciprocal %49 {approx = true} : vector<1x16x1xf32> -> vector<1x16x1xf32>
    %51 = vector.broadcast %50 : vector<1x16x1xf32> to vector<1x16x16xf32>
    %52 = arith.mulf %47, %51 : vector<1x16x16xf32>
    %53 = arith.truncf %52 : vector<1x16x16xf32> to vector<1x16x16xbf16>
    "tpu.trace_start"() <{level = 10 : i32, message = "bqk,bkd->bqd"}> : () -> ()
    %cst_17 = arith.constant dense<0.000000e+00> : vector<1x16x8xf32>
    %54 = tpu.matmul %53, %39, %cst_17 {dimension_numbers = #tpu.dot_dimension_numbers<[2], [1], [1], [2], [0, 0, 0, 1, 1, 2], [0], [0]>} : vector<1x16x16xbf16>, vector<1x16x8xbf16>, vector<1x16x8xf32> -> vector<1x16x8xf32>
    "tpu.trace_stop"() : () -> ()
    %55 = vector.extract_strided_slice %12 {offsets = [0, 16], sizes = [16, 8], strides = [1, 1]} : vector<16x96xbf16> to vector<16x8xbf16>
    %56 = vector.shape_cast %55 : vector<16x8xbf16> to vector<1x16x8xbf16>
    %57 = vector.extract_strided_slice %12 {offsets = [0, 48], sizes = [16, 8], strides = [1, 1]} : vector<16x96xbf16> to vector<16x8xbf16>
    %58 = vector.shape_cast %57 : vector<16x8xbf16> to vector<1x16x8xbf16>
    %59 = vector.extract_strided_slice %12 {offsets = [0, 80], sizes = [16, 8], strides = [1, 1]} : vector<16x96xbf16> to vector<16x8xbf16>
    %60 = vector.shape_cast %59 : vector<16x8xbf16> to vector<1x16x8xbf16>
    "tpu.trace_start"() <{level = 10 : i32, message = "bqd,bkd->bqk"}> : () -> ()
    %cst_18 = arith.constant dense<0.000000e+00> : vector<1x16x16xf32>
    %61 = tpu.matmul %56, %58, %cst_18 {dimension_numbers = #tpu.dot_dimension_numbers<[2], [2], [1], [1], [0, 0, 0, 1, 1, 1], [0], [0]>} : vector<1x16x8xbf16>, vector<1x16x8xbf16>, vector<1x16x16xf32> -> vector<1x16x16xf32>
    "tpu.trace_stop"() : () -> ()
    %cst_19 = arith.constant 0.353553385 : f32
    %62 = vector.broadcast %cst_19 : f32 to vector<1x16x16xf32>
    %63 = arith.mulf %61, %62 : vector<1x16x16xf32>
    %cst_20 = arith.constant dense<0xFF800000> : vector<1x16xf32>
    %64 = vector.multi_reduction <maximumf>, %63, %cst_20 [2] : vector<1x16x16xf32> to vector<1x16xf32>
    %65 = vector.shape_cast %64 : vector<1x16xf32> to vector<1x16x1xf32>
    %66 = vector.broadcast %65 : vector<1x16x1xf32> to vector<1x16x16xf32>
    %67 = arith.subf %63, %66 : vector<1x16x16xf32>
    %68 = math.exp %67 : vector<1x16x16xf32>
    %cst_21 = arith.constant dense<0.000000e+00> : vector<1x16xf32>
    %69 = vector.multi_reduction <add>, %68, %cst_21 [2] : vector<1x16x16xf32> to vector<1x16xf32>
    %70 = vector.shape_cast %69 : vector<1x16xf32> to vector<1x16x1xf32>
    %71 = tpu.reciprocal %70 {approx = true} : vector<1x16x1xf32> -> vector<1x16x1xf32>
    %72 = vector.broadcast %71 : vector<1x16x1xf32> to vector<1x16x16xf32>
    %73 = arith.mulf %68, %72 : vector<1x16x16xf32>
    %74 = arith.truncf %73 : vector<1x16x16xf32> to vector<1x16x16xbf16>
    "tpu.trace_start"() <{level = 10 : i32, message = "bqk,bkd->bqd"}> : () -> ()
    %cst_22 = arith.constant dense<0.000000e+00> : vector<1x16x8xf32>
    %75 = tpu.matmul %74, %60, %cst_22 {dimension_numbers = #tpu.dot_dimension_numbers<[2], [1], [1], [2], [0, 0, 0, 1, 1, 2], [0], [0]>} : vector<1x16x16xbf16>, vector<1x16x8xbf16>, vector<1x16x8xf32> -> vector<1x16x8xf32>
    "tpu.trace_stop"() : () -> ()
    %76 = vector.extract_strided_slice %12 {offsets = [0, 24], sizes = [16, 8], strides = [1, 1]} : vector<16x96xbf16> to vector<16x8xbf16>
    %77 = vector.shape_cast %76 : vector<16x8xbf16> to vector<1x16x8xbf16>
    %78 = vector.extract_strided_slice %12 {offsets = [0, 56], sizes = [16, 8], strides = [1, 1]} : vector<16x96xbf16> to vector<16x8xbf16>
    %79 = vector.shape_cast %78 : vector<16x8xbf16> to vector<1x16x8xbf16>
    %80 = vector.extract_strided_slice %12 {offsets = [0, 88], sizes = [16, 8], strides = [1, 1]} : vector<16x96xbf16> to vector<16x8xbf16>
    %81 = vector.shape_cast %80 : vector<16x8xbf16> to vector<1x16x8xbf16>
    "tpu.trace_start"() <{level = 10 : i32, message = "bqd,bkd->bqk"}> : () -> ()
    %cst_23 = arith.constant dense<0.000000e+00> : vector<1x16x16xf32>
    %82 = tpu.matmul %77, %79, %cst_23 {dimension_numbers = #tpu.dot_dimension_numbers<[2], [2], [1], [1], [0, 0, 0, 1, 1, 1], [0], [0]>} : vector<1x16x8xbf16>, vector<1x16x8xbf16>, vector<1x16x16xf32> -> vector<1x16x16xf32>
    "tpu.trace_stop"() : () -> ()
    %cst_24 = arith.constant 0.353553385 : f32
    %83 = vector.broadcast %cst_24 : f32 to vector<1x16x16xf32>
    %84 = arith.mulf %82, %83 : vector<1x16x16xf32>
    %cst_25 = arith.constant dense<0xFF800000> : vector<1x16xf32>
    %85 = vector.multi_reduction <maximumf>, %84, %cst_25 [2] : vector<1x16x16xf32> to vector<1x16xf32>
    %86 = vector.shape_cast %85 : vector<1x16xf32> to vector<1x16x1xf32>
    %87 = vector.broadcast %86 : vector<1x16x1xf32> to vector<1x16x16xf32>
    %88 = arith.subf %84, %87 : vector<1x16x16xf32>
    %89 = math.exp %88 : vector<1x16x16xf32>
    %cst_26 = arith.constant dense<0.000000e+00> : vector<1x16xf32>
    %90 = vector.multi_reduction <add>, %89, %cst_26 [2] : vector<1x16x16xf32> to vector<1x16xf32>
    %91 = vector.shape_cast %90 : vector<1x16xf32> to vector<1x16x1xf32>
    %92 = tpu.reciprocal %91 {approx = true} : vector<1x16x1xf32> -> vector<1x16x1xf32>
    %93 = vector.broadcast %92 : vector<1x16x1xf32> to vector<1x16x16xf32>
    %94 = arith.mulf %89, %93 : vector<1x16x16xf32>
    %95 = arith.truncf %94 : vector<1x16x16xf32> to vector<1x16x16xbf16>
    "tpu.trace_start"() <{level = 10 : i32, message = "bqk,bkd->bqd"}> : () -> ()
    %cst_27 = arith.constant dense<0.000000e+00> : vector<1x16x8xf32>
    %96 = tpu.matmul %95, %81, %cst_27 {dimension_numbers = #tpu.dot_dimension_numbers<[2], [1], [1], [2], [0, 0, 0, 1, 1, 2], [0], [0]>} : vector<1x16x16xbf16>, vector<1x16x8xbf16>, vector<1x16x8xf32> -> vector<1x16x8xf32>
    "tpu.trace_stop"() : () -> ()
    %97 = tpu.concatenate %33, %54, %75, %96 in 2 : vector<1x16x8xf32>, vector<1x16x8xf32>, vector<1x16x8xf32>, vector<1x16x8xf32> -> vector<1x16x32xf32>
    %98 = vector.shape_cast %97 : vector<1x16x32xf32> to vector<16x32xf32>
    %99 = arith.truncf %98 : vector<16x32xf32> to vector<16x32xbf16>
    %c0_28 = arith.constant 0 : index
    %c0_29 = arith.constant 0 : index
    %c0_30 = arith.constant 0 : index
    %100 = vector.load %arg11[%c0_28, %c0_29, %c0_30] : memref<1x32x32xbf16, #tpu.memory_space<vmem>>, vector<1x32x32xbf16>
    %101 = vector.shape_cast %100 : vector<1x32x32xbf16> to vector<32x32xbf16>
    %cst_31 = arith.constant dense<0.000000e+00> : vector<16x32xf32>
    %102 = tpu.matmul %99, %101, %cst_31 {dimension_numbers = #tpu.dot_dimension_numbers<[1], [0], [0], [1], [0, 0, 1, 1], [], []>} : vector<16x32xbf16>, vector<32x32xbf16>, vector<16x32xf32> -> vector<16x32xf32>
    %c0_32 = arith.constant 0 : index
    %c0_33 = arith.constant 0 : index
    %c0_34 = arith.constant 0 : index
    %103 = vector.load %arg12[%c0_32, %c0_33, %c0_34] : memref<1x1x32xf32, #tpu.memory_space<vmem>>, vector<1x1x32xf32>
    %104 = vector.shape_cast %103 : vector<1x1x32xf32> to vector<1x32xf32>
    %105 = vector.broadcast %104 : vector<1x32xf32> to vector<16x32xf32>
    %106 = arith.addf %102, %105 : vector<16x32xf32>
    %107 = arith.addf %3, %106 : vector<16x32xf32>
    %c0_35 = arith.constant 0 : index
    %c0_36 = arith.constant 0 : index
    %c0_37 = arith.constant 0 : index
    %108 = vector.load %arg13[%c0_35, %c0_36, %c0_37] : memref<1x1x32xf32, #tpu.memory_space<vmem>>, vector<1x1x32xf32>
    %109 = vector.shape_cast %108 : vector<1x1x32xf32> to vector<1x32xf32>
    %c0_38 = arith.constant 0 : index
    %c0_39 = arith.constant 0 : index
    %c0_40 = arith.constant 0 : index
    %110 = vector.load %arg14[%c0_38, %c0_39, %c0_40] : memref<1x1x32xf32, #tpu.memory_space<vmem>>, vector<1x1x32xf32>
    %111 = vector.shape_cast %110 : vector<1x1x32xf32> to vector<1x32xf32>
    %cst_41 = arith.constant dense<0.000000e+00> : vector<16xf32>
    %112 = vector.multi_reduction <add>, %107, %cst_41 [1] : vector<16x32xf32> to vector<16xf32>
    %113 = vector.shape_cast %112 : vector<16xf32> to vector<16x1xf32>
    %cst_42 = arith.constant 3.200000e+01 : f32
    %114 = vector.broadcast %cst_42 : f32 to vector<16x1xf32>
    %115 = arith.divf %113, %114 : vector<16x1xf32>
    %116 = vector.broadcast %115 : vector<16x1xf32> to vector<16x32xf32>
    %117 = arith.subf %107, %116 : vector<16x32xf32>
    %118 = arith.mulf %117, %117 : vector<16x32xf32>
    %cst_43 = arith.constant dense<0.000000e+00> : vector<16xf32>
    %119 = vector.multi_reduction <add>, %118, %cst_43 [1] : vector<16x32xf32> to vector<16xf32>
    %120 = vector.shape_cast %119 : vector<16xf32> to vector<16x1xf32>
    %cst_44 = arith.constant 3.200000e+01 : f32
    %121 = vector.broadcast %cst_44 : f32 to vector<16x1xf32>
    %122 = arith.divf %120, %121 : vector<16x1xf32>
    %123 = vector.broadcast %115 : vector<16x1xf32> to vector<16x32xf32>
    %124 = arith.subf %107, %123 : vector<16x32xf32>
    %cst_45 = arith.constant 9.99999974E-6 : f32
    %125 = vector.broadcast %cst_45 : f32 to vector<16x1xf32>
    %126 = arith.addf %122, %125 : vector<16x1xf32>
    %127 = math.rsqrt %126 : vector<16x1xf32>
    %128 = vector.broadcast %127 : vector<16x1xf32> to vector<16x32xf32>
    %129 = arith.mulf %124, %128 : vector<16x32xf32>
    %130 = vector.broadcast %109 : vector<1x32xf32> to vector<16x32xf32>
    %131 = arith.mulf %129, %130 : vector<16x32xf32>
    %132 = vector.broadcast %111 : vector<1x32xf32> to vector<16x32xf32>
    %133 = arith.addf %131, %132 : vector<16x32xf32>
    %134 = arith.truncf %133 : vector<16x32xf32> to vector<16x32xbf16>
    %cst_46 = arith.constant 0.000000e+00 : f32
    %135 = vector.broadcast %cst_46 : f32 to vector<16x32xf32>
    %c0_47 = arith.constant 0 : index
    %c0_48 = arith.constant 0 : index
    %c0_49 = arith.constant 0 : index
    %c0_50 = arith.constant 0 : index
    %136 = vector.load %arg15[%c0_47, %c0_48, %c0_49, %c0_50] : memref<1x4x32x512xbf16, #tpu.memory_space<vmem>>, vector<1x1x32x512xbf16>
    %137 = vector.shape_cast %136 : vector<1x1x32x512xbf16> to vector<32x512xbf16>
    %cst_51 = arith.constant dense<0.000000e+00> : vector<16x512xf32>
    %138 = tpu.matmul %134, %137, %cst_51 {dimension_numbers = #tpu.dot_dimension_numbers<[1], [0], [0], [1], [0, 0, 1, 1], [], []>} : vector<16x32xbf16>, vector<32x512xbf16>, vector<16x512xf32> -> vector<16x512xf32>
    %c0_52 = arith.constant 0 : index
    %c0_53 = arith.constant 0 : index
    %c0_54 = arith.constant 0 : index
    %c0_55 = arith.constant 0 : index
    %139 = vector.load %arg16[%c0_52, %c0_53, %c0_54, %c0_55] : memref<1x4x1x512xf32, #tpu.memory_space<vmem>>, vector<1x1x1x512xf32>
    %140 = vector.shape_cast %139 : vector<1x1x1x512xf32> to vector<1x512xf32>
    %141 = vector.broadcast %140 : vector<1x512xf32> to vector<16x512xf32>
    %142 = arith.addf %138, %141 : vector<16x512xf32>
    %cst_56 = arith.constant 0.000000e+00 : f32
    %143 = vector.broadcast %cst_56 : f32 to vector<16x512xf32>
    %144 = arith.maximumf %142, %143 : vector<16x512xf32>
    %145 = arith.truncf %144 : vector<16x512xf32> to vector<16x512xbf16>
    %c0_57 = arith.constant 0 : index
    %c0_58 = arith.constant 0 : index
    %c0_59 = arith.constant 0 : index
    %c0_60 = arith.constant 0 : index
    %146 = vector.load %arg17[%c0_57, %c0_58, %c0_59, %c0_60] : memref<1x4x512x32xbf16, #tpu.memory_space<vmem>>, vector<1x1x512x32xbf16>
    %147 = vector.shape_cast %146 : vector<1x1x512x32xbf16> to vector<512x32xbf16>
    %cst_61 = arith.constant dense<0.000000e+00> : vector<16x32xf32>
    %148 = tpu.matmul %145, %147, %cst_61 {dimension_numbers = #tpu.dot_dimension_numbers<[1], [0], [0], [1], [0, 0, 1, 1], [], []>} : vector<16x512xbf16>, vector<512x32xbf16>, vector<16x32xf32> -> vector<16x32xf32>
    %149 = arith.addf %135, %148 : vector<16x32xf32>
    %c0_62 = arith.constant 0 : index
    %c1 = arith.constant 1 : index
    %c0_63 = arith.constant 0 : index
    %c0_64 = arith.constant 0 : index
    %150 = vector.load %arg15[%c0_62, %c1, %c0_63, %c0_64] : memref<1x4x32x512xbf16, #tpu.memory_space<vmem>>, vector<1x1x32x512xbf16>
    %151 = vector.shape_cast %150 : vector<1x1x32x512xbf16> to vector<32x512xbf16>
    %cst_65 = arith.constant dense<0.000000e+00> : vector<16x512xf32>
    %152 = tpu.matmul %134, %151, %cst_65 {dimension_numbers = #tpu.dot_dimension_numbers<[1], [0], [0], [1], [0, 0, 1, 1], [], []>} : vector<16x32xbf16>, vector<32x512xbf16>, vector<16x512xf32> -> vector<16x512xf32>
    %c0_66 = arith.constant 0 : index
    %c1_67 = arith.constant 1 : index
    %c0_68 = arith.constant 0 : index
    %c0_69 = arith.constant 0 : index
    %153 = vector.load %arg16[%c0_66, %c1_67, %c0_68, %c0_69] : memref<1x4x1x512xf32, #tpu.memory_space<vmem>>, vector<1x1x1x512xf32>
    %154 = vector.shape_cast %153 : vector<1x1x1x512xf32> to vector<1x512xf32>
    %155 = vector.broadcast %154 : vector<1x512xf32> to vector<16x512xf32>
    %156 = arith.addf %152, %155 : vector<16x512xf32>
    %cst_70 = arith.constant 0.000000e+00 : f32
    %157 = vector.broadcast %cst_70 : f32 to vector<16x512xf32>
    %158 = arith.maximumf %156, %157 : vector<16x512xf32>
    %159 = arith.truncf %158 : vector<16x512xf32> to vector<16x512xbf16>
    %c0_71 = arith.constant 0 : index
    %c1_72 = arith.constant 1 : index
    %c0_73 = arith.constant 0 : index
    %c0_74 = arith.constant 0 : index
    %160 = vector.load %arg17[%c0_71, %c1_72, %c0_73, %c0_74] : memref<1x4x512x32xbf16, #tpu.memory_space<vmem>>, vector<1x1x512x32xbf16>
    %161 = vector.shape_cast %160 : vector<1x1x512x32xbf16> to vector<512x32xbf16>
    %cst_75 = arith.constant dense<0.000000e+00> : vector<16x32xf32>
    %162 = tpu.matmul %159, %161, %cst_75 {dimension_numbers = #tpu.dot_dimension_numbers<[1], [0], [0], [1], [0, 0, 1, 1], [], []>} : vector<16x512xbf16>, vector<512x32xbf16>, vector<16x32xf32> -> vector<16x32xf32>
    %163 = arith.addf %149, %162 : vector<16x32xf32>
    %c0_76 = arith.constant 0 : index
    %c2 = arith.constant 2 : index
    %c0_77 = arith.constant 0 : index
    %c0_78 = arith.constant 0 : index
    %164 = vector.load %arg15[%c0_76, %c2, %c0_77, %c0_78] : memref<1x4x32x512xbf16, #tpu.memory_space<vmem>>, vector<1x1x32x512xbf16>
    %165 = vector.shape_cast %164 : vector<1x1x32x512xbf16> to vector<32x512xbf16>
    %cst_79 = arith.constant dense<0.000000e+00> : vector<16x512xf32>
    %166 = tpu.matmul %134, %165, %cst_79 {dimension_numbers = #tpu.dot_dimension_numbers<[1], [0], [0], [1], [0, 0, 1, 1], [], []>} : vector<16x32xbf16>, vector<32x512xbf16>, vector<16x512xf32> -> vector<16x512xf32>
    %c0_80 = arith.constant 0 : index
    %c2_81 = arith.constant 2 : index
    %c0_82 = arith.constant 0 : index
    %c0_83 = arith.constant 0 : index
    %167 = vector.load %arg16[%c0_80, %c2_81, %c0_82, %c0_83] : memref<1x4x1x512xf32, #tpu.memory_space<vmem>>, vector<1x1x1x512xf32>
    %168 = vector.shape_cast %167 : vector<1x1x1x512xf32> to vector<1x512xf32>
    %169 = vector.broadcast %168 : vector<1x512xf32> to vector<16x512xf32>
    %170 = arith.addf %166, %169 : vector<16x512xf32>
    %cst_84 = arith.constant 0.000000e+00 : f32
    %171 = vector.broadcast %cst_84 : f32 to vector<16x512xf32>
    %172 = arith.maximumf %170, %171 : vector<16x512xf32>
    %173 = arith.truncf %172 : vector<16x512xf32> to vector<16x512xbf16>
    %c0_85 = arith.constant 0 : index
    %c2_86 = arith.constant 2 : index
    %c0_87 = arith.constant 0 : index
    %c0_88 = arith.constant 0 : index
    %174 = vector.load %arg17[%c0_85, %c2_86, %c0_87, %c0_88] : memref<1x4x512x32xbf16, #tpu.memory_space<vmem>>, vector<1x1x512x32xbf16>
    %175 = vector.shape_cast %174 : vector<1x1x512x32xbf16> to vector<512x32xbf16>
    %cst_89 = arith.constant dense<0.000000e+00> : vector<16x32xf32>
    %176 = tpu.matmul %173, %175, %cst_89 {dimension_numbers = #tpu.dot_dimension_numbers<[1], [0], [0], [1], [0, 0, 1, 1], [], []>} : vector<16x512xbf16>, vector<512x32xbf16>, vector<16x32xf32> -> vector<16x32xf32>
    %177 = arith.addf %163, %176 : vector<16x32xf32>
    %c0_90 = arith.constant 0 : index
    %c3 = arith.constant 3 : index
    %c0_91 = arith.constant 0 : index
    %c0_92 = arith.constant 0 : index
    %178 = vector.load %arg15[%c0_90, %c3, %c0_91, %c0_92] : memref<1x4x32x512xbf16, #tpu.memory_space<vmem>>, vector<1x1x32x512xbf16>
    %179 = vector.shape_cast %178 : vector<1x1x32x512xbf16> to vector<32x512xbf16>
    %cst_93 = arith.constant dense<0.000000e+00> : vector<16x512xf32>
    %180 = tpu.matmul %134, %179, %cst_93 {dimension_numbers = #tpu.dot_dimension_numbers<[1], [0], [0], [1], [0, 0, 1, 1], [], []>} : vector<16x32xbf16>, vector<32x512xbf16>, vector<16x512xf32> -> vector<16x512xf32>
    %c0_94 = arith.constant 0 : index
    %c3_95 = arith.constant 3 : index
    %c0_96 = arith.constant 0 : index
    %c0_97 = arith.constant 0 : index
    %181 = vector.load %arg16[%c0_94, %c3_95, %c0_96, %c0_97] : memref<1x4x1x512xf32, #tpu.memory_space<vmem>>, vector<1x1x1x512xf32>
    %182 = vector.shape_cast %181 : vector<1x1x1x512xf32> to vector<1x512xf32>
    %183 = vector.broadcast %182 : vector<1x512xf32> to vector<16x512xf32>
    %184 = arith.addf %180, %183 : vector<16x512xf32>
    %cst_98 = arith.constant 0.000000e+00 : f32
    %185 = vector.broadcast %cst_98 : f32 to vector<16x512xf32>
    %186 = arith.maximumf %184, %185 : vector<16x512xf32>
    %187 = arith.truncf %186 : vector<16x512xf32> to vector<16x512xbf16>
    %c0_99 = arith.constant 0 : index
    %c3_100 = arith.constant 3 : index
    %c0_101 = arith.constant 0 : index
    %c0_102 = arith.constant 0 : index
    %188 = vector.load %arg17[%c0_99, %c3_100, %c0_101, %c0_102] : memref<1x4x512x32xbf16, #tpu.memory_space<vmem>>, vector<1x1x512x32xbf16>
    %189 = vector.shape_cast %188 : vector<1x1x512x32xbf16> to vector<512x32xbf16>
    %cst_103 = arith.constant dense<0.000000e+00> : vector<16x32xf32>
    %190 = tpu.matmul %187, %189, %cst_103 {dimension_numbers = #tpu.dot_dimension_numbers<[1], [0], [0], [1], [0, 0, 1, 1], [], []>} : vector<16x512xbf16>, vector<512x32xbf16>, vector<16x32xf32> -> vector<16x32xf32>
    %191 = arith.addf %177, %190 : vector<16x32xf32>
    %192 = arith.addf %133, %191 : vector<16x32xf32>
    %c0_104 = arith.constant 0 : index
    %c0_105 = arith.constant 0 : index
    %c0_106 = arith.constant 0 : index
    %193 = vector.load %arg18[%c0_104, %c0_105, %c0_106] : memref<1x1x32xf32, #tpu.memory_space<vmem>>, vector<1x1x32xf32>
    %194 = vector.shape_cast %193 : vector<1x1x32xf32> to vector<1x32xf32>
    %195 = vector.broadcast %194 : vector<1x32xf32> to vector<16x32xf32>
    %196 = arith.addf %192, %195 : vector<16x32xf32>
    %c0_107 = arith.constant 0 : index
    %c0_108 = arith.constant 0 : index
    %c0_109 = arith.constant 0 : index
    %197 = vector.load %arg19[%c0_107, %c0_108, %c0_109] : memref<1x1x32xf32, #tpu.memory_space<vmem>>, vector<1x1x32xf32>
    %198 = vector.shape_cast %197 : vector<1x1x32xf32> to vector<1x32xf32>
    %c0_110 = arith.constant 0 : index
    %c0_111 = arith.constant 0 : index
    %c0_112 = arith.constant 0 : index
    %199 = vector.load %arg20[%c0_110, %c0_111, %c0_112] : memref<1x1x32xf32, #tpu.memory_space<vmem>>, vector<1x1x32xf32>
    %200 = vector.shape_cast %199 : vector<1x1x32xf32> to vector<1x32xf32>
    %cst_113 = arith.constant dense<0.000000e+00> : vector<16xf32>
    %201 = vector.multi_reduction <add>, %196, %cst_113 [1] : vector<16x32xf32> to vector<16xf32>
    %202 = vector.shape_cast %201 : vector<16xf32> to vector<16x1xf32>
    %cst_114 = arith.constant 3.200000e+01 : f32
    %203 = vector.broadcast %cst_114 : f32 to vector<16x1xf32>
    %204 = arith.divf %202, %203 : vector<16x1xf32>
    %205 = vector.broadcast %204 : vector<16x1xf32> to vector<16x32xf32>
    %206 = arith.subf %196, %205 : vector<16x32xf32>
    %207 = arith.mulf %206, %206 : vector<16x32xf32>
    %cst_115 = arith.constant dense<0.000000e+00> : vector<16xf32>
    %208 = vector.multi_reduction <add>, %207, %cst_115 [1] : vector<16x32xf32> to vector<16xf32>
    %209 = vector.shape_cast %208 : vector<16xf32> to vector<16x1xf32>
    %cst_116 = arith.constant 3.200000e+01 : f32
    %210 = vector.broadcast %cst_116 : f32 to vector<16x1xf32>
    %211 = arith.divf %209, %210 : vector<16x1xf32>
    %212 = vector.broadcast %204 : vector<16x1xf32> to vector<16x32xf32>
    %213 = arith.subf %196, %212 : vector<16x32xf32>
    %cst_117 = arith.constant 9.99999974E-6 : f32
    %214 = vector.broadcast %cst_117 : f32 to vector<16x1xf32>
    %215 = arith.addf %211, %214 : vector<16x1xf32>
    %216 = math.rsqrt %215 : vector<16x1xf32>
    %217 = vector.broadcast %216 : vector<16x1xf32> to vector<16x32xf32>
    %218 = arith.mulf %213, %217 : vector<16x32xf32>
    %219 = vector.broadcast %198 : vector<1x32xf32> to vector<16x32xf32>
    %220 = arith.mulf %218, %219 : vector<16x32xf32>
    %221 = vector.broadcast %200 : vector<1x32xf32> to vector<16x32xf32>
    %222 = arith.addf %220, %221 : vector<16x32xf32>
    %c0_118 = arith.constant 0 : index
    %c0_119 = arith.constant 0 : index
    %223 = vector.load %arg22[%c0_118, %c0_119] : memref<16x32xf32, #tpu.memory_space<vmem>>, vector<16x32xf32>
    tpu.vector_store %arg22[%c0_118, %c0_119], %222 {strides = array<i32>} : memref<16x32xf32, #tpu.memory_space<vmem>>, vector<16x32xf32>,
    %c1_i32 = arith.constant 1 : i32
    %224 = arith.cmpi eq, %arg1, %c1_i32 : i32
    %225 = arith.extui %224 : i1 to i32
    %c0_i32_120 = arith.constant 0 : i32
    %226 = arith.cmpi ne, %225, %c0_i32_120 : i32
    scf.if %226 {
      %227 = vector.shape_cast %222 : vector<16x32xf32> to vector<1x16x32xf32>
      %c0_121 = arith.constant 0 : index
      %c0_122 = arith.constant 0 : index
      %c0_123 = arith.constant 0 : index
      %228 = vector.load %arg21[%c0_121, %c0_122, %c0_123] : memref<1x16x32xf32, #tpu.memory_space<vmem>>, vector<1x16x32xf32>
      tpu.vector_store %arg21[%c0_121, %c0_122, %c0_123], %227 {strides = array<i32>} : memref<1x16x32xf32, #tpu.memory_space<vmem>>, vector<1x16x32xf32>,
    } else {
    }
    return
  }
  func.func @transform_0(%arg0: i32, %arg1: i32) -> (i32, i32, i32) {
    %c0_i32 = arith.constant 0 : i32
    %c0_i32_0 = arith.constant 0 : i32
    %c0_i32_1 = arith.constant 0 : i32
    return %arg0, %c0_i32, %c0_i32_0 : i32, i32, i32
  }
  func.func @transform_1(%arg0: i32, %arg1: i32) -> (i32, i32, i32) {
    %c0_i32 = arith.constant 0 : i32
    %c0_i32_0 = arith.constant 0 : i32
    %c0_i32_1 = arith.constant 0 : i32
    return %arg0, %c0_i32, %c0_i32_0 : i32, i32, i32
  }
  func.func @transform_2(%arg0: i32, %arg1: i32) -> (i32, i32, i32) {
    %c0_i32 = arith.constant 0 : i32
    %c0_i32_0 = arith.constant 0 : i32
    %c0_i32_1 = arith.constant 0 : i32
    return %arg0, %c0_i32, %c0_i32_0 : i32, i32, i32
  }
  func.func @transform_3(%arg0: i32, %arg1: i32) -> (i32, i32) {
    %c0_i32 = arith.constant 0 : i32
    %c0_i32_0 = arith.constant 0 : i32
    %c0_i32_1 = arith.constant 0 : i32
    return %c0_i32, %c0_i32_0 : i32, i32
  }
  func.func @transform_4(%arg0: i32, %arg1: i32) -> (i32, i32) {
    %c0_i32 = arith.constant 0 : i32
    %c0_i32_0 = arith.constant 0 : i32
    %c0_i32_1 = arith.constant 0 : i32
    return %c0_i32, %c0_i32_0 : i32, i32
  }
  func.func @transform_5(%arg0: i32, %arg1: i32) -> (i32, i32) {
    %c0_i32 = arith.constant 0 : i32
    %c0_i32_0 = arith.constant 0 : i32
    %c0_i32_1 = arith.constant 0 : i32
    return %c0_i32, %c0_i32_0 : i32, i32
  }
  func.func @transform_6(%arg0: i32, %arg1: i32) -> (i32, i32) {
    %c0_i32 = arith.constant 0 : i32
    %c0_i32_0 = arith.constant 0 : i32
    %c0_i32_1 = arith.constant 0 : i32
    return %c0_i32, %c0_i32_0 : i32, i32
  }
  func.func @transform_7(%arg0: i32, %arg1: i32) -> (i32, i32, i32) {
    %c0_i32 = arith.constant 0 : i32
    %c0_i32_0 = arith.constant 0 : i32
    %c0_i32_1 = arith.constant 0 : i32
    return %arg1, %c0_i32, %c0_i32_0 : i32, i32, i32
  }
  func.func @transform_8(%arg0: i32, %arg1: i32) -> (i32, i32, i32) {
    %c0_i32 = arith.constant 0 : i32
    %c0_i32_0 = arith.constant 0 : i32
    %c0_i32_1 = arith.constant 0 : i32
    return %arg1, %c0_i32, %c0_i32_0 : i32, i32, i32
  }
  func.func @transform_9(%arg0: i32, %arg1: i32) -> (i32, i32, i32) {
    %c0_i32 = arith.constant 0 : i32
    %c0_i32_0 = arith.constant 0 : i32
    %c0_i32_1 = arith.constant 0 : i32
    return %arg1, %c0_i32, %c0_i32_0 : i32, i32, i32
  }
  func.func @transform_10(%arg0: i32, %arg1: i32) -> (i32, i32, i32) {
    %c0_i32 = arith.constant 0 : i32
    %c0_i32_0 = arith.constant 0 : i32
    %c0_i32_1 = arith.constant 0 : i32
    return %arg1, %c0_i32, %c0_i32_0 : i32, i32, i32
  }
  func.func @transform_11(%arg0: i32, %arg1: i32) -> (i32, i32, i32) {
    %c0_i32 = arith.constant 0 : i32
    %c0_i32_0 = arith.constant 0 : i32
    %c0_i32_1 = arith.constant 0 : i32
    return %arg1, %c0_i32, %c0_i32_0 : i32, i32, i32
  }
  func.func @transform_12(%arg0: i32, %arg1: i32) -> (i32, i32, i32) {
    %c0_i32 = arith.constant 0 : i32
    %c0_i32_0 = arith.constant 0 : i32
    %c0_i32_1 = arith.constant 0 : i32
    return %arg1, %c0_i32, %c0_i32_0 : i32, i32, i32
  }
  func.func @transform_13(%arg0: i32, %arg1: i32) -> (i32, i32, i32, i32) {
    %c0_i32 = arith.constant 0 : i32
    %c0_i32_0 = arith.constant 0 : i32
    %c0_i32_1 = arith.constant 0 : i32
    %c0_i32_2 = arith.constant 0 : i32
    return %arg1, %c0_i32, %c0_i32_0, %c0_i32_1 : i32, i32, i32, i32
  }
  func.func @transform_14(%arg0: i32, %arg1: i32) -> (i32, i32, i32, i32) {
    %c0_i32 = arith.constant 0 : i32
    %c0_i32_0 = arith.constant 0 : i32
    %c0_i32_1 = arith.constant 0 : i32
    %c0_i32_2 = arith.constant 0 : i32
    return %arg1, %c0_i32, %c0_i32_0, %c0_i32_1 : i32, i32, i32, i32
  }
  func.func @transform_15(%arg0: i32, %arg1: i32) -> (i32, i32, i32, i32) {
    %c0_i32 = arith.constant 0 : i32
    %c0_i32_0 = arith.constant 0 : i32
    %c0_i32_1 = arith.constant 0 : i32
    %c0_i32_2 = arith.constant 0 : i32
    return %arg1, %c0_i32, %c0_i32_0, %c0_i32_1 : i32, i32, i32, i32
  }
  func.func @transform_16(%arg0: i32, %arg1: i32) -> (i32, i32, i32) {
    %c0_i32 = arith.constant 0 : i32
    %c0_i32_0 = arith.constant 0 : i32
    %c0_i32_1 = arith.constant 0 : i32
    return %arg1, %c0_i32, %c0_i32_0 : i32, i32, i32
  }
  func.func @transform_17(%arg0: i32, %arg1: i32) -> (i32, i32, i32) {
    %c0_i32 = arith.constant 0 : i32
    %c0_i32_0 = arith.constant 0 : i32
    %c0_i32_1 = arith.constant 0 : i32
    return %arg1, %c0_i32, %c0_i32_0 : i32, i32, i32
  }
  func.func @transform_18(%arg0: i32, %arg1: i32) -> (i32, i32, i32) {
    %c0_i32 = arith.constant 0 : i32
    %c0_i32_0 = arith.constant 0 : i32
    %c0_i32_1 = arith.constant 0 : i32
    return %arg1, %c0_i32, %c0_i32_0 : i32, i32, i32
  }
  func.func @transform_19(%arg0: i32, %arg1: i32) -> (i32, i32, i32) {
    %c0_i32 = arith.constant 0 : i32
    %c0_i32_0 = arith.constant 0 : i32
    %c0_i32_1 = arith.constant 0 : i32
    return %arg0, %c0_i32, %c0_i32_0 : i32, i32, i32
  }
}

</mosaic_0001>

<llo_original>
// kernel: tpu_custom_call.1
$region0: #{tpu_custom_call.1}
  #allocation0 [shape = 'u32[]', space=smem, size = 0x4, offset = 0x4, fixed_abs, tag = 'smem constant byte address 0x4 - core index']
  #allocation1 [shape = 'u32[144,128]{1,0:T(1,128)}', space=vmem, size = 0x12000, scoped, tag = 'internal scratch']
  #allocation2 [shape = 'f32[16,32]{1,0:T(8,128)}', space=vmem, size = 0x2000, scoped, tag = 'scratch operand']
  %s0 = inlined_call_operand.vmem [shape: f32[2,16,32], index: 0, kind: input, shape index: {}]
  %s1 = inlined_call_operand.vmem [shape: f32[2,16,1], index: 1, kind: input, shape index: {}]
  %s2 = inlined_call_operand.vmem [shape: f32[2,1,16], index: 2, kind: input, shape index: {}]
  %s3 = inlined_call_operand.vmem [shape: bf16[32,96], index: 3, kind: input, shape index: {}]
  %s4 = inlined_call_operand.vmem [shape: f32[1,96], index: 4, kind: input, shape index: {}]
  %s5 = inlined_call_operand.vmem [shape: f32[1,32], index: 5, kind: input, shape index: {}]
  %s6 = inlined_call_operand.vmem [shape: f32[1,32], index: 6, kind: input, shape index: {}]
  %s7 = inlined_call_operand.vmem [shape: bf16[2,32,96], index: 7, kind: input, shape index: {}]
  %s8 = inlined_call_operand.vmem [shape: f32[2,1,96], index: 8, kind: input, shape index: {}]
  %s9 = inlined_call_operand.vmem [shape: bf16[2,32,32], index: 9, kind: input, shape index: {}]
  %s10 = inlined_call_operand.vmem [shape: f32[2,1,32], index: 10, kind: input, shape index: {}]
  %s11 = inlined_call_operand.vmem [shape: f32[2,1,32], index: 11, kind: input, shape index: {}]
  %s12 = inlined_call_operand.vmem [shape: f32[2,1,32], index: 12, kind: input, shape index: {}]
  %s13 = inlined_call_operand.vmem [shape: bf16[2,4,32,512], index: 13, kind: input, shape index: {}]
  %s14 = inlined_call_operand.vmem [shape: f32[2,4,1,512], index: 14, kind: input, shape index: {}]
  %s15 = inlined_call_operand.vmem [shape: bf16[2,4,512,32], index: 15, kind: input, shape index: {}]
  %s16 = inlined_call_operand.vmem [shape: f32[2,1,32], index: 16, kind: input, shape index: {}]
  %s17 = inlined_call_operand.vmem [shape: f32[2,1,32], index: 17, kind: input, shape index: {}]
  %s18 = inlined_call_operand.vmem [shape: f32[2,1,32], index: 18, kind: input, shape index: {}]
  %s19 = inlined_call_operand.hbm [shape: f32[2,16,32], index: 19, kind: output, shape index: {}]
  %s20 = sld [smem:[#allocation0]]
  $region117: #{tpu_custom_call.1} parent=0
    _
  %s22 = ssub.s32 1, %s20
  %s23 = scalar_select 0, %s22, %s20
  $region1: #{tpu_custom_call.1} parent=0
    #allocation3 [shape = 'u8[16384]{0}', space=vmem, size = 0x4000, scoped, tag = 'output window, operand 0']
    #allocation4 [shape = 's32[2]{0}', space=sflag, size = 0x8, scoped, tag = 'scoped memory for tpu_custom_call.1']
    %24 = vsyncpa [#allocation4], 0
    %s25 = scalar_lea.sflag [#allocation4], 1
    %26 = vsyncpa %s25, 0
    loop: start=0, step=1, limit=6
    $region2: #{tpu_custom_call.1} parent=1 // loop_pre_header
      _
    $region3: #{tpu_custom_call.1} parent=1 // loop_header
      %s28 = sphi 0, %s32
      %p29 = scmp.ge.s32.totalorder %s28, 6
      %s35 = sphi 0, %s47
      %s36 = sphi 0, %s43
      %s37 = sphi 0, %s35
      %s38 = sphi 0, %s36
      %s39 = sphi 0, %s37
      %s40 = sphi 0, %s38
      %s50 = sphi 0, %s52
      %s53 = sphi 0, %s50
      %s54 = sphi 0, %s53
      %s70 = sphi 0, %s54
      %s76 = sphi 0, %s78
      %s79 = sphi 0, %s76
      %s80 = sphi 0, %s79
      %s96 = sphi 0, %s80
      %s102 = sphi 0, %s104
      %s105 = sphi 0, %s102
      %s106 = sphi 0, %s105
      %s122 = sphi 0, %s106
      %s126 = sphi 0, %s126
      %s128 = sphi 0, %s126
      %s129 = sphi 0, %s128
      %s143 = sphi 0, %s129
      %s147 = sphi 0, %s147
      %s149 = sphi 0, %s147
      %s150 = sphi 0, %s149
      %s164 = sphi 0, %s150
      %s168 = sphi 0, %s168
      %s170 = sphi 0, %s168
      %s171 = sphi 0, %s170
      %s185 = sphi 0, %s171
      %s189 = sphi 0, %s189
      %s191 = sphi 0, %s189
      %s192 = sphi 0, %s191
      %s206 = sphi 0, %s192
      %s212 = sphi 0, %s214
      %s215 = sphi 0, %s212
      %s216 = sphi 0, %s215
      %s232 = sphi 0, %s216
      %s238 = sphi 0, %s240
      %s241 = sphi 0, %s238
      %s242 = sphi 0, %s241
      %s258 = sphi 0, %s242
      %s264 = sphi 0, %s266
      %s267 = sphi 0, %s264
      %s268 = sphi 0, %s267
      %s284 = sphi 0, %s268
      %s290 = sphi 0, %s292
      %s293 = sphi 0, %s290
      %s294 = sphi 0, %s293
      %s310 = sphi 0, %s294
      %s316 = sphi 0, %s318
      %s319 = sphi 0, %s316
      %s320 = sphi 0, %s319
      %s336 = sphi 0, %s320
      %s342 = sphi 0, %s344
      %s345 = sphi 0, %s342
      %s346 = sphi 0, %s345
      %s362 = sphi 0, %s346
      %s368 = sphi 0, %s370
      %s371 = sphi 0, %s368
      %s372 = sphi 0, %s371
      %s388 = sphi 0, %s372
      %s394 = sphi 0, %s396
      %s397 = sphi 0, %s394
      %s398 = sphi 0, %s397
      %s414 = sphi 0, %s398
      %s420 = sphi 0, %s422
      %s423 = sphi 0, %s420
      %s424 = sphi 0, %s423
      %s440 = sphi 0, %s424
      %s446 = sphi 0, %s448
      %s449 = sphi 0, %s446
      %s450 = sphi 0, %s449
      %s466 = sphi 0, %s450
      %s472 = sphi 0, %s474
      %s475 = sphi 0, %s472
      %s476 = sphi 0, %s475
      %s492 = sphi 0, %s476
      %s498 = sphi 0, %s500
      %s501 = sphi 0, %s498
      %s502 = sphi 0, %s501
      %s518 = sphi 0, %s502
      %s524 = sphi 0, %s526
      %s527 = sphi 0, %s524
      %s528 = sphi 0, %s527
      %s544 = sphi 0, %s528
    $region4: #{tpu_custom_call.1} parent=1 // loop_header_branch
      %31 = sbr.rel (%p29) target = $region8
    $region5: #{tpu_custom_call.1} parent=1 // loop_body
      %s33 = ssub.s32 %s28, 1
      %s34 = ssub.s32 %s28, 2
      %s41 = sadd.s32 1, %s36
      %p42 = scmp.ge.s32.totalorder %s41, 2
      %s43 = scalar_select %p42, 0, %s41
      %s44 = sadd.s32 1, %s35
      %s45 = scalar_select %p42, %s44, %s35
      %p46 = scmp.ge.s32.totalorder %s45, 2
      %s47 = scalar_select %p46, 0, %s45
      %s48 = ssub.s32 %s35, %s47
      %p49 = scmp.eq.s32.totalorder %s48, 0
      %s51 = sadd.s32 %s50, 1
      %s52 = scalar_select %p49, %s50, %s51
      %p55 = pneg %p49
      %p56 = scmp.eq.s32.totalorder %s28, 3
      %p57 = por %p55, %p56
      %p58 = scmp.ne.s32.totalorder %s50, %s53
      %p59 = scmp.eq.s32.totalorder %s28, 0
      %p60 = por %p58, %p59
      %p61 = scmp.ne.s32.totalorder %s50, %s53
      %p62 = scmp.eq.s32.totalorder %s33, 3
      %p63 = por %p61, %p62
      %p64 = scmp.ne.s32.totalorder %s53, %s54
      %p65 = scmp.eq.s32.totalorder %s33, 0
      %p66 = por %p64, %p65
      %p67 = scmp.ne.s32.totalorder %s53, %s54
      %p68 = scmp.eq.s32.totalorder %s34, 3
      %p69 = por %p67, %p68
      %p71 = scmp.ne.s32.totalorder %s54, %s70
      %p72 = scmp.eq.s32.totalorder %s34, 0
      %p73 = por %p71, %p72
      %s74 = ssub.s32 %s35, %s47
      %p75 = scmp.eq.s32.totalorder %s74, 0
      %s77 = sadd.s32 %s76, 1
      %s78 = scalar_select %p75, %s76, %s77
      %p81 = pneg %p75
      %p82 = scmp.eq.s32.totalorder %s28, 3
      %p83 = por %p81, %p82
      %p84 = scmp.ne.s32.totalorder %s76, %s79
      %p85 = scmp.eq.s32.totalorder %s28, 0
      %p86 = por %p84, %p85
      %p87 = scmp.ne.s32.totalorder %s76, %s79
      %p88 = scmp.eq.s32.totalorder %s33, 3
      %p89 = por %p87, %p88
      %p90 = scmp.ne.s32.totalorder %s79, %s80
      %p91 = scmp.eq.s32.totalorder %s33, 0
      %p92 = por %p90, %p91
      %p93 = scmp.ne.s32.totalorder %s79, %s80
      %p94 = scmp.eq.s32.totalorder %s34, 3
      %p95 = por %p93, %p94
      %p97 = scmp.ne.s32.totalorder %s80, %s96
      %p98 = scmp.eq.s32.totalorder %s34, 0
      %p99 = por %p97, %p98
      %s100 = ssub.s32 %s35, %s47
      %p101 = scmp.eq.s32.totalorder %s100, 0
      %s103 = sadd.s32 %s102, 1
      %s104 = scalar_select %p101, %s102, %s103
      %p107 = pneg %p101
      %p108 = scmp.eq.s32.totalorder %s28, 3
      %p109 = por %p107, %p108
      %p110 = scmp.ne.s32.totalorder %s102, %s105
      %p111 = scmp.eq.s32.totalorder %s28, 0
      %p112 = por %p110, %p111
      %p113 = scmp.ne.s32.totalorder %s102, %s105
      %p114 = scmp.eq.s32.totalorder %s33, 3
      %p115 = por %p113, %p114
      %p116 = scmp.ne.s32.totalorder %s105, %s106
      %p117 = scmp.eq.s32.totalorder %s33, 0
      %p118 = por %p116, %p117
      %p119 = scmp.ne.s32.totalorder %s105, %s106
      %p120 = scmp.eq.s32.totalorder %s34, 3
      %p121 = por %p119, %p120
      %p123 = scmp.ne.s32.totalorder %s106, %s122
      %p124 = scmp.eq.s32.totalorder %s34, 0
      %p125 = por %p123, %p124
      %s127 = sadd.s32 %s126, 1
      %p130 = scmp.eq.s32.totalorder %s28, 3
      %p131 = scmp.ne.s32.totalorder %s126, %s128
      %p132 = scmp.eq.s32.totalorder %s28, 0
      %p133 = por %p131, %p132
      %p134 = scmp.ne.s32.totalorder %s126, %s128
      %p135 = scmp.eq.s32.totalorder %s33, 3
      %p136 = por %p134, %p135
      %p137 = scmp.ne.s32.totalorder %s128, %s129
      %p138 = scmp.eq.s32.totalorder %s33, 0
      %p139 = por %p137, %p138
      %p140 = scmp.ne.s32.totalorder %s128, %s129
      %p141 = scmp.eq.s32.totalorder %s34, 3
      %p142 = por %p140, %p141
      %p144 = scmp.ne.s32.totalorder %s129, %s143
      %p145 = scmp.eq.s32.totalorder %s34, 0
      %p146 = por %p144, %p145
      %s148 = sadd.s32 %s147, 1
      %p151 = scmp.eq.s32.totalorder %s28, 3
      %p152 = scmp.ne.s32.totalorder %s147, %s149
      %p153 = scmp.eq.s32.totalorder %s28, 0
      %p154 = por %p152, %p153
      %p155 = scmp.ne.s32.totalorder %s147, %s149
      %p156 = scmp.eq.s32.totalorder %s33, 3
      %p157 = por %p155, %p156
      %p158 = scmp.ne.s32.totalorder %s149, %s150
      %p159 = scmp.eq.s32.totalorder %s33, 0
      %p160 = por %p158, %p159
      %p161 = scmp.ne.s32.totalorder %s149, %s150
      %p162 = scmp.eq.s32.totalorder %s34, 3
      %p163 = por %p161, %p162
      %p165 = scmp.ne.s32.totalorder %s150, %s164
      %p166 = scmp.eq.s32.totalorder %s34, 0
      %p167 = por %p165, %p166
      %s169 = sadd.s32 %s168, 1
      %p172 = scmp.eq.s32.totalorder %s28, 3
      %p173 = scmp.ne.s32.totalorder %s168, %s170
      %p174 = scmp.eq.s32.totalorder %s28, 0
      %p175 = por %p173, %p174
      %p176 = scmp.ne.s32.totalorder %s168, %s170
      %p177 = scmp.eq.s32.totalorder %s33, 3
      %p178 = por %p176, %p177
      %p179 = scmp.ne.s32.totalorder %s170, %s171
      %p180 = scmp.eq.s32.totalorder %s33, 0
      %p181 = por %p179, %p180
      %p182 = scmp.ne.s32.totalorder %s170, %s171
      %p183 = scmp.eq.s32.totalorder %s34, 3
      %p184 = por %p182, %p183
      %p186 = scmp.ne.s32.totalorder %s171, %s185
      %p187 = scmp.eq.s32.totalorder %s34, 0
      %p188 = por %p186, %p187
      %s190 = sadd.s32 %s189, 1
      %p193 = scmp.eq.s32.totalorder %s28, 3
      %p194 = scmp.ne.s32.totalorder %s189, %s191
      %p195 = scmp.eq.s32.totalorder %s28, 0
      %p196 = por %p194, %p195
      %p197 = scmp.ne.s32.totalorder %s189, %s191
      %p198 = scmp.eq.s32.totalorder %s33, 3
      %p199 = por %p197, %p198
      %p200 = scmp.ne.s32.totalorder %s191, %s192
      %p201 = scmp.eq.s32.totalorder %s33, 0
      %p202 = por %p200, %p201
      %p203 = scmp.ne.s32.totalorder %s191, %s192
      %p204 = scmp.eq.s32.totalorder %s34, 3
      %p205 = por %p203, %p204
      %p207 = scmp.ne.s32.totalorder %s192, %s206
      %p208 = scmp.eq.s32.totalorder %s34, 0
      %p209 = por %p207, %p208
      %s210 = ssub.s32 %s36, %s43
      %p211 = scmp.eq.s32.totalorder %s210, 0
      %s213 = sadd.s32 %s212, 1
      %s214 = scalar_select %p211, %s212, %s213
      %p217 = pneg %p211
      %p218 = scmp.eq.s32.totalorder %s28, 3
      %p219 = por %p217, %p218
      %p220 = scmp.ne.s32.totalorder %s212, %s215
      %p221 = scmp.eq.s32.totalorder %s28, 0
      %p222 = por %p220, %p221
      %p223 = scmp.ne.s32.totalorder %s212, %s215
      %p224 = scmp.eq.s32.totalorder %s33, 3
      %p225 = por %p223, %p224
      %p226 = scmp.ne.s32.totalorder %s215, %s216
      %p227 = scmp.eq.s32.totalorder %s33, 0
      %p228 = por %p226, %p227
      %p229 = scmp.ne.s32.totalorder %s215, %s216
      %p230 = scmp.eq.s32.totalorder %s34, 3
      %p231 = por %p229, %p230
      %p233 = scmp.ne.s32.totalorder %s216, %s232
      %p234 = scmp.eq.s32.totalorder %s34, 0
      %p235 = por %p233, %p234
      %s236 = ssub.s32 %s36, %s43
      %p237 = scmp.eq.s32.totalorder %s236, 0
      %s239 = sadd.s32 %s238, 1
      %s240 = scalar_select %p237, %s238, %s239
      %p243 = pneg %p237
      %p244 = scmp.eq.s32.totalorder %s28, 3
      %p245 = por %p243, %p244
      %p246 = scmp.ne.s32.totalorder %s238, %s241
      %p247 = scmp.eq.s32.totalorder %s28, 0
      %p248 = por %p246, %p247
      %p249 = scmp.ne.s32.totalorder %s238, %s241
      %p250 = scmp.eq.s32.totalorder %s33, 3
      %p251 = por %p249, %p250
      %p252 = scmp.ne.s32.totalorder %s241, %s242
      %p253 = scmp.eq.s32.totalorder %s33, 0
      %p254 = por %p252, %p253
      %p255 = scmp.ne.s32.totalorder %s241, %s242
      %p256 = scmp.eq.s32.totalorder %s34, 3
      %p257 = por %p255, %p256
      %p259 = scmp.ne.s32.totalorder %s242, %s258
      %p260 = scmp.eq.s32.totalorder %s34, 0
      %p261 = por %p259, %p260
      %s262 = ssub.s32 %s36, %s43
      %p263 = scmp.eq.s32.totalorder %s262, 0
      %s265 = sadd.s32 %s264, 1
      %s266 = scalar_select %p263, %s264, %s265
      %p269 = pneg %p263
      %p270 = scmp.eq.s32.totalorder %s28, 3
      %p271 = por %p269, %p270
      %p272 = scmp.ne.s32.totalorder %s264, %s267
      %p273 = scmp.eq.s32.totalorder %s28, 0
      %p274 = por %p272, %p273
      %p275 = scmp.ne.s32.totalorder %s264, %s267
      %p276 = scmp.eq.s32.totalorder %s33, 3
      %p277 = por %p275, %p276
      %p278 = scmp.ne.s32.totalorder %s267, %s268
      %p279 = scmp.eq.s32.totalorder %s33, 0
      %p280 = por %p278, %p279
      %p281 = scmp.ne.s32.totalorder %s267, %s268
      %p282 = scmp.eq.s32.totalorder %s34, 3
      %p283 = por %p281, %p282
      %p285 = scmp.ne.s32.totalorder %s268, %s284
      %p286 = scmp.eq.s32.totalorder %s34, 0
      %p287 = por %p285, %p286
      %s288 = ssub.s32 %s36, %s43
      %p289 = scmp.eq.s32.totalorder %s288, 0
      %s291 = sadd.s32 %s290, 1
      %s292 = scalar_select %p289, %s290, %s291
      %p295 = pneg %p289
      %p296 = scmp.eq.s32.totalorder %s28, 3
      %p297 = por %p295, %p296
      %p298 = scmp.ne.s32.totalorder %s290, %s293
      %p299 = scmp.eq.s32.totalorder %s28, 0
      %p300 = por %p298, %p299
      %p301 = scmp.ne.s32.totalorder %s290, %s293
      %p302 = scmp.eq.s32.totalorder %s33, 3
      %p303 = por %p301, %p302
      %p304 = scmp.ne.s32.totalorder %s293, %s294
      %p305 = scmp.eq.s32.totalorder %s33, 0
      %p306 = por %p304, %p305
      %p307 = scmp.ne.s32.totalorder %s293, %s294
      %p308 = scmp.eq.s32.totalorder %s34, 3
      %p309 = por %p307, %p308
      %p311 = scmp.ne.s32.totalorder %s294, %s310
      %p312 = scmp.eq.s32.totalorder %s34, 0
      %p313 = por %p311, %p312
      %s314 = ssub.s32 %s36, %s43
      %p315 = scmp.eq.s32.totalorder %s314, 0
      %s317 = sadd.s32 %s316, 1
      %s318 = scalar_select %p315, %s316, %s317
      %p321 = pneg %p315
      %p322 = scmp.eq.s32.totalorder %s28, 3
      %p323 = por %p321, %p322
      %p324 = scmp.ne.s32.totalorder %s316, %s319
      %p325 = scmp.eq.s32.totalorder %s28, 0
      %p326 = por %p324, %p325
      %p327 = scmp.ne.s32.totalorder %s316, %s319
      %p328 = scmp.eq.s32.totalorder %s33, 3
      %p329 = por %p327, %p328
      %p330 = scmp.ne.s32.totalorder %s319, %s320
      %p331 = scmp.eq.s32.totalorder %s33, 0
      %p332 = por %p330, %p331
      %p333 = scmp.ne.s32.totalorder %s319, %s320
      %p334 = scmp.eq.s32.totalorder %s34, 3
      %p335 = por %p333, %p334
      %p337 = scmp.ne.s32.totalorder %s320, %s336
      %p338 = scmp.eq.s32.totalorder %s34, 0
      %p339 = por %p337, %p338
      %s340 = ssub.s32 %s36, %s43
      %p341 = scmp.eq.s32.totalorder %s340, 0
      %s343 = sadd.s32 %s342, 1
      %s344 = scalar_select %p341, %s342, %s343
      %p347 = pneg %p341
      %p348 = scmp.eq.s32.totalorder %s28, 3
      %p349 = por %p347, %p348
      %p350 = scmp.ne.s32.totalorder %s342, %s345
      %p351 = scmp.eq.s32.totalorder %s28, 0
      %p352 = por %p350, %p351
      %p353 = scmp.ne.s32.totalorder %s342, %s345
      %p354 = scmp.eq.s32.totalorder %s33, 3
      %p355 = por %p353, %p354
      %p356 = scmp.ne.s32.totalorder %s345, %s346
      %p357 = scmp.eq.s32.totalorder %s33, 0
      %p358 = por %p356, %p357
      %p359 = scmp.ne.s32.totalorder %s345, %s346
      %p360 = scmp.eq.s32.totalorder %s34, 3
      %p361 = por %p359, %p360
      %p363 = scmp.ne.s32.totalorder %s346, %s362
      %p364 = scmp.eq.s32.totalorder %s34, 0
      %p365 = por %p363, %p364
      %s366 = ssub.s32 %s36, %s43
      %p367 = scmp.eq.s32.totalorder %s366, 0
      %s369 = sadd.s32 %s368, 1
      %s370 = scalar_select %p367, %s368, %s369
      %p373 = pneg %p367
      %p374 = scmp.eq.s32.totalorder %s28, 3
      %p375 = por %p373, %p374
      %p376 = scmp.ne.s32.totalorder %s368, %s371
      %p377 = scmp.eq.s32.totalorder %s28, 0
      %p378 = por %p376, %p377
      %p379 = scmp.ne.s32.totalorder %s368, %s371
      %p380 = scmp.eq.s32.totalorder %s33, 3
      %p381 = por %p379, %p380
      %p382 = scmp.ne.s32.totalorder %s371, %s372
      %p383 = scmp.eq.s32.totalorder %s33, 0
      %p384 = por %p382, %p383
      %p385 = scmp.ne.s32.totalorder %s371, %s372
      %p386 = scmp.eq.s32.totalorder %s34, 3
      %p387 = por %p385, %p386
      %p389 = scmp.ne.s32.totalorder %s372, %s388
      %p390 = scmp.eq.s32.totalorder %s34, 0
      %p391 = por %p389, %p390
      %s392 = ssub.s32 %s36, %s43
      %p393 = scmp.eq.s32.totalorder %s392, 0
      %s395 = sadd.s32 %s394, 1
      %s396 = scalar_select %p393, %s394, %s395
      %p399 = pneg %p393
      %p400 = scmp.eq.s32.totalorder %s28, 3
      %p401 = por %p399, %p400
      %p402 = scmp.ne.s32.totalorder %s394, %s397
      %p403 = scmp.eq.s32.totalorder %s28, 0
      %p404 = por %p402, %p403
      %p405 = scmp.ne.s32.totalorder %s394, %s397
      %p406 = scmp.eq.s32.totalorder %s33, 3
      %p407 = por %p405, %p406
      %p408 = scmp.ne.s32.totalorder %s397, %s398
      %p409 = scmp.eq.s32.totalorder %s33, 0
      %p410 = por %p408, %p409
      %p411 = scmp.ne.s32.totalorder %s397, %s398
      %p412 = scmp.eq.s32.totalorder %s34, 3
      %p413 = por %p411, %p412
      %p415 = scmp.ne.s32.totalorder %s398, %s414
      %p416 = scmp.eq.s32.totalorder %s34, 0
      %p417 = por %p415, %p416
      %s418 = ssub.s32 %s36, %s43
      %p419 = scmp.eq.s32.totalorder %s418, 0
      %s421 = sadd.s32 %s420, 1
      %s422 = scalar_select %p419, %s420, %s421
      %p425 = pneg %p419
      %p426 = scmp.eq.s32.totalorder %s28, 3
      %p427 = por %p425, %p426
      %p428 = scmp.ne.s32.totalorder %s420, %s423
      %p429 = scmp.eq.s32.totalorder %s28, 0
      %p430 = por %p428, %p429
      %p431 = scmp.ne.s32.totalorder %s420, %s423
      %p432 = scmp.eq.s32.totalorder %s33, 3
      %p433 = por %p431, %p432
      %p434 = scmp.ne.s32.totalorder %s423, %s424
      %p435 = scmp.eq.s32.totalorder %s33, 0
      %p436 = por %p434, %p435
      %p437 = scmp.ne.s32.totalorder %s423, %s424
      %p438 = scmp.eq.s32.totalorder %s34, 3
      %p439 = por %p437, %p438
      %p441 = scmp.ne.s32.totalorder %s424, %s440
      %p442 = scmp.eq.s32.totalorder %s34, 0
      %p443 = por %p441, %p442
      %s444 = ssub.s32 %s36, %s43
      %p445 = scmp.eq.s32.totalorder %s444, 0
      %s447 = sadd.s32 %s446, 1
      %s448 = scalar_select %p445, %s446, %s447
      %p451 = pneg %p445
      %p452 = scmp.eq.s32.totalorder %s28, 3
      %p453 = por %p451, %p452
      %p454 = scmp.ne.s32.totalorder %s446, %s449
      %p455 = scmp.eq.s32.totalorder %s28, 0
      %p456 = por %p454, %p455
      %p457 = scmp.ne.s32.totalorder %s446, %s449
      %p458 = scmp.eq.s32.totalorder %s33, 3
      %p459 = por %p457, %p458
      %p460 = scmp.ne.s32.totalorder %s449, %s450
      %p461 = scmp.eq.s32.totalorder %s33, 0
      %p462 = por %p460, %p461
      %p463 = scmp.ne.s32.totalorder %s449, %s450
      %p464 = scmp.eq.s32.totalorder %s34, 3
      %p465 = por %p463, %p464
      %p467 = scmp.ne.s32.totalorder %s450, %s466
      %p468 = scmp.eq.s32.totalorder %s34, 0
      %p469 = por %p467, %p468
      %s470 = ssub.s32 %s36, %s43
      %p471 = scmp.eq.s32.totalorder %s470, 0
      %s473 = sadd.s32 %s472, 1
      %s474 = scalar_select %p471, %s472, %s473
      %p477 = pneg %p471
      %p478 = scmp.eq.s32.totalorder %s28, 3
      %p479 = por %p477, %p478
      %p480 = scmp.ne.s32.totalorder %s472, %s475
      %p481 = scmp.eq.s32.totalorder %s28, 0
      %p482 = por %p480, %p481
      %p483 = scmp.ne.s32.totalorder %s472, %s475
      %p484 = scmp.eq.s32.totalorder %s33, 3
      %p485 = por %p483, %p484
      %p486 = scmp.ne.s32.totalorder %s475, %s476
      %p487 = scmp.eq.s32.totalorder %s33, 0
      %p488 = por %p486, %p487
      %p489 = scmp.ne.s32.totalorder %s475, %s476
      %p490 = scmp.eq.s32.totalorder %s34, 3
      %p491 = por %p489, %p490
      %p493 = scmp.ne.s32.totalorder %s476, %s492
      %p494 = scmp.eq.s32.totalorder %s34, 0
      %p495 = por %p493, %p494
      %s496 = ssub.s32 %s36, %s43
      %p497 = scmp.eq.s32.totalorder %s496, 0
      %s499 = sadd.s32 %s498, 1
      %s500 = scalar_select %p497, %s498, %s499
      %p503 = pneg %p497
      %p504 = scmp.eq.s32.totalorder %s28, 3
      %p505 = por %p503, %p504
      %p506 = scmp.ne.s32.totalorder %s498, %s501
      %p507 = scmp.eq.s32.totalorder %s28, 0
      %p508 = por %p506, %p507
      %p509 = scmp.ne.s32.totalorder %s498, %s501
      %p510 = scmp.eq.s32.totalorder %s33, 3
      %p511 = por %p509, %p510
      %p512 = scmp.ne.s32.totalorder %s501, %s502
      %p513 = scmp.eq.s32.totalorder %s33, 0
      %p514 = por %p512, %p513
      %p515 = scmp.ne.s32.totalorder %s501, %s502
      %p516 = scmp.eq.s32.totalorder %s34, 3
      %p517 = por %p515, %p516
      %p519 = scmp.ne.s32.totalorder %s502, %s518
      %p520 = scmp.eq.s32.totalorder %s34, 0
      %p521 = por %p519, %p520
      %s522 = ssub.s32 %s35, %s47
      %p523 = scmp.eq.s32.totalorder %s522, 0
      %s525 = sadd.s32 %s524, 1
      %s526 = scalar_select %p523, %s524, %s525
      %p529 = pneg %p523
      %p530 = scmp.eq.s32.totalorder %s28, 3
      %p531 = por %p529, %p530
      %p532 = scmp.ne.s32.totalorder %s524, %s527
      %p533 = scmp.eq.s32.totalorder %s28, 0
      %p534 = por %p532, %p533
      %p535 = scmp.ne.s32.totalorder %s524, %s527
      %p536 = scmp.eq.s32.totalorder %s33, 3
      %p537 = por %p535, %p536
      %p538 = scmp.ne.s32.totalorder %s527, %s528
      %p539 = scmp.eq.s32.totalorder %s33, 0
      %p540 = por %p538, %p539
      %p541 = scmp.ne.s32.totalorder %s527, %s528
      %p542 = scmp.eq.s32.totalorder %s34, 3
      %p543 = por %p541, %p542
      %p545 = scmp.ne.s32.totalorder %s528, %s544
      %p546 = scmp.eq.s32.totalorder %s34, 0
      %p547 = por %p545, %p546
      %p548 = scmp.le.s32.totalorder 1, %s28
      %p549 = scmp.lt.s32.totalorder %s28, 5
      %p550 = pnand %p548, %p549
      %p551 = pneg %p550
      // Predicated region
      $region9: #{tpu_custom_call.1} parent=5 // pred_check
        _
      $region10: #{tpu_custom_call.1} parent=5 // pred_check_branch
        %553 = sbr.rel (%p550) target = $region12
      $region11: #{tpu_custom_call.1} parent=5 // pred_region
        %s554 = ssub.s32 %s28, 1
        // Predicated region
        $region13: #{tpu_custom_call.1} parent=11 // pred_check
          %p555 = pneg %p139
        $region14: #{tpu_custom_call.1} parent=11 // pred_check_branch
          %557 = sbr.rel (%p555) target = $region16
        $region15: #{tpu_custom_call.1} parent=11 // pred_region
          _
        $region16: #{tpu_custom_call.1} parent=11 // pred_fallthru
          _
        // Predicated region
        $region17: #{tpu_custom_call.1} parent=11 // pred_check
          %p558 = pneg %p160
        $region18: #{tpu_custom_call.1} parent=11 // pred_check_branch
          %560 = sbr.rel (%p558) target = $region20
        $region19: #{tpu_custom_call.1} parent=11 // pred_region
          _
        $region20: #{tpu_custom_call.1} parent=11 // pred_fallthru
          _
        // Predicated region
        $region21: #{tpu_custom_call.1} parent=11 // pred_check
          %p561 = pneg %p181
        $region22: #{tpu_custom_call.1} parent=11 // pred_check_branch
          %563 = sbr.rel (%p561) target = $region24
        $region23: #{tpu_custom_call.1} parent=11 // pred_region
          _
        $region24: #{tpu_custom_call.1} parent=11 // pred_fallthru
          _
        // Predicated region
        $region25: #{tpu_custom_call.1} parent=11 // pred_check
          %p564 = pneg %p202
        $region26: #{tpu_custom_call.1} parent=11 // pred_check_branch
          %566 = sbr.rel (%p564) target = $region28
        $region27: #{tpu_custom_call.1} parent=11 // pred_region
          _
        $region28: #{tpu_custom_call.1} parent=11 // pred_fallthru
          _
      $region12: #{tpu_custom_call.1} parent=5 // pred_fallthru
        _
      %p567 = scmp.lt.s32.totalorder %s28, 4
      // Predicated region
      $region29: #{tpu_custom_call.1} parent=5 // pred_check
        %p568 = pneg %p567
      $region30: #{tpu_custom_call.1} parent=5 // pred_check_branch
        %570 = sbr.rel (%p568) target = $region32
      $region31: #{tpu_custom_call.1} parent=5 // pred_region
        // Predicated region
        $region33: #{tpu_custom_call.1} parent=31 // pred_check
          %p571 = pneg %p60
        $region34: #{tpu_custom_call.1} parent=31 // pred_check_branch
          %573 = sbr.rel (%p571) target = $region36
        $region35: #{tpu_custom_call.1} parent=31 // pred_region
          %p574 = scmp.lt.s32.totalorder %s35, 1
          %s575 = scalar_select %p574, %s35, 1
          %s576 = smul.addr %s575, 2
          %s577 = smul.addr %s576, 8
          %s578 = scalar_lea.vmem %s0, %s577
        $region36: #{tpu_custom_call.1} parent=31 // pred_fallthru
          _
        // Predicated region
        $region37: #{tpu_custom_call.1} parent=31 // pred_check
          %p579 = pneg %p86
        $region38: #{tpu_custom_call.1} parent=31 // pred_check_branch
          %581 = sbr.rel (%p579) target = $region40
        $region39: #{tpu_custom_call.1} parent=31 // pred_region
          %p582 = scmp.lt.s32.totalorder %s35, 1
          %s583 = scalar_select %p582, %s35, 1
          %s584 = smul.addr %s583, 2
          %s585 = smul.addr %s584, 8
          %s586 = scalar_lea.vmem %s1, %s585
        $region40: #{tpu_custom_call.1} parent=31 // pred_fallthru
          _
        // Predicated region
        $region41: #{tpu_custom_call.1} parent=31 // pred_check
          %p587 = pneg %p112
        $region42: #{tpu_custom_call.1} parent=31 // pred_check_branch
          %589 = sbr.rel (%p587) target = $region44
        $region43: #{tpu_custom_call.1} parent=31 // pred_region
          %p590 = scmp.lt.s32.totalorder %s35, 1
          %s591 = scalar_select %p590, %s35, 1
          %s592 = scalar_lea.vmem %s2, %s591
        $region44: #{tpu_custom_call.1} parent=31 // pred_fallthru
          _
        // Predicated region
        $region45: #{tpu_custom_call.1} parent=31 // pred_check
          %p593 = pneg %p222
        $region46: #{tpu_custom_call.1} parent=31 // pred_check_branch
          %595 = sbr.rel (%p593) target = $region48
        $region47: #{tpu_custom_call.1} parent=31 // pred_region
          %p596 = scmp.lt.s32.totalorder %s36, 1
          %s597 = scalar_select %p596, %s36, 1
          %s598 = smul.addr %s597, 4
          %s599 = smul.addr %s598, 4
          %s600 = scalar_lea.vmem %s7, %s599
        $region48: #{tpu_custom_call.1} parent=31 // pred_fallthru
          _
        // Predicated region
        $region49: #{tpu_custom_call.1} parent=31 // pred_check
          %p601 = pneg %p248
        $region50: #{tpu_custom_call.1} parent=31 // pred_check_branch
          %603 = sbr.rel (%p601) target = $region52
        $region51: #{tpu_custom_call.1} parent=31 // pred_region
          %p604 = scmp.lt.s32.totalorder %s36, 1
          %s605 = scalar_select %p604, %s36, 1
          %s606 = scalar_lea.vmem %s8, %s605
        $region52: #{tpu_custom_call.1} parent=31 // pred_fallthru
          _
        // Predicated region
        $region53: #{tpu_custom_call.1} parent=31 // pred_check
          %p607 = pneg %p274
        $region54: #{tpu_custom_call.1} parent=31 // pred_check_branch
          %609 = sbr.rel (%p607) target = $region56
        $region55: #{tpu_custom_call.1} parent=31 // pred_region
          %p610 = scmp.lt.s32.totalorder %s36, 1
          %s611 = scalar_select %p610, %s36, 1
          %s612 = smul.addr %s611, 4
          %s613 = smul.addr %s612, 4
          %s614 = scalar_lea.vmem %s9, %s613
        $region56: #{tpu_custom_call.1} parent=31 // pred_fallthru
          _
        // Predicated region
        $region57: #{tpu_custom_call.1} parent=31 // pred_check
          %p615 = pneg %p300
        $region58: #{tpu_custom_call.1} parent=31 // pred_check_branch
          %617 = sbr.rel (%p615) target = $region60
        $region59: #{tpu_custom_call.1} parent=31 // pred_region
          %p618 = scmp.lt.s32.totalorder %s36, 1
          %s619 = scalar_select %p618, %s36, 1
          %s620 = scalar_lea.vmem %s10, %s619
        $region60: #{tpu_custom_call.1} parent=31 // pred_fallthru
          _
        // Predicated region
        $region61: #{tpu_custom_call.1} parent=31 // pred_check
          %p621 = pneg %p326
        $region62: #{tpu_custom_call.1} parent=31 // pred_check_branch
          %623 = sbr.rel (%p621) target = $region64
        $region63: #{tpu_custom_call.1} parent=31 // pred_region
          %p624 = scmp.lt.s32.totalorder %s36, 1
          %s625 = scalar_select %p624, %s36, 1
          %s626 = scalar_lea.vmem %s11, %s625
        $region64: #{tpu_custom_call.1} parent=31 // pred_fallthru
          _
        // Predicated region
        $region65: #{tpu_custom_call.1} parent=31 // pred_check
          %p627 = pneg %p352
        $region66: #{tpu_custom_call.1} parent=31 // pred_check_branch
          %629 = sbr.rel (%p627) target = $region68
        $region67: #{tpu_custom_call.1} parent=31 // pred_region
          %p630 = scmp.lt.s32.totalorder %s36, 1
          %s631 = scalar_select %p630, %s36, 1
          %s632 = scalar_lea.vmem %s12, %s631
        $region68: #{tpu_custom_call.1} parent=31 // pred_fallthru
          _
        // Predicated region
        $region69: #{tpu_custom_call.1} parent=31 // pred_check
          %p633 = pneg %p378
        $region70: #{tpu_custom_call.1} parent=31 // pred_check_branch
          %635 = sbr.rel (%p633) target = $region72
        $region71: #{tpu_custom_call.1} parent=31 // pred_region
          %p636 = scmp.lt.s32.totalorder %s36, 1
          %s637 = scalar_select %p636, %s36, 1
          %s638 = smul.addr %s637, 64
          %s639 = smul.addr %s638, 4
          %s640 = scalar_lea.vmem %s13, %s639
        $region72: #{tpu_custom_call.1} parent=31 // pred_fallthru
          _
        // Predicated region
        $region73: #{tpu_custom_call.1} parent=31 // pred_check
          %p641 = pneg %p404
        $region74: #{tpu_custom_call.1} parent=31 // pred_check_branch
          %643 = sbr.rel (%p641) target = $region76
        $region75: #{tpu_custom_call.1} parent=31 // pred_region
          %p644 = scmp.lt.s32.totalorder %s36, 1
          %s645 = scalar_select %p644, %s36, 1
          %s646 = smul.addr %s645, 16
          %s647 = scalar_lea.vmem %s14, %s646
        $region76: #{tpu_custom_call.1} parent=31 // pred_fallthru
          _
        // Predicated region
        $region77: #{tpu_custom_call.1} parent=31 // pred_check
          %p648 = pneg %p430
        $region78: #{tpu_custom_call.1} parent=31 // pred_check_branch
          %650 = sbr.rel (%p648) target = $region80
        $region79: #{tpu_custom_call.1} parent=31 // pred_region
          %p651 = scmp.lt.s32.totalorder %s36, 1
          %s652 = scalar_select %p651, %s36, 1
          %s653 = smul.addr %s652, 256
          %s654 = smul.addr %s653, 4
          %s655 = scalar_lea.vmem %s15, %s654
        $region80: #{tpu_custom_call.1} parent=31 // pred_fallthru
          _
        // Predicated region
        $region81: #{tpu_custom_call.1} parent=31 // pred_check
          %p656 = pneg %p456
        $region82: #{tpu_custom_call.1} parent=31 // pred_check_branch
          %658 = sbr.rel (%p656) target = $region84
        $region83: #{tpu_custom_call.1} parent=31 // pred_region
          %p659 = scmp.lt.s32.totalorder %s36, 1
          %s660 = scalar_select %p659, %s36, 1
          %s661 = scalar_lea.vmem %s16, %s660
        $region84: #{tpu_custom_call.1} parent=31 // pred_fallthru
          _
        // Predicated region
        $region85: #{tpu_custom_call.1} parent=31 // pred_check
          %p662 = pneg %p482
        $region86: #{tpu_custom_call.1} parent=31 // pred_check_branch
          %664 = sbr.rel (%p662) target = $region88
        $region87: #{tpu_custom_call.1} parent=31 // pred_region
          %p665 = scmp.lt.s32.totalorder %s36, 1
          %s666 = scalar_select %p665, %s36, 1
          %s667 = scalar_lea.vmem %s17, %s666
        $region88: #{tpu_custom_call.1} parent=31 // pred_fallthru
          _
        // Predicated region
        $region89: #{tpu_custom_call.1} parent=31 // pred_check
          %p668 = pneg %p508
        $region90: #{tpu_custom_call.1} parent=31 // pred_check_branch
          %670 = sbr.rel (%p668) target = $region92
        $region91: #{tpu_custom_call.1} parent=31 // pred_region
          %p671 = scmp.lt.s32.totalorder %s36, 1
          %s672 = scalar_select %p671, %s36, 1
          %s673 = scalar_lea.vmem %s18, %s672
        $region92: #{tpu_custom_call.1} parent=31 // pred_fallthru
          _
      $region32: #{tpu_custom_call.1} parent=5 // pred_fallthru
        _
      %p674 = scmp.le.s32.totalorder 1, %s28
      %p675 = scmp.lt.s32.totalorder %s28, 5
      %p676 = pnand %p674, %p675
      %p677 = pneg %p676
      // Predicated region
      $region93: #{tpu_custom_call.1} parent=5 // pred_check
        _
      $region94: #{tpu_custom_call.1} parent=5 // pred_check_branch
        %679 = sbr.rel (%p676) target = $region96
      $region95: #{tpu_custom_call.1} parent=5 // pred_region
        %s680 = ssub.s32 %s28, 1
        %p681 = scmp.lt.s32.totalorder %s37, 1
        %s682 = scalar_select %p681, %s37, 1
        %s683 = smul.addr %s682, 2
        %s684 = smul.addr %s683, 8
        %s685 = scalar_lea.vmem %s0, %s684
        %p686 = pneg %p66
        %p687 = pneg %p63
        %p688 = scmp.lt.s32.totalorder %s37, 1
        %s689 = scalar_select %p688, %s37, 1
        %s690 = smul.addr %s689, 2
        %s691 = smul.addr %s690, 8
        %s692 = scalar_lea.vmem %s1, %s691
        %p693 = pneg %p92
        %p694 = pneg %p89
        %p695 = scmp.lt.s32.totalorder %s37, 1
        %s696 = scalar_select %p695, %s37, 1
        %s697 = scalar_lea.vmem %s2, %s696
        %p698 = pneg %p118
        %p699 = pneg %p115
        %p700 = pneg %p139
        %p701 = pneg %p136
        %p702 = pneg %p160
        %p703 = pneg %p157
        %p704 = pneg %p181
        %p705 = pneg %p178
        %p706 = pneg %p202
        %p707 = pneg %p199
        %p708 = scmp.lt.s32.totalorder %s38, 1
        %s709 = scalar_select %p708, %s38, 1
        %s710 = smul.addr %s709, 4
        %s711 = smul.addr %s710, 4
        %s712 = scalar_lea.vmem %s7, %s711
        %p713 = pneg %p228
        %p714 = pneg %p225
        %p715 = scmp.lt.s32.totalorder %s38, 1
        %s716 = scalar_select %p715, %s38, 1
        %s717 = scalar_lea.vmem %s8, %s716
        %p718 = pneg %p254
        %p719 = pneg %p251
        %p720 = scmp.lt.s32.totalorder %s38, 1
        %s721 = scalar_select %p720, %s38, 1
        %s722 = smul.addr %s721, 4
        %s723 = smul.addr %s722, 4
        %s724 = scalar_lea.vmem %s9, %s723
        %p725 = pneg %p280
        %p726 = pneg %p277
        %p727 = scmp.lt.s32.totalorder %s38, 1
        %s728 = scalar_select %p727, %s38, 1
        %s729 = scalar_lea.vmem %s10, %s728
        %p730 = pneg %p306
        %p731 = pneg %p303
        %p732 = scmp.lt.s32.totalorder %s38, 1
        %s733 = scalar_select %p732, %s38, 1
        %s734 = scalar_lea.vmem %s11, %s733
        %p735 = pneg %p332
        %p736 = pneg %p329
        %p737 = scmp.lt.s32.totalorder %s38, 1
        %s738 = scalar_select %p737, %s38, 1
        %s739 = scalar_lea.vmem %s12, %s738
        %p740 = pneg %p358
        %p741 = pneg %p355
        %p742 = scmp.lt.s32.totalorder %s38, 1
        %s743 = scalar_select %p742, %s38, 1
        %s744 = smul.addr %s743, 64
        %s745 = smul.addr %s744, 4
        %s746 = scalar_lea.vmem %s13, %s745
        %p747 = pneg %p384
        %p748 = pneg %p381
        %p749 = scmp.lt.s32.totalorder %s38, 1
        %s750 = scalar_select %p749, %s38, 1
        %s751 = smul.addr %s750, 16
        %s752 = scalar_lea.vmem %s14, %s751
        %p753 = pneg %p410
        %p754 = pneg %p407
        %p755 = scmp.lt.s32.totalorder %s38, 1
        %s756 = scalar_select %p755, %s38, 1
        %s757 = smul.addr %s756, 256
        %s758 = smul.addr %s757, 4
        %s759 = scalar_lea.vmem %s15, %s758
        %p760 = pneg %p436
        %p761 = pneg %p433
        %p762 = scmp.lt.s32.totalorder %s38, 1
        %s763 = scalar_select %p762, %s38, 1
        %s764 = scalar_lea.vmem %s16, %s763
        %p765 = pneg %p462
        %p766 = pneg %p459
        %p767 = scmp.lt.s32.totalorder %s38, 1
        %s768 = scalar_select %p767, %s38, 1
        %s769 = scalar_lea.vmem %s17, %s768
        %p770 = pneg %p488
        %p771 = pneg %p485
        %p772 = scmp.lt.s32.totalorder %s38, 1
        %s773 = scalar_select %p772, %s38, 1
        %s774 = scalar_lea.vmem %s18, %s773
        %p775 = pneg %p514
        %p776 = pneg %p511
        %p777 = pneg %p540
        %p778 = pneg %p537
        %s779 = sand.u32 %s527, 1
        %s780 = scalar_lea.sflag [#allocation4], %s779
        %s781 = sand.u32 %s527, 1
        %s782 = smul.addr %s781, 16
        %s783 = scalar_lea.vmem [#allocation3], %s782
        %p784 = scmp.lt.s32.totalorder %s37, 1
        %s785 = scalar_select %p784, %s37, 1
        %s786 = smul.addr %s785, 2
        %s787 = smul.addr %s786, 8
        %s788 = scalar_lea.vmem %s0, %s787
        %p789 = scmp.lt.s32.totalorder %s37, 1
        %s790 = scalar_select %p789, %s37, 1
        %s791 = smul.addr %s790, 2
        %s792 = smul.addr %s791, 8
        %s793 = scalar_lea.vmem %s1, %s792
        %p794 = scmp.lt.s32.totalorder %s37, 1
        %s795 = scalar_select %p794, %s37, 1
        %s796 = scalar_lea.vmem %s2, %s795
        %p797 = scmp.lt.s32.totalorder %s38, 1
        %s798 = scalar_select %p797, %s38, 1
        %s799 = smul.addr %s798, 4
        %s800 = smul.addr %s799, 4
        %s801 = scalar_lea.vmem %s7, %s800
        %p802 = scmp.lt.s32.totalorder %s38, 1
        %s803 = scalar_select %p802, %s38, 1
        %s804 = scalar_lea.vmem %s8, %s803
        %p805 = scmp.lt.s32.totalorder %s38, 1
        %s806 = scalar_select %p805, %s38, 1
        %s807 = smul.addr %s806, 4
        %s808 = smul.addr %s807, 4
        %s809 = scalar_lea.vmem %s9, %s808
        %p810 = scmp.lt.s32.totalorder %s38, 1
        %s811 = scalar_select %p810, %s38, 1
        %s812 = scalar_lea.vmem %s10, %s811
        %p813 = scmp.lt.s32.totalorder %s38, 1
        %s814 = scalar_select %p813, %s38, 1
        %s815 = scalar_lea.vmem %s11, %s814
        %p816 = scmp.lt.s32.totalorder %s38, 1
        %s817 = scalar_select %p816, %s38, 1
        %s818 = scalar_lea.vmem %s12, %s817
        %p819 = scmp.lt.s32.totalorder %s38, 1
        %s820 = scalar_select %p819, %s38, 1
        %s821 = smul.addr %s820, 64
        %s822 = smul.addr %s821, 4
        %s823 = scalar_lea.vmem %s13, %s822
        %p824 = scmp.lt.s32.totalorder %s38, 1
        %s825 = scalar_select %p824, %s38, 1
        %s826 = smul.addr %s825, 16
        %s827 = scalar_lea.vmem %s14, %s826
        %p828 = scmp.lt.s32.totalorder %s38, 1
        %s829 = scalar_select %p828, %s38, 1
        %s830 = smul.addr %s829, 256
        %s831 = smul.addr %s830, 4
        %s832 = scalar_lea.vmem %s15, %s831
        %p833 = scmp.lt.s32.totalorder %s38, 1
        %s834 = scalar_select %p833, %s38, 1
        %s835 = scalar_lea.vmem %s16, %s834
        %p836 = scmp.lt.s32.totalorder %s38, 1
        %s837 = scalar_select %p836, %s38, 1
        %s838 = scalar_lea.vmem %s17, %s837
        %p839 = scmp.lt.s32.totalorder %s38, 1
        %s840 = scalar_select %p839, %s38, 1
        %s841 = scalar_lea.vmem %s18, %s840
        %p843 = scmp.eq.s32.totalorder %s38, 0
        // Predicated region
        $region97: #{tpu_custom_call.1} parent=95 // pred_check
          %p844 = pneg %p843
        $region98: #{tpu_custom_call.1} parent=95 // pred_check_branch
          %846 = sbr.rel (%p844) target = $region100
        $region99: #{tpu_custom_call.1} parent=95 // pred_region
          %v847 = vld [vmem:[%s788] sm:$0xff]
          %v848 = vld [vmem:[%s788 + $0x8] sm:$0xff]
          %v849 = vpack.c.bf16 %v848, %v847
          %v850 = vld [vmem:[%s3] sm:$0xf]
          %v851 = vld [vmem:[%s3 + $0x4] sm:$0xf]
          %v852 = vld [vmem:[%s3 + $0x8] sm:$0xf]
          %v853 = vld [vmem:[%s3 + $0xc] sm:$0xf]
          %v854 = vld [vmem:[%s4] sm:$0x1]
          %v856 = vlaneseq
          %v857 = vshrl.u32 %v856, 7
          %v858 = vsub.s32 0, %v857
          %v859 = vrot.slane %v854, %v858
          %v865 = vunpack.c.l.b16 %v850
          %v866 = vunpack.c.l.b16 %v851
          %v867 = vunpack.c.l.b16 %v852
          %v868 = vunpack.c.l.b16 %v853
          %v869 = vpack.c.b16 %v866, %v865
          %v870 = vpack.c.b16 %v868, %v867
          %vm873 = vcmask 261120
          %v875 = vsel %vm873, %v849, 0
          %877 = vmatprep.subr.bf16.mxu0 0
          %878 = vmatpush1.bf16.msra.mxu0 %v869
          %879 = vmatprep.subr.bf16.mxu0 0
          %880 = vmatpush1.bf16.msra.mxu0 %v870
          %881 = vmatprep.subr.bf16.mxu0 0
          %882 = vmatpush1.bf16.msra.mxu0 0
          %883 = vmatprep.subr.bf16.mxu0 0
          %884 = vmatpush1.bf16.msra.mxu0 0
          %885 = vmatprep.subr.bf16.mxu0 0
          %886 = vmatpush1.bf16.msra.mxu0 0
          %887 = vmatprep.subr.bf16.mxu0 0
          %888 = vmatpush1.bf16.msra.mxu0 0
          %889 = vmatprep.subr.bf16.mxu0 0
          %890 = vmatpush1.bf16.msra.mxu0 0
          %891 = vmatprep.subr.bf16.mxu0 0
          %892 = vmatpush1.bf16.msra.mxu0 0
          %893 = vmatprep.subr.bf16.mxu0 0
          %894 = vmatpush1.bf16.msra.mxu0 0
          %895 = vmatprep.subr.bf16.mxu0 0
          %896 = vmatpush1.bf16.msra.mxu0 0
          %897 = vmatprep.subr.bf16.mxu0 0
          %898 = vmatpush1.bf16.msra.mxu0 0
          %899 = vmatprep.subr.bf16.mxu0 0
          %900 = vmatpush1.bf16.msra.mxu0 0
          %901 = vmatprep.subr.bf16.mxu0 0
          %902 = vmatpush1.bf16.msra.mxu0 0
          %903 = vmatprep.subr.bf16.mxu0 0
          %904 = vmatpush1.bf16.msra.mxu0 0
          %905 = vmatprep.subr.bf16.mxu0 0
          %906 = vmatpush1.bf16.msra.mxu0 0
          %907 = vmatprep.subr.bf16.mxu0 0
          %908 = vmatpush1.bf16.msra.mxu0 0
          %909 = vmatprep.mubr.bf16.mxu0 0
          %910 = vmatmul.mubr.bf16.gmra.mrb[0].mxu0 %v875
          %v911 = vpop.f32.mrb[0].mxu0
          %v912 = vadd.f32 %v859, %v911
          %v913 = vpop.f32.mrb[0].mxu0
          %v914 = vpop.f32.mrb[0].mxu0
          %v915 = vadd.f32 %v859, %v914
          %v916 = vpop.f32.mrb[0].mxu0
          %917 = vdwg.mxu0
          %v918 = vpack.c.bf16 %v915, %v912
          %920 = vrot.lane.b32.xlu0 %v918, 96
          %v921 = vpop.permute.xlu0 %920
          %v923 = vsel %vm873, %v918, 0
          %v926 = vsel %vm873, %v921, 0
          %928 = vmatprep.subr.bf16.mxu0 0
          %929 = vmatpush1.bf16.xpose.msra.mxu0 %v926
          %930 = vmatprep.subr.bf16.mxu0 0
          %931 = vmatpush1.bf16.xpose.msra.mxu0 0
          %932 = vmatprep.subr.bf16.mxu0 0
          %933 = vmatpush1.bf16.xpose.msra.mxu0 0
          %934 = vmatprep.subr.bf16.mxu0 0
          %935 = vmatpush1.bf16.xpose.msra.mxu0 0
          %936 = vmatprep.subr.bf16.mxu0 0
          %937 = vmatpush1.bf16.xpose.msra.mxu0 0
          %938 = vmatprep.subr.bf16.mxu0 0
          %939 = vmatpush1.bf16.xpose.msra.mxu0 0
          %940 = vmatprep.subr.bf16.mxu0 0
          %941 = vmatpush1.bf16.xpose.msra.mxu0 0
          %942 = vmatprep.subr.bf16.mxu0 0
          %943 = vmatpush1.bf16.xpose.msra.mxu0 0
          %944 = vmatprep.subr.bf16.mxu0 0
          %945 = vmatpush1.bf16.xpose.msra.mxu0 0
          %946 = vmatprep.subr.bf16.mxu0 0
          %947 = vmatpush1.bf16.xpose.msra.mxu0 0
          %948 = vmatprep.subr.bf16.mxu0 0
          %949 = vmatpush1.bf16.xpose.msra.mxu0 0
          %950 = vmatprep.subr.bf16.mxu0 0
          %951 = vmatpush1.bf16.xpose.msra.mxu0 0
          %952 = vmatprep.subr.bf16.mxu0 0
          %953 = vmatpush1.bf16.xpose.msra.mxu0 0
          %954 = vmatprep.subr.bf16.mxu0 0
          %955 = vmatpush1.bf16.xpose.msra.mxu0 0
          %956 = vmatprep.subr.bf16.mxu0 0
          %957 = vmatpush1.bf16.xpose.msra.mxu0 0
          %958 = vmatprep.subr.bf16.mxu0 0
          %959 = vmatpush1.bf16.xpose.msra.mxu0 0
          %960 = vmatprep.mubr.bf16.mxu0 0
          %961 = vmatmul.mubr.bf16.gmra.mrb[0].mxu0 %v923
          %v962 = vpop.f32.mrb[0].mxu0
          %v963 = vadd.f32 0.0, %v962
          %v964 = vpop.f32.mrb[0].mxu0
          %v965 = vpop.f32.mrb[0].mxu0
          %v966 = vadd.f32 0.0, %v965
          %v967 = vpop.f32.mrb[0].mxu0
          %968 = vdwg.mxu0
          %v969 = vmul.f32 %v963, 0.17677669
          %v970 = vmul.f32 %v966, 0.17677669
          %v971 = vld [vmem:[%s793] sm:$0xff]
          %v972 = vld [vmem:[%s793 + $0x8] sm:$0xff]
          %v973 = vld [vmem:[%s796] sm:$0x1]
          %975 = vset.pattern.permute.xlu0 0
          %976 = vperm.xlu0 %975, %v971
          %v977 = vpop.permute.xlu0 %976
          %980 = vset.pattern.permute.xlu0 0
          %981 = vperm.xlu0 %980, %v972
          %v982 = vpop.permute.xlu0 %981
          %v985 = vlaneseq
          %v986 = vshrl.u32 %v985, 7
          %v987 = vsub.s32 0, %v986
          %v988 = vrot.slane %v973, %v987
          %v990 = vsub.f32 %v977, %v988
          %v991 = vsub.f32 %v982, %v988
          %v992 = vand.u32 2147483647, %v990
          %v993 = vand.u32 2147483647, %v991
          %v994 = vadd.f32 %v969, %v992
          %v995 = vadd.f32 %v970, %v993
          %vm996 = vcmask 130048
          %v997 = vsel %vm996, %v994, -inf
          %998 = vmax.xlane.f32.xlu0 %v997
          %v999 = vpop.xlane.xlu0 %998
          %v1000 = vsel %vm996, %v995, -inf
          %1001 = vmax.xlane.f32.xlu0 %v1000
          %v1002 = vpop.xlane.xlu0 %1001
          %v1003 = vsub.f32 %v994, %v999
          %v1004 = vsub.f32 %v995, %v1002
          %v1005 = vmul.f32 %v1003, 1.442695
          %v1006 = vpow.pop %v1005
          %v1007 = vmul.f32 %v1004, 1.442695
          %v1008 = vpow.pop %v1007
          %v1009 = vsel %vm996, %v1006, 0.0
          %1010 = vadd.xlane.f32.xlu0 %v1009
          %v1011 = vpop.xlane.xlu0 %1010
          %v1012 = vsel %vm996, %v1008, 0.0
          %1013 = vadd.xlane.f32.xlu0 %v1012
          %v1014 = vpop.xlane.xlu0 %1013
          %v1015 = vrcp.pop %v1011
          %v1016 = vrcp.pop %v1014
          %v1017 = vmul.f32 %v1006, %v1015
          %v1018 = vmul.f32 %v1008, %v1016
          %v1019 = vpack.c.bf16 %v1018, %v1017
          %1020 = vrot.lane.b32.xlu0 %v918, 64
          %v1021 = vpop.permute.xlu0 %1020
          %v1024 = vsel %vm996, %v1019, 0
          %1026 = vmatprep.subr.bf16.mxu0 0
          %1027 = vmatpush1.bf16.msra.mxu0 %v1021
          %1028 = vmatprep.subr.bf16.mxu0 0
          %1029 = vmatpush1.bf16.msra.mxu0 0
          %1030 = vmatprep.subr.bf16.mxu0 0
          %1031 = vmatpush1.bf16.msra.mxu0 0
          %1032 = vmatprep.subr.bf16.mxu0 0
          %1033 = vmatpush1.bf16.msra.mxu0 0
          %1034 = vmatprep.subr.bf16.mxu0 0
          %1035 = vmatpush1.bf16.msra.mxu0 0
          %1036 = vmatprep.subr.bf16.mxu0 0
          %1037 = vmatpush1.bf16.msra.mxu0 0
          %1038 = vmatprep.subr.bf16.mxu0 0
          %1039 = vmatpush1.bf16.msra.mxu0 0
          %1040 = vmatprep.subr.bf16.mxu0 0
          %1041 = vmatpush1.bf16.msra.mxu0 0
          %1042 = vmatprep.subr.bf16.mxu0 0
          %1043 = vmatpush1.bf16.msra.mxu0 0
          %1044 = vmatprep.subr.bf16.mxu0 0
          %1045 = vmatpush1.bf16.msra.mxu0 0
          %1046 = vmatprep.subr.bf16.mxu0 0
          %1047 = vmatpush1.bf16.msra.mxu0 0
          %1048 = vmatprep.subr.bf16.mxu0 0
          %1049 = vmatpush1.bf16.msra.mxu0 0
          %1050 = vmatprep.subr.bf16.mxu0 0
          %1051 = vmatpush1.bf16.msra.mxu0 0
          %1052 = vmatprep.subr.bf16.mxu0 0
          %1053 = vmatpush1.bf16.msra.mxu0 0
          %1054 = vmatprep.subr.bf16.mxu0 0
          %1055 = vmatpush1.bf16.msra.mxu0 0
          %1056 = vmatprep.subr.bf16.mxu0 0
          %1057 = vmatpush1.bf16.msra.mxu0 0
          %1058 = vmatprep.mubr.bf16.mxu0 0
          %1059 = vmatmul.mubr.bf16.gmra.mrb[0].mxu0 %v1024
          %v1060 = vpop.f32.mrb[0].mxu0
          %v1061 = vadd.f32 0.0, %v1060
          %v1062 = vpop.f32.mrb[0].mxu0
          %v1063 = vpop.f32.mrb[0].mxu0
          %v1064 = vadd.f32 0.0, %v1063
          %v1065 = vpop.f32.mrb[0].mxu0
          %1066 = vdwg.mxu0
          %v1067 = vadd.f32 %v847, %v1061
          %v1068 = vadd.f32 %v848, %v1064
          %v1069 = vld [vmem:[%s5] sm:$0x1]
          %v1070 = vld [vmem:[%s6] sm:$0x1]
          %v1071 = vsel %vm873, %v1067, 0.0
          %1072 = vadd.xlane.f32.xlu0 %v1071
          %v1073 = vpop.xlane.xlu0 %1072
          %v1074 = vsel %vm873, %v1068, 0.0
          %1075 = vadd.xlane.f32.xlu0 %v1074
          %v1076 = vpop.xlane.xlu0 %1075
          %v1077 = vrcp.pop 32.0
          %v1078 = vmul.f32 %v1073, %v1077
          %v1079 = vmul.f32 %v1076, %v1077
          %v1080 = vsub.f32 %v1067, %v1078
          %v1081 = vsub.f32 %v1068, %v1079
          %v1082 = vmul.f32 %v1080, %v1080
          %v1083 = vmul.f32 %v1081, %v1081
          %v1084 = vsel %vm873, %v1082, 0.0
          %1085 = vadd.xlane.f32.xlu0 %v1084
          %v1086 = vpop.xlane.xlu0 %1085
          %v1087 = vsel %vm873, %v1083, 0.0
          %1088 = vadd.xlane.f32.xlu0 %v1087
          %v1089 = vpop.xlane.xlu0 %1088
          %v1090 = vmul.f32 %v1086, %v1077
          %v1091 = vmul.f32 %v1089, %v1077
          %v1092 = vadd.f32 %v1090, 1e-05
          %v1093 = vadd.f32 %v1091, 1e-05
          %v1094 = vrsqrt.pop %v1092
          %v1095 = vrsqrt.pop %v1093
          %v1096 = vmul.f32 %v1080, %v1094
          %v1097 = vmul.f32 %v1081, %v1095
          %v1099 = vlaneseq
          %v1100 = vshrl.u32 %v1099, 7
          %v1101 = vsub.s32 0, %v1100
          %v1102 = vrot.slane %v1069, %v1101
          %v1104 = vmul.f32 %v1096, %v1102
          %v1105 = vmul.f32 %v1097, %v1102
          %v1107 = vlaneseq
          %v1108 = vshrl.u32 %v1107, 7
          %v1109 = vsub.s32 0, %v1108
          %v1110 = vrot.slane %v1070, %v1109
          %v1112 = vadd.f32 %v1104, %v1110
          %v1113 = vadd.f32 %v1105, %v1110
          %1114 = vst.msk [vmem:[#allocation2] sm:$0xff] %vm873, %v1112
          %1115 = vst.msk [vmem:[#allocation2 + $0x8] sm:$0xff] %vm873, %v1113
        $region100: #{tpu_custom_call.1} parent=95 // pred_fallthru
          _
        %v1116 = vld [vmem:[#allocation2] sm:$0xff]
        %v1117 = vld [vmem:[#allocation2 + $0x8] sm:$0xff]
        %v1118 = vpack.c.bf16 %v1117, %v1116
        %v1119 = vld [vmem:[%s801] sm:$0xf]
        %v1120 = vld [vmem:[%s801 + $0x4] sm:$0xf]
        %v1121 = vld [vmem:[%s801 + $0x8] sm:$0xf]
        %v1122 = vld [vmem:[%s801 + $0xc] sm:$0xf]
        %v1123 = vld [vmem:[%s804] sm:$0x1]
        %v1125 = vlaneseq
        %v1126 = vshrl.u32 %v1125, 7
        %v1127 = vsub.s32 0, %v1126
        %v1128 = vrot.slane %v1123, %v1127
        %v1134 = vunpack.c.l.b16 %v1119
        %v1135 = vunpack.c.l.b16 %v1120
        %v1136 = vunpack.c.l.b16 %v1121
        %v1137 = vunpack.c.l.b16 %v1122
        %v1138 = vpack.c.b16 %v1135, %v1134
        %v1139 = vpack.c.b16 %v1137, %v1136
        %vm1142 = vcmask 261120
        %v1144 = vsel %vm1142, %v1118, 0
        %1146 = vmatprep.subr.bf16.mxu0 0
        %1147 = vmatpush1.bf16.msra.mxu0 %v1138
        %1148 = vmatprep.subr.bf16.mxu0 0
        %1149 = vmatpush1.bf16.msra.mxu0 %v1139
        %1150 = vmatprep.subr.bf16.mxu0 0
        %1151 = vmatpush1.bf16.msra.mxu0 0
        %1152 = vmatprep.subr.bf16.mxu0 0
        %1153 = vmatpush1.bf16.msra.mxu0 0
        %1154 = vmatprep.subr.bf16.mxu0 0
        %1155 = vmatpush1.bf16.msra.mxu0 0
        %1156 = vmatprep.subr.bf16.mxu0 0
        %1157 = vmatpush1.bf16.msra.mxu0 0
        %1158 = vmatprep.subr.bf16.mxu0 0
        %1159 = vmatpush1.bf16.msra.mxu0 0
        %1160 = vmatprep.subr.bf16.mxu0 0
        %1161 = vmatpush1.bf16.msra.mxu0 0
        %1162 = vmatprep.subr.bf16.mxu0 0
        %1163 = vmatpush1.bf16.msra.mxu0 0
        %1164 = vmatprep.subr.bf16.mxu0 0
        %1165 = vmatpush1.bf16.msra.mxu0 0
        %1166 = vmatprep.subr.bf16.mxu0 0
        %1167 = vmatpush1.bf16.msra.mxu0 0
        %1168 = vmatprep.subr.bf16.mxu0 0
        %1169 = vmatpush1.bf16.msra.mxu0 0
        %1170 = vmatprep.subr.bf16.mxu0 0
        %1171 = vmatpush1.bf16.msra.mxu0 0
        %1172 = vmatprep.subr.bf16.mxu0 0
        %1173 = vmatpush1.bf16.msra.mxu0 0
        %1174 = vmatprep.subr.bf16.mxu0 0
        %1175 = vmatpush1.bf16.msra.mxu0 0
        %1176 = vmatprep.subr.bf16.mxu0 0
        %1177 = vmatpush1.bf16.msra.mxu0 0
        %1178 = vmatprep.mubr.bf16.mxu0 0
        %1179 = vmatmul.mubr.bf16.gmra.mrb[0].mxu0 %v1144
        %v1180 = vpop.f32.mrb[0].mxu0
        %v1181 = vadd.f32 %v1128, %v1180
        %v1182 = vpop.f32.mrb[0].mxu0
        %v1183 = vpop.f32.mrb[0].mxu0
        %v1184 = vadd.f32 %v1128, %v1183
        %v1185 = vpop.f32.mrb[0].mxu0
        %1186 = vdwg.mxu0
        %v1187 = vpack.c.bf16 %v1184, %v1181
        %1189 = vrot.lane.b32.xlu0 %v1187, 96
        %v1190 = vpop.permute.xlu0 %1189
        %vm1191 = vcmask 64512
        %v1193 = vsel %vm1191, %v1187, 0
        %v1196 = vsel %vm1191, %v1190, 0
        %1198 = vmatprep.subr.bf16.mxu0 0
        %1199 = vmatpush1.bf16.xpose.msra.mxu0 %v1196
        %1200 = vmatprep.subr.bf16.mxu0 0
        %1201 = vmatpush1.bf16.xpose.msra.mxu0 0
        %1202 = vmatprep.subr.bf16.mxu0 0
        %1203 = vmatpush1.bf16.xpose.msra.mxu0 0
        %1204 = vmatprep.subr.bf16.mxu0 0
        %1205 = vmatpush1.bf16.xpose.msra.mxu0 0
        %1206 = vmatprep.subr.bf16.mxu0 0
        %1207 = vmatpush1.bf16.xpose.msra.mxu0 0
        %1208 = vmatprep.subr.bf16.mxu0 0
        %1209 = vmatpush1.bf16.xpose.msra.mxu0 0
        %1210 = vmatprep.subr.bf16.mxu0 0
        %1211 = vmatpush1.bf16.xpose.msra.mxu0 0
        %1212 = vmatprep.subr.bf16.mxu0 0
        %1213 = vmatpush1.bf16.xpose.msra.mxu0 0
        %1214 = vmatprep.subr.bf16.mxu0 0
        %1215 = vmatpush1.bf16.xpose.msra.mxu0 0
        %1216 = vmatprep.subr.bf16.mxu0 0
        %1217 = vmatpush1.bf16.xpose.msra.mxu0 0
        %1218 = vmatprep.subr.bf16.mxu0 0
        %1219 = vmatpush1.bf16.xpose.msra.mxu0 0
        %1220 = vmatprep.subr.bf16.mxu0 0
        %1221 = vmatpush1.bf16.xpose.msra.mxu0 0
        %1222 = vmatprep.subr.bf16.mxu0 0
        %1223 = vmatpush1.bf16.xpose.msra.mxu0 0
        %1224 = vmatprep.subr.bf16.mxu0 0
        %1225 = vmatpush1.bf16.xpose.msra.mxu0 0
        %1226 = vmatprep.subr.bf16.mxu0 0
        %1227 = vmatpush1.bf16.xpose.msra.mxu0 0
        %1228 = vmatprep.subr.bf16.mxu0 0
        %1229 = vmatpush1.bf16.xpose.msra.mxu0 0
        %1230 = vmatprep.mubr.bf16.mxu0 0
        %1231 = vmatmul.mubr.bf16.gmra.mrb[0].mxu0 %v1193
        %v1232 = vpop.f32.mrb[0].mxu0
        %v1233 = vadd.f32 0.0, %v1232
        %v1234 = vpop.f32.mrb[0].mxu0
        %v1235 = vpop.f32.mrb[0].mxu0
        %v1236 = vadd.f32 0.0, %v1235
        %v1237 = vpop.f32.mrb[0].mxu0
        %1238 = vdwg.mxu0
        %v1239 = vmul.f32 %v1233, 0.35355338
        %v1240 = vmul.f32 %v1236, 0.35355338
        %vm1241 = vcmask 130048
        %v1242 = vsel %vm1241, %v1239, -inf
        %1243 = vmax.xlane.f32.xlu0 %v1242
        %v1244 = vpop.xlane.xlu0 %1243
        %v1245 = vsel %vm1241, %v1240, -inf
        %1246 = vmax.xlane.f32.xlu0 %v1245
        %v1247 = vpop.xlane.xlu0 %1246
        %v1248 = vsub.f32 %v1239, %v1244
        %v1249 = vsub.f32 %v1240, %v1247
        %v1250 = vmul.f32 %v1248, 1.442695
        %v1251 = vpow.pop %v1250
        %v1252 = vmul.f32 %v1249, 1.442695
        %v1253 = vpow.pop %v1252
        %v1254 = vsel %vm1241, %v1251, 0.0
        %1255 = vadd.xlane.f32.xlu0 %v1254
        %v1256 = vpop.xlane.xlu0 %1255
        %v1257 = vsel %vm1241, %v1253, 0.0
        %1258 = vadd.xlane.f32.xlu0 %v1257
        %v1259 = vpop.xlane.xlu0 %1258
        %v1260 = vrcp.pop %v1256
        %v1261 = vrcp.pop %v1259
        %v1262 = vmul.f32 %v1251, %v1260
        %v1263 = vmul.f32 %v1253, %v1261
        %v1264 = vpack.c.bf16 %v1263, %v1262
        %1265 = vrot.lane.b32.xlu0 %v1187, 64
        %v1266 = vpop.permute.xlu0 %1265
        %v1269 = vsel %vm1241, %v1264, 0
        %1271 = vmatprep.subr.bf16.mxu0 0
        %1272 = vmatpush1.bf16.msra.mxu0 %v1266
        %1273 = vmatprep.subr.bf16.mxu0 0
        %1274 = vmatpush1.bf16.msra.mxu0 0
        %1275 = vmatprep.subr.bf16.mxu0 0
        %1276 = vmatpush1.bf16.msra.mxu0 0
        %1277 = vmatprep.subr.bf16.mxu0 0
        %1278 = vmatpush1.bf16.msra.mxu0 0
        %1279 = vmatprep.subr.bf16.mxu0 0
        %1280 = vmatpush1.bf16.msra.mxu0 0
        %1281 = vmatprep.subr.bf16.mxu0 0
        %1282 = vmatpush1.bf16.msra.mxu0 0
        %1283 = vmatprep.subr.bf16.mxu0 0
        %1284 = vmatpush1.bf16.msra.mxu0 0
        %1285 = vmatprep.subr.bf16.mxu0 0
        %1286 = vmatpush1.bf16.msra.mxu0 0
        %1287 = vmatprep.subr.bf16.mxu0 0
        %1288 = vmatpush1.bf16.msra.mxu0 0
        %1289 = vmatprep.subr.bf16.mxu0 0
        %1290 = vmatpush1.bf16.msra.mxu0 0
        %1291 = vmatprep.subr.bf16.mxu0 0
        %1292 = vmatpush1.bf16.msra.mxu0 0
        %1293 = vmatprep.subr.bf16.mxu0 0
        %1294 = vmatpush1.bf16.msra.mxu0 0
        %1295 = vmatprep.subr.bf16.mxu0 0
        %1296 = vmatpush1.bf16.msra.mxu0 0
        %1297 = vmatprep.subr.bf16.mxu0 0
        %1298 = vmatpush1.bf16.msra.mxu0 0
        %1299 = vmatprep.subr.bf16.mxu0 0
        %1300 = vmatpush1.bf16.msra.mxu0 0
        %1301 = vmatprep.subr.bf16.mxu0 0
        %1302 = vmatpush1.bf16.msra.mxu0 0
        %1303 = vmatprep.mubr.bf16.mxu0 0
        %1304 = vmatmul.mubr.bf16.gmra.mrb[0].mxu0 %v1269
        %v1305 = vpop.f32.mrb[0].mxu0
        %v1306 = vadd.f32 0.0, %v1305
        %v1307 = vpop.f32.mrb[0].mxu0
        %v1308 = vpop.f32.mrb[0].mxu0
        %v1309 = vadd.f32 0.0, %v1308
        %v1310 = vpop.f32.mrb[0].mxu0
        %1311 = vdwg.mxu0
        %1312 = vrot.lane.b32.xlu0 %v1187, 120
        %v1313 = vpop.permute.xlu0 %1312
        %1314 = vrot.lane.b32.xlu0 %v1187, 88
        %v1315 = vpop.permute.xlu0 %1314
        %v1317 = vsel %vm1191, %v1313, 0
        %v1320 = vsel %vm1191, %v1315, 0
        %1322 = vmatprep.subr.bf16.mxu0 0
        %1323 = vmatpush1.bf16.xpose.msra.mxu0 %v1320
        %1324 = vmatprep.subr.bf16.mxu0 0
        %1325 = vmatpush1.bf16.xpose.msra.mxu0 0
        %1326 = vmatprep.subr.bf16.mxu0 0
        %1327 = vmatpush1.bf16.xpose.msra.mxu0 0
        %1328 = vmatprep.subr.bf16.mxu0 0
        %1329 = vmatpush1.bf16.xpose.msra.mxu0 0
        %1330 = vmatprep.subr.bf16.mxu0 0
        %1331 = vmatpush1.bf16.xpose.msra.mxu0 0
        %1332 = vmatprep.subr.bf16.mxu0 0
        %1333 = vmatpush1.bf16.xpose.msra.mxu0 0
        %1334 = vmatprep.subr.bf16.mxu0 0
        %1335 = vmatpush1.bf16.xpose.msra.mxu0 0
        %1336 = vmatprep.subr.bf16.mxu0 0
        %1337 = vmatpush1.bf16.xpose.msra.mxu0 0
        %1338 = vmatprep.subr.bf16.mxu0 0
        %1339 = vmatpush1.bf16.xpose.msra.mxu0 0
        %1340 = vmatprep.subr.bf16.mxu0 0
        %1341 = vmatpush1.bf16.xpose.msra.mxu0 0
        %1342 = vmatprep.subr.bf16.mxu0 0
        %1343 = vmatpush1.bf16.xpose.msra.mxu0 0
        %1344 = vmatprep.subr.bf16.mxu0 0
        %1345 = vmatpush1.bf16.xpose.msra.mxu0 0
        %1346 = vmatprep.subr.bf16.mxu0 0
        %1347 = vmatpush1.bf16.xpose.msra.mxu0 0
        %1348 = vmatprep.subr.bf16.mxu0 0
        %1349 = vmatpush1.bf16.xpose.msra.mxu0 0
        %1350 = vmatprep.subr.bf16.mxu0 0
        %1351 = vmatpush1.bf16.xpose.msra.mxu0 0
        %1352 = vmatprep.subr.bf16.mxu0 0
        %1353 = vmatpush1.bf16.xpose.msra.mxu0 0
        %1354 = vmatprep.mubr.bf16.mxu0 0
        %1355 = vmatmul.mubr.bf16.gmra.mrb[0].mxu0 %v1317
        %v1356 = vpop.f32.mrb[0].mxu0
        %v1357 = vadd.f32 0.0, %v1356
        %v1358 = vpop.f32.mrb[0].mxu0
        %v1359 = vpop.f32.mrb[0].mxu0
        %v1360 = vadd.f32 0.0, %v1359
        %v1361 = vpop.f32.mrb[0].mxu0
        %1362 = vdwg.mxu0
        %v1363 = vmul.f32 %v1357, 0.35355338
        %v1364 = vmul.f32 %v1360, 0.35355338
        %v1365 = vsel %vm1241, %v1363, -inf
        %1366 = vmax.xlane.f32.xlu0 %v1365
        %v1367 = vpop.xlane.xlu0 %1366
        %v1368 = vsel %vm1241, %v1364, -inf
        %1369 = vmax.xlane.f32.xlu0 %v1368
        %v1370 = vpop.xlane.xlu0 %1369
        %v1371 = vsub.f32 %v1363, %v1367
        %v1372 = vsub.f32 %v1364, %v1370
        %v1373 = vmul.f32 %v1371, 1.442695
        %v1374 = vpow.pop %v1373
        %v1375 = vmul.f32 %v1372, 1.442695
        %v1376 = vpow.pop %v1375
        %v1377 = vsel %vm1241, %v1374, 0.0
        %1378 = vadd.xlane.f32.xlu0 %v1377
        %v1379 = vpop.xlane.xlu0 %1378
        %v1380 = vsel %vm1241, %v1376, 0.0
        %1381 = vadd.xlane.f32.xlu0 %v1380
        %v1382 = vpop.xlane.xlu0 %1381
        %v1383 = vrcp.pop %v1379
        %v1384 = vrcp.pop %v1382
        %v1385 = vmul.f32 %v1374, %v1383
        %v1386 = vmul.f32 %v1376, %v1384
        %v1387 = vpack.c.bf16 %v1386, %v1385
        %1388 = vrot.lane.b32.xlu0 %v1187, 56
        %v1389 = vpop.permute.xlu0 %1388
        %v1392 = vsel %vm1241, %v1387, 0
        %1394 = vmatprep.subr.bf16.mxu0 0
        %1395 = vmatpush1.bf16.msra.mxu0 %v1389
        %1396 = vmatprep.subr.bf16.mxu0 0
        %1397 = vmatpush1.bf16.msra.mxu0 0
        %1398 = vmatprep.subr.bf16.mxu0 0
        %1399 = vmatpush1.bf16.msra.mxu0 0
        %1400 = vmatprep.subr.bf16.mxu0 0
        %1401 = vmatpush1.bf16.msra.mxu0 0
        %1402 = vmatprep.subr.bf16.mxu0 0
        %1403 = vmatpush1.bf16.msra.mxu0 0
        %1404 = vmatprep.subr.bf16.mxu0 0
        %1405 = vmatpush1.bf16.msra.mxu0 0
        %1406 = vmatprep.subr.bf16.mxu0 0
        %1407 = vmatpush1.bf16.msra.mxu0 0
        %1408 = vmatprep.subr.bf16.mxu0 0
        %1409 = vmatpush1.bf16.msra.mxu0 0
        %1410 = vmatprep.subr.bf16.mxu0 0
        %1411 = vmatpush1.bf16.msra.mxu0 0
        %1412 = vmatprep.subr.bf16.mxu0 0
        %1413 = vmatpush1.bf16.msra.mxu0 0
        %1414 = vmatprep.subr.bf16.mxu0 0
        %1415 = vmatpush1.bf16.msra.mxu0 0
        %1416 = vmatprep.subr.bf16.mxu0 0
        %1417 = vmatpush1.bf16.msra.mxu0 0
        %1418 = vmatprep.subr.bf16.mxu0 0
        %1419 = vmatpush1.bf16.msra.mxu0 0
        %1420 = vmatprep.subr.bf16.mxu0 0
        %1421 = vmatpush1.bf16.msra.mxu0 0
        %1422 = vmatprep.subr.bf16.mxu0 0
        %1423 = vmatpush1.bf16.msra.mxu0 0
        %1424 = vmatprep.subr.bf16.mxu0 0
        %1425 = vmatpush1.bf16.msra.mxu0 0
        %1426 = vmatprep.mubr.bf16.mxu0 0
        %1427 = vmatmul.mubr.bf16.gmra.mrb[0].mxu0 %v1392
        %v1428 = vpop.f32.mrb[0].mxu0
        %v1429 = vadd.f32 0.0, %v1428
        %v1430 = vpop.f32.mrb[0].mxu0
        %v1431 = vpop.f32.mrb[0].mxu0
        %v1432 = vadd.f32 0.0, %v1431
        %v1433 = vpop.f32.mrb[0].mxu0
        %1434 = vdwg.mxu0
        %1435 = vrot.lane.b32.xlu0 %v1187, 112
        %v1436 = vpop.permute.xlu0 %1435
        %1437 = vrot.lane.b32.xlu0 %v1187, 80
        %v1438 = vpop.permute.xlu0 %1437
        %v1440 = vsel %vm1191, %v1436, 0
        %v1443 = vsel %vm1191, %v1438, 0
        %1445 = vmatprep.subr.bf16.mxu0 0
        %1446 = vmatpush1.bf16.xpose.msra.mxu0 %v1443
        %1447 = vmatprep.subr.bf16.mxu0 0
        %1448 = vmatpush1.bf16.xpose.msra.mxu0 0
        %1449 = vmatprep.subr.bf16.mxu0 0
        %1450 = vmatpush1.bf16.xpose.msra.mxu0 0
        %1451 = vmatprep.subr.bf16.mxu0 0
        %1452 = vmatpush1.bf16.xpose.msra.mxu0 0
        %1453 = vmatprep.subr.bf16.mxu0 0
        %1454 = vmatpush1.bf16.xpose.msra.mxu0 0
        %1455 = vmatprep.subr.bf16.mxu0 0
        %1456 = vmatpush1.bf16.xpose.msra.mxu0 0
        %1457 = vmatprep.subr.bf16.mxu0 0
        %1458 = vmatpush1.bf16.xpose.msra.mxu0 0
        %1459 = vmatprep.subr.bf16.mxu0 0
        %1460 = vmatpush1.bf16.xpose.msra.mxu0 0
        %1461 = vmatprep.subr.bf16.mxu0 0
        %1462 = vmatpush1.bf16.xpose.msra.mxu0 0
        %1463 = vmatprep.subr.bf16.mxu0 0
        %1464 = vmatpush1.bf16.xpose.msra.mxu0 0
        %1465 = vmatprep.subr.bf16.mxu0 0
        %1466 = vmatpush1.bf16.xpose.msra.mxu0 0
        %1467 = vmatprep.subr.bf16.mxu0 0
        %1468 = vmatpush1.bf16.xpose.msra.mxu0 0
        %1469 = vmatprep.subr.bf16.mxu0 0
        %1470 = vmatpush1.bf16.xpose.msra.mxu0 0
        %1471 = vmatprep.subr.bf16.mxu0 0
        %1472 = vmatpush1.bf16.xpose.msra.mxu0 0
        %1473 = vmatprep.subr.bf16.mxu0 0
        %1474 = vmatpush1.bf16.xpose.msra.mxu0 0
        %1475 = vmatprep.subr.bf16.mxu0 0
        %1476 = vmatpush1.bf16.xpose.msra.mxu0 0
        %1477 = vmatprep.mubr.bf16.mxu0 0
        %1478 = vmatmul.mubr.bf16.gmra.mrb[0].mxu0 %v1440
        %v1479 = vpop.f32.mrb[0].mxu0
        %v1480 = vadd.f32 0.0, %v1479
        %v1481 = vpop.f32.mrb[0].mxu0
        %v1482 = vpop.f32.mrb[0].mxu0
        %v1483 = vadd.f32 0.0, %v1482
        %v1484 = vpop.f32.mrb[0].mxu0
        %1485 = vdwg.mxu0
        %v1486 = vmul.f32 %v1480, 0.35355338
        %v1487 = vmul.f32 %v1483, 0.35355338
        %v1488 = vsel %vm1241, %v1486, -inf
        %1489 = vmax.xlane.f32.xlu0 %v1488
        %v1490 = vpop.xlane.xlu0 %1489
        %v1491 = vsel %vm1241, %v1487, -inf
        %1492 = vmax.xlane.f32.xlu0 %v1491
        %v1493 = vpop.xlane.xlu0 %1492
        %v1494 = vsub.f32 %v1486, %v1490
        %v1495 = vsub.f32 %v1487, %v1493
        %v1496 = vmul.f32 %v1494, 1.442695
        %v1497 = vpow.pop %v1496
        %v1498 = vmul.f32 %v1495, 1.442695
        %v1499 = vpow.pop %v1498
        %v1500 = vsel %vm1241, %v1497, 0.0
        %1501 = vadd.xlane.f32.xlu0 %v1500
        %v1502 = vpop.xlane.xlu0 %1501
        %v1503 = vsel %vm1241, %v1499, 0.0
        %1504 = vadd.xlane.f32.xlu0 %v1503
        %v1505 = vpop.xlane.xlu0 %1504
        %v1506 = vrcp.pop %v1502
        %v1507 = vrcp.pop %v1505
        %v1508 = vmul.f32 %v1497, %v1506
        %v1509 = vmul.f32 %v1499, %v1507
        %v1510 = vpack.c.bf16 %v1509, %v1508
        %1511 = vrot.lane.b32.xlu0 %v1187, 48
        %v1512 = vpop.permute.xlu0 %1511
        %v1515 = vsel %vm1241, %v1510, 0
        %1517 = vmatprep.subr.bf16.mxu0 0
        %1518 = vmatpush1.bf16.msra.mxu0 %v1512
        %1519 = vmatprep.subr.bf16.mxu0 0
        %1520 = vmatpush1.bf16.msra.mxu0 0
        %1521 = vmatprep.subr.bf16.mxu0 0
        %1522 = vmatpush1.bf16.msra.mxu0 0
        %1523 = vmatprep.subr.bf16.mxu0 0
        %1524 = vmatpush1.bf16.msra.mxu0 0
        %1525 = vmatprep.subr.bf16.mxu0 0
        %1526 = vmatpush1.bf16.msra.mxu0 0
        %1527 = vmatprep.subr.bf16.mxu0 0
        %1528 = vmatpush1.bf16.msra.mxu0 0
        %1529 = vmatprep.subr.bf16.mxu0 0
        %1530 = vmatpush1.bf16.msra.mxu0 0
        %1531 = vmatprep.subr.bf16.mxu0 0
        %1532 = vmatpush1.bf16.msra.mxu0 0
        %1533 = vmatprep.subr.bf16.mxu0 0
        %1534 = vmatpush1.bf16.msra.mxu0 0
        %1535 = vmatprep.subr.bf16.mxu0 0
        %1536 = vmatpush1.bf16.msra.mxu0 0
        %1537 = vmatprep.subr.bf16.mxu0 0
        %1538 = vmatpush1.bf16.msra.mxu0 0
        %1539 = vmatprep.subr.bf16.mxu0 0
        %1540 = vmatpush1.bf16.msra.mxu0 0
        %1541 = vmatprep.subr.bf16.mxu0 0
        %1542 = vmatpush1.bf16.msra.mxu0 0
        %1543 = vmatprep.subr.bf16.mxu0 0
        %1544 = vmatpush1.bf16.msra.mxu0 0
        %1545 = vmatprep.subr.bf16.mxu0 0
        %1546 = vmatpush1.bf16.msra.mxu0 0
        %1547 = vmatprep.subr.bf16.mxu0 0
        %1548 = vmatpush1.bf16.msra.mxu0 0
        %1549 = vmatprep.mubr.bf16.mxu0 0
        %1550 = vmatmul.mubr.bf16.gmra.mrb[0].mxu0 %v1515
        %v1551 = vpop.f32.mrb[0].mxu0
        %v1552 = vadd.f32 0.0, %v1551
        %v1553 = vpop.f32.mrb[0].mxu0
        %v1554 = vpop.f32.mrb[0].mxu0
        %v1555 = vadd.f32 0.0, %v1554
        %v1556 = vpop.f32.mrb[0].mxu0
        %1557 = vdwg.mxu0
        %1558 = vrot.lane.b32.xlu0 %v1187, 104
        %v1559 = vpop.permute.xlu0 %1558
        %1560 = vrot.lane.b32.xlu0 %v1187, 72
        %v1561 = vpop.permute.xlu0 %1560
        %v1563 = vsel %vm1191, %v1559, 0
        %v1566 = vsel %vm1191, %v1561, 0
        %1568 = vmatprep.subr.bf16.mxu0 0
        %1569 = vmatpush1.bf16.xpose.msra.mxu0 %v1566
        %1570 = vmatprep.subr.bf16.mxu0 0
        %1571 = vmatpush1.bf16.xpose.msra.mxu0 0
        %1572 = vmatprep.subr.bf16.mxu0 0
        %1573 = vmatpush1.bf16.xpose.msra.mxu0 0
        %1574 = vmatprep.subr.bf16.mxu0 0
        %1575 = vmatpush1.bf16.xpose.msra.mxu0 0
        %1576 = vmatprep.subr.bf16.mxu0 0
        %1577 = vmatpush1.bf16.xpose.msra.mxu0 0
        %1578 = vmatprep.subr.bf16.mxu0 0
        %1579 = vmatpush1.bf16.xpose.msra.mxu0 0
        %1580 = vmatprep.subr.bf16.mxu0 0
        %1581 = vmatpush1.bf16.xpose.msra.mxu0 0
        %1582 = vmatprep.subr.bf16.mxu0 0
        %1583 = vmatpush1.bf16.xpose.msra.mxu0 0
        %1584 = vmatprep.subr.bf16.mxu0 0
        %1585 = vmatpush1.bf16.xpose.msra.mxu0 0
        %1586 = vmatprep.subr.bf16.mxu0 0
        %1587 = vmatpush1.bf16.xpose.msra.mxu0 0
        %1588 = vmatprep.subr.bf16.mxu0 0
        %1589 = vmatpush1.bf16.xpose.msra.mxu0 0
        %1590 = vmatprep.subr.bf16.mxu0 0
        %1591 = vmatpush1.bf16.xpose.msra.mxu0 0
        %1592 = vmatprep.subr.bf16.mxu0 0
        %1593 = vmatpush1.bf16.xpose.msra.mxu0 0
        %1594 = vmatprep.subr.bf16.mxu0 0
        %1595 = vmatpush1.bf16.xpose.msra.mxu0 0
        %1596 = vmatprep.subr.bf16.mxu0 0
        %1597 = vmatpush1.bf16.xpose.msra.mxu0 0
        %1598 = vmatprep.subr.bf16.mxu0 0
        %1599 = vmatpush1.bf16.xpose.msra.mxu0 0
        %1600 = vmatprep.mubr.bf16.mxu0 0
        %1601 = vmatmul.mubr.bf16.gmra.mrb[0].mxu0 %v1563
        %v1602 = vpop.f32.mrb[0].mxu0
        %v1603 = vadd.f32 0.0, %v1602
        %v1604 = vpop.f32.mrb[0].mxu0
        %v1605 = vpop.f32.mrb[0].mxu0
        %v1606 = vadd.f32 0.0, %v1605
        %v1607 = vpop.f32.mrb[0].mxu0
        %1608 = vdwg.mxu0
        %v1609 = vmul.f32 %v1603, 0.35355338
        %v1610 = vmul.f32 %v1606, 0.35355338
        %v1611 = vsel %vm1241, %v1609, -inf
        %1612 = vmax.xlane.f32.xlu0 %v1611
        %v1613 = vpop.xlane.xlu0 %1612
        %v1614 = vsel %vm1241, %v1610, -inf
        %1615 = vmax.xlane.f32.xlu0 %v1614
        %v1616 = vpop.xlane.xlu0 %1615
        %v1617 = vsub.f32 %v1609, %v1613
        %v1618 = vsub.f32 %v1610, %v1616
        %v1619 = vmul.f32 %v1617, 1.442695
        %v1620 = vpow.pop %v1619
        %v1621 = vmul.f32 %v1618, 1.442695
        %v1622 = vpow.pop %v1621
        %v1623 = vsel %vm1241, %v1620, 0.0
        %1624 = vadd.xlane.f32.xlu0 %v1623
        %v1625 = vpop.xlane.xlu0 %1624
        %v1626 = vsel %vm1241, %v1622, 0.0
        %1627 = vadd.xlane.f32.xlu0 %v1626
        %v1628 = vpop.xlane.xlu0 %1627
        %v1629 = vrcp.pop %v1625
        %v1630 = vrcp.pop %v1628
        %v1631 = vmul.f32 %v1620, %v1629
        %v1632 = vmul.f32 %v1622, %v1630
        %v1633 = vpack.c.bf16 %v1632, %v1631
        %1634 = vrot.lane.b32.xlu0 %v1187, 40
        %v1635 = vpop.permute.xlu0 %1634
        %v1638 = vsel %vm1241, %v1633, 0
        %1640 = vmatprep.subr.bf16.mxu0 0
        %1641 = vmatpush1.bf16.msra.mxu0 %v1635
        %1642 = vmatprep.subr.bf16.mxu0 0
        %1643 = vmatpush1.bf16.msra.mxu0 0
        %1644 = vmatprep.subr.bf16.mxu0 0
        %1645 = vmatpush1.bf16.msra.mxu0 0
        %1646 = vmatprep.subr.bf16.mxu0 0
        %1647 = vmatpush1.bf16.msra.mxu0 0
        %1648 = vmatprep.subr.bf16.mxu0 0
        %1649 = vmatpush1.bf16.msra.mxu0 0
        %1650 = vmatprep.subr.bf16.mxu0 0
        %1651 = vmatpush1.bf16.msra.mxu0 0
        %1652 = vmatprep.subr.bf16.mxu0 0
        %1653 = vmatpush1.bf16.msra.mxu0 0
        %1654 = vmatprep.subr.bf16.mxu0 0
        %1655 = vmatpush1.bf16.msra.mxu0 0
        %1656 = vmatprep.subr.bf16.mxu0 0
        %1657 = vmatpush1.bf16.msra.mxu0 0
        %1658 = vmatprep.subr.bf16.mxu0 0
        %1659 = vmatpush1.bf16.msra.mxu0 0
        %1660 = vmatprep.subr.bf16.mxu0 0
        %1661 = vmatpush1.bf16.msra.mxu0 0
        %1662 = vmatprep.subr.bf16.mxu0 0
        %1663 = vmatpush1.bf16.msra.mxu0 0
        %1664 = vmatprep.subr.bf16.mxu0 0
        %1665 = vmatpush1.bf16.msra.mxu0 0
        %1666 = vmatprep.subr.bf16.mxu0 0
        %1667 = vmatpush1.bf16.msra.mxu0 0
        %1668 = vmatprep.subr.bf16.mxu0 0
        %1669 = vmatpush1.bf16.msra.mxu0 0
        %1670 = vmatprep.subr.bf16.mxu0 0
        %1671 = vmatpush1.bf16.msra.mxu0 0
        %1672 = vmatprep.mubr.bf16.mxu0 0
        %1673 = vmatmul.mubr.bf16.gmra.mrb[0].mxu0 %v1638
        %v1674 = vpop.f32.mrb[0].mxu0
        %v1675 = vadd.f32 0.0, %v1674
        %v1676 = vpop.f32.mrb[0].mxu0
        %v1677 = vpop.f32.mrb[0].mxu0
        %v1678 = vadd.f32 0.0, %v1677
        %v1679 = vpop.f32.mrb[0].mxu0
        %1680 = vdwg.mxu0
        %1683 = vrot.lane.b32.xlu0 %v1429, 8
        %v1684 = vpop.permute.xlu0 %1683
        %1685 = vrot.lane.b32.xlu0 %v1432, 8
        %v1686 = vpop.permute.xlu0 %1685
        %1691 = vrot.lane.b32.xlu0 %v1552, 16
        %v1692 = vpop.permute.xlu0 %1691
        %1693 = vrot.lane.b32.xlu0 %v1555, 16
        %v1694 = vpop.permute.xlu0 %1693
        %1699 = vrot.lane.b32.xlu0 %v1675, 24
        %v1700 = vpop.permute.xlu0 %1699
        %1701 = vrot.lane.b32.xlu0 %v1678, 24
        %v1702 = vpop.permute.xlu0 %1701
        %v1705 = vsel %vm1191, %v1306, %v1684
        %v1706 = vsel %vm1191, %v1309, %v1686
        %v1707 = vsel %vm1241, %v1705, %v1692
        %v1708 = vsel %vm1241, %v1706, %v1694
        %vm1709 = vcmask 195584
        %v1710 = vsel %vm1709, %v1707, %v1700
        %v1711 = vsel %vm1709, %v1708, %v1702
        %v1712 = vpack.c.bf16 %v1711, %v1710
        %v1713 = vld [vmem:[%s809] sm:$0xf]
        %v1714 = vld [vmem:[%s809 + $0x4] sm:$0xf]
        %v1715 = vld [vmem:[%s809 + $0x8] sm:$0xf]
        %v1716 = vld [vmem:[%s809 + $0xc] sm:$0xf]
        %v1717 = vld [vmem:[%s812] sm:$0x1]
        %v1719 = vlaneseq
        %v1720 = vshrl.u32 %v1719, 7
        %v1721 = vsub.s32 0, %v1720
        %v1722 = vrot.slane %v1717, %v1721
        %v1728 = vunpack.c.l.b16 %v1713
        %v1729 = vunpack.c.l.b16 %v1714
        %v1730 = vunpack.c.l.b16 %v1715
        %v1731 = vunpack.c.l.b16 %v1716
        %v1732 = vpack.c.b16 %v1729, %v1728
        %v1733 = vpack.c.b16 %v1731, %v1730
        %v1737 = vsel %vm1142, %v1712, 0
        %1739 = vmatprep.subr.bf16.mxu0 0
        %1740 = vmatpush1.bf16.msra.mxu0 %v1732
        %1741 = vmatprep.subr.bf16.mxu0 0
        %1742 = vmatpush1.bf16.msra.mxu0 %v1733
        %1743 = vmatprep.subr.bf16.mxu0 0
        %1744 = vmatpush1.bf16.msra.mxu0 0
        %1745 = vmatprep.subr.bf16.mxu0 0
        %1746 = vmatpush1.bf16.msra.mxu0 0
        %1747 = vmatprep.subr.bf16.mxu0 0
        %1748 = vmatpush1.bf16.msra.mxu0 0
        %1749 = vmatprep.subr.bf16.mxu0 0
        %1750 = vmatpush1.bf16.msra.mxu0 0
        %1751 = vmatprep.subr.bf16.mxu0 0
        %1752 = vmatpush1.bf16.msra.mxu0 0
        %1753 = vmatprep.subr.bf16.mxu0 0
        %1754 = vmatpush1.bf16.msra.mxu0 0
        %1755 = vmatprep.subr.bf16.mxu0 0
        %1756 = vmatpush1.bf16.msra.mxu0 0
        %1757 = vmatprep.subr.bf16.mxu0 0
        %1758 = vmatpush1.bf16.msra.mxu0 0
        %1759 = vmatprep.subr.bf16.mxu0 0
        %1760 = vmatpush1.bf16.msra.mxu0 0
        %1761 = vmatprep.subr.bf16.mxu0 0
        %1762 = vmatpush1.bf16.msra.mxu0 0
        %1763 = vmatprep.subr.bf16.mxu0 0
        %1764 = vmatpush1.bf16.msra.mxu0 0
        %1765 = vmatprep.subr.bf16.mxu0 0
        %1766 = vmatpush1.bf16.msra.mxu0 0
        %1767 = vmatprep.subr.bf16.mxu0 0
        %1768 = vmatpush1.bf16.msra.mxu0 0
        %1769 = vmatprep.subr.bf16.mxu0 0
        %1770 = vmatpush1.bf16.msra.mxu0 0
        %1771 = vmatprep.mubr.bf16.mxu0 0
        %1772 = vmatmul.mubr.bf16.gmra.mrb[0].mxu0 %v1737
        %v1773 = vpop.f32.mrb[0].mxu0
        %v1774 = vadd.f32 %v1722, %v1773
        %v1775 = vpop.f32.mrb[0].mxu0
        %v1776 = vpop.f32.mrb[0].mxu0
        %v1777 = vadd.f32 %v1722, %v1776
        %v1778 = vpop.f32.mrb[0].mxu0
        %1779 = vdwg.mxu0
        %v1780 = vadd.f32 %v1116, %v1774
        %v1781 = vadd.f32 %v1117, %v1777
        %v1782 = vld [vmem:[%s815] sm:$0x1]
        %v1783 = vld [vmem:[%s818] sm:$0x1]
        %v1784 = vsel %vm1142, %v1780, 0.0
        %1785 = vadd.xlane.f32.xlu0 %v1784
        %v1786 = vpop.xlane.xlu0 %1785
        %v1787 = vsel %vm1142, %v1781, 0.0
        %1788 = vadd.xlane.f32.xlu0 %v1787
        %v1789 = vpop.xlane.xlu0 %1788
        %v1790 = vrcp.pop 32.0
        %v1791 = vmul.f32 %v1786, %v1790
        %v1792 = vmul.f32 %v1789, %v1790
        %v1793 = vsub.f32 %v1780, %v1791
        %v1794 = vsub.f32 %v1781, %v1792
        %v1795 = vmul.f32 %v1793, %v1793
        %v1796 = vmul.f32 %v1794, %v1794
        %v1797 = vsel %vm1142, %v1795, 0.0
        %1798 = vadd.xlane.f32.xlu0 %v1797
        %v1799 = vpop.xlane.xlu0 %1798
        %v1800 = vsel %vm1142, %v1796, 0.0
        %1801 = vadd.xlane.f32.xlu0 %v1800
        %v1802 = vpop.xlane.xlu0 %1801
        %v1803 = vmul.f32 %v1799, %v1790
        %v1804 = vmul.f32 %v1802, %v1790
        %v1805 = vadd.f32 %v1803, 1e-05
        %v1806 = vadd.f32 %v1804, 1e-05
        %v1807 = vrsqrt.pop %v1805
        %v1808 = vrsqrt.pop %v1806
        %v1809 = vmul.f32 %v1793, %v1807
        %v1810 = vmul.f32 %v1794, %v1808
        %v1812 = vlaneseq
        %v1813 = vshrl.u32 %v1812, 7
        %v1814 = vsub.s32 0, %v1813
        %v1815 = vrot.slane %v1782, %v1814
        %v1817 = vmul.f32 %v1809, %v1815
        %v1818 = vmul.f32 %v1810, %v1815
        %v1820 = vlaneseq
        %v1821 = vshrl.u32 %v1820, 7
        %v1822 = vsub.s32 0, %v1821
        %v1823 = vrot.slane %v1783, %v1822
        %v1825 = vadd.f32 %v1817, %v1823
        %v1826 = vadd.f32 %v1818, %v1823
        %v1827 = vpack.c.bf16 %v1826, %v1825
        %v1828 = vld [vmem:[%s823] sm:$0xff]
        %v1829 = vld [vmem:[%s823 + $0x8] sm:$0xff]
        %v1830 = vld [vmem:[%s823 + $0x10] sm:$0xff]
        %v1831 = vld [vmem:[%s823 + $0x18] sm:$0xff]
        %v1832 = vld [vmem:[%s823 + $0x20] sm:$0xff]
        %v1833 = vld [vmem:[%s823 + $0x28] sm:$0xff]
        %v1834 = vld [vmem:[%s823 + $0x30] sm:$0xff]
        %v1835 = vld [vmem:[%s823 + $0x38] sm:$0xff]
        %v1836 = vld [vmem:[%s827] sm:$0xf]
        %v1838 = vlaneseq
        %v1839 = vshrl.u32 %v1838, 7
        %v1840 = vsub.s32 0, %v1839
        %v1841 = vrot.slane %v1836, %v1840
        %v1842 = vlaneseq
        %v1843 = vshrl.u32 %v1842, 7
        %v1844 = vsub.s32 1, %v1843
        %v1845 = vrot.slane %v1836, %v1844
        %v1846 = vlaneseq
        %v1847 = vshrl.u32 %v1846, 7
        %v1848 = vsub.s32 2, %v1847
        %v1849 = vrot.slane %v1836, %v1848
        %v1850 = vlaneseq
        %v1851 = vshrl.u32 %v1850, 7
        %v1852 = vsub.s32 3, %v1851
        %v1853 = vrot.slane %v1836, %v1852
        %v1866 = vunpack.c.l.b16 %v1828
        %v1867 = vunpack.c.h.b16 %v1828
        %v1868 = vunpack.c.l.b16 %v1829
        %v1869 = vunpack.c.h.b16 %v1829
        %v1870 = vunpack.c.l.b16 %v1830
        %v1871 = vunpack.c.h.b16 %v1830
        %v1872 = vunpack.c.l.b16 %v1831
        %v1873 = vunpack.c.h.b16 %v1831
        %v1874 = vunpack.c.l.b16 %v1832
        %v1875 = vunpack.c.h.b16 %v1832
        %v1876 = vunpack.c.l.b16 %v1833
        %v1877 = vunpack.c.h.b16 %v1833
        %v1878 = vunpack.c.l.b16 %v1834
        %v1879 = vunpack.c.h.b16 %v1834
        %v1880 = vunpack.c.l.b16 %v1835
        %v1881 = vunpack.c.h.b16 %v1835
        %v1882 = vpack.c.b16 %v1870, %v1866
        %v1883 = vpack.c.b16 %v1871, %v1867
        %v1884 = vpack.c.b16 %v1872, %v1868
        %v1885 = vpack.c.b16 %v1873, %v1869
        %v1886 = vpack.c.b16 %v1878, %v1874
        %v1887 = vpack.c.b16 %v1879, %v1875
        %v1888 = vpack.c.b16 %v1880, %v1876
        %v1889 = vpack.c.b16 %v1881, %v1877
        %v1899 = vsel %vm1142, %v1827, 0
        %1901 = vmatprep.subr.bf16.mxu0 %v1883
        %1902 = vmatpush1.bf16.msra.mxu0 %v1882
        %1903 = vmatprep.subr.bf16.mxu0 %v1887
        %1904 = vmatpush1.bf16.msra.mxu0 %v1886
        %1905 = vmatprep.subr.bf16.mxu0 0
        %1906 = vmatpush1.bf16.msra.mxu0 0
        %1907 = vmatprep.subr.bf16.mxu0 0
        %1908 = vmatpush1.bf16.msra.mxu0 0
        %1909 = vmatprep.subr.bf16.mxu0 0
        %1910 = vmatpush1.bf16.msra.mxu0 0
        %1911 = vmatprep.subr.bf16.mxu0 0
        %1912 = vmatpush1.bf16.msra.mxu0 0
        %1913 = vmatprep.subr.bf16.mxu0 0
        %1914 = vmatpush1.bf16.msra.mxu0 0
        %1915 = vmatprep.subr.bf16.mxu0 0
        %1916 = vmatpush1.bf16.msra.mxu0 0
        %1917 = vmatprep.subr.bf16.mxu0 0
        %1918 = vmatpush1.bf16.msra.mxu0 0
        %1919 = vmatprep.subr.bf16.mxu0 0
        %1920 = vmatpush1.bf16.msra.mxu0 0
        %1921 = vmatprep.subr.bf16.mxu0 0
        %1922 = vmatpush1.bf16.msra.mxu0 0
        %1923 = vmatprep.subr.bf16.mxu0 0
        %1924 = vmatpush1.bf16.msra.mxu0 0
        %1925 = vmatprep.subr.bf16.mxu0 0
        %1926 = vmatpush1.bf16.msra.mxu0 0
        %1927 = vmatprep.subr.bf16.mxu0 0
        %1928 = vmatpush1.bf16.msra.mxu0 0
        %1929 = vmatprep.subr.bf16.mxu0 0
        %1930 = vmatpush1.bf16.msra.mxu0 0
        %1931 = vmatprep.subr.bf16.mxu0 0
        %1932 = vmatpush1.bf16.msra.mxu0 0
        %1933 = vmatprep.mubr.bf16.mxu0 0
        %1934 = vmatmul.mubr.bf16.gmra.mrb[0].mxu0 %v1899
        %v1935 = vpop.f32.mrb[0].mxu0
        %v1936 = vadd.f32 %v1841, %v1935
        %v1937 = vpop.f32.mrb[0].mxu0
        %v1938 = vadd.f32 %v1845, %v1937
        %v1939 = vpop.f32.mrb[0].mxu0
        %v1940 = vadd.f32 %v1841, %v1939
        %v1941 = vpop.f32.mrb[0].mxu0
        %v1942 = vadd.f32 %v1845, %v1941
        %1943 = vdwg.mxu0
        %1944 = vmatprep.subr.bf16.mxu0 %v1885
        %1945 = vmatpush1.bf16.msra.mxu0 %v1884
        %1946 = vmatprep.subr.bf16.mxu0 %v1889
        %1947 = vmatpush1.bf16.msra.mxu0 %v1888
        %1948 = vmatprep.subr.bf16.mxu0 0
        %1949 = vmatpush1.bf16.msra.mxu0 0
        %1950 = vmatprep.subr.bf16.mxu0 0
        %1951 = vmatpush1.bf16.msra.mxu0 0
        %1952 = vmatprep.subr.bf16.mxu0 0
        %1953 = vmatpush1.bf16.msra.mxu0 0
        %1954 = vmatprep.subr.bf16.mxu0 0
        %1955 = vmatpush1.bf16.msra.mxu0 0
        %1956 = vmatprep.subr.bf16.mxu0 0
        %1957 = vmatpush1.bf16.msra.mxu0 0
        %1958 = vmatprep.subr.bf16.mxu0 0
        %1959 = vmatpush1.bf16.msra.mxu0 0
        %1960 = vmatprep.subr.bf16.mxu0 0
        %1961 = vmatpush1.bf16.msra.mxu0 0
        %1962 = vmatprep.subr.bf16.mxu0 0
        %1963 = vmatpush1.bf16.msra.mxu0 0
        %1964 = vmatprep.subr.bf16.mxu0 0
        %1965 = vmatpush1.bf16.msra.mxu0 0
        %1966 = vmatprep.subr.bf16.mxu0 0
        %1967 = vmatpush1.bf16.msra.mxu0 0
        %1968 = vmatprep.subr.bf16.mxu0 0
        %1969 = vmatpush1.bf16.msra.mxu0 0
        %1970 = vmatprep.subr.bf16.mxu0 0
        %1971 = vmatpush1.bf16.msra.mxu0 0
        %1972 = vmatprep.subr.bf16.mxu0 0
        %1973 = vmatpush1.bf16.msra.mxu0 0
        %1974 = vmatprep.subr.bf16.mxu0 0
        %1975 = vmatpush1.bf16.msra.mxu0 0
        %1976 = vmatprep.mubr.bf16.mxu0 0
        %1977 = vmatmul.mubr.bf16.gmra.mrb[0].mxu0 %v1899
        %v1978 = vpop.f32.mrb[0].mxu0
        %v1979 = vadd.f32 %v1849, %v1978
        %v1980 = vpop.f32.mrb[0].mxu0
        %v1981 = vadd.f32 %v1853, %v1980
        %v1982 = vpop.f32.mrb[0].mxu0
        %v1983 = vadd.f32 %v1849, %v1982
        %v1984 = vpop.f32.mrb[0].mxu0
        %v1985 = vadd.f32 %v1853, %v1984
        %1986 = vdwg.mxu0
        %v1987 = vmax.f32 %v1936, 0.0
        %v1988 = vmax.f32 %v1938, 0.0
        %v1989 = vmax.f32 %v1979, 0.0
        %v1990 = vmax.f32 %v1981, 0.0
        %v1991 = vmax.f32 %v1940, 0.0
        %v1992 = vmax.f32 %v1942, 0.0
        %v1993 = vmax.f32 %v1983, 0.0
        %v1994 = vmax.f32 %v1985, 0.0
        %v1995 = vpack.c.bf16 %v1991, %v1987
        %v1996 = vpack.c.bf16 %v1992, %v1988
        %v1997 = vpack.c.bf16 %v1993, %v1989
        %v1998 = vpack.c.bf16 %v1994, %v1990
        %v1999 = vld [vmem:[%s832] sm:$0xf]
        %v2000 = vld [vmem:[%s832 + $0x4] sm:$0xf]
        %v2001 = vld [vmem:[%s832 + $0x8] sm:$0xf]
        %v2002 = vld [vmem:[%s832 + $0xc] sm:$0xf]
        %v2003 = vld [vmem:[%s832 + $0x10] sm:$0xf]
        %v2004 = vld [vmem:[%s832 + $0x14] sm:$0xf]
        %v2005 = vld [vmem:[%s832 + $0x18] sm:$0xf]
        %v2006 = vld [vmem:[%s832 + $0x1c] sm:$0xf]
        %v2007 = vld [vmem:[%s832 + $0x20] sm:$0xf]
        %v2008 = vld [vmem:[%s832 + $0x24] sm:$0xf]
        %v2009 = vld [vmem:[%s832 + $0x28] sm:$0xf]
        %v2010 = vld [vmem:[%s832 + $0x2c] sm:$0xf]
        %v2011 = vld [vmem:[%s832 + $0x30] sm:$0xf]
        %v2012 = vld [vmem:[%s832 + $0x34] sm:$0xf]
        %v2013 = vld [vmem:[%s832 + $0x38] sm:$0xf]
        %v2014 = vld [vmem:[%s832 + $0x3c] sm:$0xf]
        %v2015 = vld [vmem:[%s832 + $0x40] sm:$0xf]
        %v2016 = vld [vmem:[%s832 + $0x44] sm:$0xf]
        %v2017 = vld [vmem:[%s832 + $0x48] sm:$0xf]
        %v2018 = vld [vmem:[%s832 + $0x4c] sm:$0xf]
        %v2019 = vld [vmem:[%s832 + $0x50] sm:$0xf]
        %v2020 = vld [vmem:[%s832 + $0x54] sm:$0xf]
        %v2021 = vld [vmem:[%s832 + $0x58] sm:$0xf]
        %v2022 = vld [vmem:[%s832 + $0x5c] sm:$0xf]
        %v2023 = vld [vmem:[%s832 + $0x60] sm:$0xf]
        %v2024 = vld [vmem:[%s832 + $0x64] sm:$0xf]
        %v2025 = vld [vmem:[%s832 + $0x68] sm:$0xf]
        %v2026 = vld [vmem:[%s832 + $0x6c] sm:$0xf]
        %v2027 = vld [vmem:[%s832 + $0x70] sm:$0xf]
        %v2028 = vld [vmem:[%s832 + $0x74] sm:$0xf]
        %v2029 = vld [vmem:[%s832 + $0x78] sm:$0xf]
        %v2030 = vld [vmem:[%s832 + $0x7c] sm:$0xf]
        %v2031 = vld [vmem:[%s832 + $0x80] sm:$0xf]
        %v2032 = vld [vmem:[%s832 + $0x84] sm:$0xf]
        %v2033 = vld [vmem:[%s832 + $0x88] sm:$0xf]
        %v2034 = vld [vmem:[%s832 + $0x8c] sm:$0xf]
        %v2035 = vld [vmem:[%s832 + $0x90] sm:$0xf]
        %v2036 = vld [vmem:[%s832 + $0x94] sm:$0xf]
        %v2037 = vld [vmem:[%s832 + $0x98] sm:$0xf]
        %v2038 = vld [vmem:[%s832 + $0x9c] sm:$0xf]
        %v2039 = vld [vmem:[%s832 + $0xa0] sm:$0xf]
        %v2040 = vld [vmem:[%s832 + $0xa4] sm:$0xf]
        %v2041 = vld [vmem:[%s832 + $0xa8] sm:$0xf]
        %v2042 = vld [vmem:[%s832 + $0xac] sm:$0xf]
        %v2043 = vld [vmem:[%s832 + $0xb0] sm:$0xf]
        %v2044 = vld [vmem:[%s832 + $0xb4] sm:$0xf]
        %v2045 = vld [vmem:[%s832 + $0xb8] sm:$0xf]
        %v2046 = vld [vmem:[%s832 + $0xbc] sm:$0xf]
        %v2047 = vld [vmem:[%s832 + $0xc0] sm:$0xf]
        %v2048 = vld [vmem:[%s832 + $0xc4] sm:$0xf]
        %v2049 = vld [vmem:[%s832 + $0xc8] sm:$0xf]
        %v2050 = vld [vmem:[%s832 + $0xcc] sm:$0xf]
        %v2051 = vld [vmem:[%s832 + $0xd0] sm:$0xf]
        %v2052 = vld [vmem:[%s832 + $0xd4] sm:$0xf]
        %v2053 = vld [vmem:[%s832 + $0xd8] sm:$0xf]
        %v2054 = vld [vmem:[%s832 + $0xdc] sm:$0xf]
        %v2055 = vld [vmem:[%s832 + $0xe0] sm:$0xf]
        %v2056 = vld [vmem:[%s832 + $0xe4] sm:$0xf]
        %v2057 = vld [vmem:[%s832 + $0xe8] sm:$0xf]
        %v2058 = vld [vmem:[%s832 + $0xec] sm:$0xf]
        %v2059 = vld [vmem:[%s832 + $0xf0] sm:$0xf]
        %v2060 = vld [vmem:[%s832 + $0xf4] sm:$0xf]
        %v2061 = vld [vmem:[%s832 + $0xf8] sm:$0xf]
        %v2062 = vld [vmem:[%s832 + $0xfc] sm:$0xf]
        %s2063 = scalar_lea.vmem %s823, 64
        %v2064 = vld [vmem:[%s2063] sm:$0xff]
        %v2065 = vld [vmem:[%s2063 + $0x8] sm:$0xff]
        %v2066 = vld [vmem:[%s2063 + $0x10] sm:$0xff]
        %v2067 = vld [vmem:[%s2063 + $0x18] sm:$0xff]
        %v2068 = vld [vmem:[%s2063 + $0x20] sm:$0xff]
        %v2069 = vld [vmem:[%s2063 + $0x28] sm:$0xff]
        %v2070 = vld [vmem:[%s2063 + $0x30] sm:$0xff]
        %v2071 = vld [vmem:[%s2063 + $0x38] sm:$0xff]
        %s2072 = scalar_lea.vmem %s827, 4
        %v2073 = vld [vmem:[%s2072] sm:$0xf]
        %v2075 = vlaneseq
        %v2076 = vshrl.u32 %v2075, 7
        %v2077 = vsub.s32 0, %v2076
        %v2078 = vrot.slane %v2073, %v2077
        %v2079 = vlaneseq
        %v2080 = vshrl.u32 %v2079, 7
        %v2081 = vsub.s32 1, %v2080
        %v2082 = vrot.slane %v2073, %v2081
        %v2083 = vlaneseq
        %v2084 = vshrl.u32 %v2083, 7
        %v2085 = vsub.s32 2, %v2084
        %v2086 = vrot.slane %v2073, %v2085
        %v2087 = vlaneseq
        %v2088 = vshrl.u32 %v2087, 7
        %v2089 = vsub.s32 3, %v2088
        %v2090 = vrot.slane %v2073, %v2089
        %v2103 = vunpack.c.l.b16 %v2064
        %v2104 = vunpack.c.h.b16 %v2064
        %v2105 = vunpack.c.l.b16 %v2065
        %v2106 = vunpack.c.h.b16 %v2065
        %v2107 = vunpack.c.l.b16 %v2066
        %v2108 = vunpack.c.h.b16 %v2066
        %v2109 = vunpack.c.l.b16 %v2067
        %v2110 = vunpack.c.h.b16 %v2067
        %v2111 = vunpack.c.l.b16 %v2068
        %v2112 = vunpack.c.h.b16 %v2068
        %v2113 = vunpack.c.l.b16 %v2069
        %v2114 = vunpack.c.h.b16 %v2069
        %v2115 = vunpack.c.l.b16 %v2070
        %v2116 = vunpack.c.h.b16 %v2070
        %v2117 = vunpack.c.l.b16 %v2071
        %v2118 = vunpack.c.h.b16 %v2071
        %v2119 = vpack.c.b16 %v2107, %v2103
        %v2120 = vpack.c.b16 %v2108, %v2104
        %v2121 = vpack.c.b16 %v2109, %v2105
        %v2122 = vpack.c.b16 %v2110, %v2106
        %v2123 = vpack.c.b16 %v2115, %v2111
        %v2124 = vpack.c.b16 %v2116, %v2112
        %v2125 = vpack.c.b16 %v2117, %v2113
        %v2126 = vpack.c.b16 %v2118, %v2114
        %2135 = vmatprep.subr.bf16.mxu0 %v2120
        %2136 = vmatpush1.bf16.msra.mxu0 %v2119
        %2137 = vmatprep.subr.bf16.mxu0 %v2124
        %2138 = vmatpush1.bf16.msra.mxu0 %v2123
        %2139 = vmatprep.subr.bf16.mxu0 0
        %2140 = vmatpush1.bf16.msra.mxu0 0
        %2141 = vmatprep.subr.bf16.mxu0 0
        %2142 = vmatpush1.bf16.msra.mxu0 0
        %2143 = vmatprep.subr.bf16.mxu0 0
        %2144 = vmatpush1.bf16.msra.mxu0 0
        %2145 = vmatprep.subr.bf16.mxu0 0
        %2146 = vmatpush1.bf16.msra.mxu0 0
        %2147 = vmatprep.subr.bf16.mxu0 0
        %2148 = vmatpush1.bf16.msra.mxu0 0
        %2149 = vmatprep.subr.bf16.mxu0 0
        %2150 = vmatpush1.bf16.msra.mxu0 0
        %2151 = vmatprep.subr.bf16.mxu0 0
        %2152 = vmatpush1.bf16.msra.mxu0 0
        %2153 = vmatprep.subr.bf16.mxu0 0
        %2154 = vmatpush1.bf16.msra.mxu0 0
        %2155 = vmatprep.subr.bf16.mxu0 0
        %2156 = vmatpush1.bf16.msra.mxu0 0
        %2157 = vmatprep.subr.bf16.mxu0 0
        %2158 = vmatpush1.bf16.msra.mxu0 0
        %2159 = vmatprep.subr.bf16.mxu0 0
        %2160 = vmatpush1.bf16.msra.mxu0 0
        %2161 = vmatprep.subr.bf16.mxu0 0
        %2162 = vmatpush1.bf16.msra.mxu0 0
        %2163 = vmatprep.subr.bf16.mxu0 0
        %2164 = vmatpush1.bf16.msra.mxu0 0
        %2165 = vmatprep.subr.bf16.mxu0 0
        %2166 = vmatpush1.bf16.msra.mxu0 0
        %2167 = vmatprep.mubr.bf16.mxu0 0
        %2168 = vmatmul.mubr.bf16.gmra.mrb[0].mxu0 %v1899
        %v2169 = vpop.f32.mrb[0].mxu0
        %v2170 = vadd.f32 %v2078, %v2169
        %v2171 = vpop.f32.mrb[0].mxu0
        %v2172 = vadd.f32 %v2082, %v2171
        %v2173 = vpop.f32.mrb[0].mxu0
        %v2174 = vadd.f32 %v2078, %v2173
        %v2175 = vpop.f32.mrb[0].mxu0
        %v2176 = vadd.f32 %v2082, %v2175
        %2177 = vdwg.mxu0
        %2178 = vmatprep.subr.bf16.mxu0 %v2122
        %2179 = vmatpush1.bf16.msra.mxu0 %v2121
        %2180 = vmatprep.subr.bf16.mxu0 %v2126
        %2181 = vmatpush1.bf16.msra.mxu0 %v2125
        %2182 = vmatprep.subr.bf16.mxu0 0
        %2183 = vmatpush1.bf16.msra.mxu0 0
        %2184 = vmatprep.subr.bf16.mxu0 0
        %2185 = vmatpush1.bf16.msra.mxu0 0
        %2186 = vmatprep.subr.bf16.mxu0 0
        %2187 = vmatpush1.bf16.msra.mxu0 0
        %2188 = vmatprep.subr.bf16.mxu0 0
        %2189 = vmatpush1.bf16.msra.mxu0 0
        %2190 = vmatprep.subr.bf16.mxu0 0
        %2191 = vmatpush1.bf16.msra.mxu0 0
        %2192 = vmatprep.subr.bf16.mxu0 0
        %2193 = vmatpush1.bf16.msra.mxu0 0
        %2194 = vmatprep.subr.bf16.mxu0 0
        %2195 = vmatpush1.bf16.msra.mxu0 0
        %2196 = vmatprep.subr.bf16.mxu0 0
        %2197 = vmatpush1.bf16.msra.mxu0 0
        %2198 = vmatprep.subr.bf16.mxu0 0
        %2199 = vmatpush1.bf16.msra.mxu0 0
        %2200 = vmatprep.subr.bf16.mxu0 0
        %2201 = vmatpush1.bf16.msra.mxu0 0
        %2202 = vmatprep.subr.bf16.mxu0 0
        %2203 = vmatpush1.bf16.msra.mxu0 0
        %2204 = vmatprep.subr.bf16.mxu0 0
        %2205 = vmatpush1.bf16.msra.mxu0 0
        %2206 = vmatprep.subr.bf16.mxu0 0
        %2207 = vmatpush1.bf16.msra.mxu0 0
        %2208 = vmatprep.subr.bf16.mxu0 0
        %2209 = vmatpush1.bf16.msra.mxu0 0
        %2210 = vmatprep.mubr.bf16.mxu0 0
        %2211 = vmatmul.mubr.bf16.gmra.mrb[0].mxu0 %v1899
        %v2212 = vpop.f32.mrb[0].mxu0
        %v2213 = vadd.f32 %v2086, %v2212
        %v2214 = vpop.f32.mrb[0].mxu0
        %v2215 = vadd.f32 %v2090, %v2214
        %v2216 = vpop.f32.mrb[0].mxu0
        %v2217 = vadd.f32 %v2086, %v2216
        %v2218 = vpop.f32.mrb[0].mxu0
        %v2219 = vadd.f32 %v2090, %v2218
        %2220 = vdwg.mxu0
        %v2221 = vmax.f32 %v2170, 0.0
        %v2222 = vmax.f32 %v2172, 0.0
        %v2223 = vmax.f32 %v2213, 0.0
        %v2224 = vmax.f32 %v2215, 0.0
        %v2225 = vmax.f32 %v2174, 0.0
        %v2226 = vmax.f32 %v2176, 0.0
        %v2227 = vmax.f32 %v2217, 0.0
        %v2228 = vmax.f32 %v2219, 0.0
        %v2229 = vpack.c.bf16 %v2225, %v2221
        %v2230 = vpack.c.bf16 %v2226, %v2222
        %v2231 = vpack.c.bf16 %v2227, %v2223
        %v2232 = vpack.c.bf16 %v2228, %v2224
        %s2233 = scalar_lea.vmem %s832, 256
        %v2234 = vld [vmem:[%s2233] sm:$0xf]
        %v2235 = vld [vmem:[%s2233 + $0x4] sm:$0xf]
        %v2236 = vld [vmem:[%s2233 + $0x8] sm:$0xf]
        %v2237 = vld [vmem:[%s2233 + $0xc] sm:$0xf]
        %v2238 = vld [vmem:[%s2233 + $0x10] sm:$0xf]
        %v2239 = vld [vmem:[%s2233 + $0x14] sm:$0xf]
        %v2240 = vld [vmem:[%s2233 + $0x18] sm:$0xf]
        %v2241 = vld [vmem:[%s2233 + $0x1c] sm:$0xf]
        %v2242 = vld [vmem:[%s2233 + $0x20] sm:$0xf]
        %v2243 = vld [vmem:[%s2233 + $0x24] sm:$0xf]
        %v2244 = vld [vmem:[%s2233 + $0x28] sm:$0xf]
        %v2245 = vld [vmem:[%s2233 + $0x2c] sm:$0xf]
        %v2246 = vld [vmem:[%s2233 + $0x30] sm:$0xf]
        %v2247 = vld [vmem:[%s2233 + $0x34] sm:$0xf]
        %v2248 = vld [vmem:[%s2233 + $0x38] sm:$0xf]
        %v2249 = vld [vmem:[%s2233 + $0x3c] sm:$0xf]
        %v2250 = vld [vmem:[%s2233 + $0x40] sm:$0xf]
        %v2251 = vld [vmem:[%s2233 + $0x44] sm:$0xf]
        %v2252 = vld [vmem:[%s2233 + $0x48] sm:$0xf]
        %v2253 = vld [vmem:[%s2233 + $0x4c] sm:$0xf]
        %v2254 = vld [vmem:[%s2233 + $0x50] sm:$0xf]
        %v2255 = vld [vmem:[%s2233 + $0x54] sm:$0xf]
        %v2256 = vld [vmem:[%s2233 + $0x58] sm:$0xf]
        %v2257 = vld [vmem:[%s2233 + $0x5c] sm:$0xf]
        %v2258 = vld [vmem:[%s2233 + $0x60] sm:$0xf]
        %v2259 = vld [vmem:[%s2233 + $0x64] sm:$0xf]
        %v2260 = vld [vmem:[%s2233 + $0x68] sm:$0xf]
        %v2261 = vld [vmem:[%s2233 + $0x6c] sm:$0xf]
        %v2262 = vld [vmem:[%s2233 + $0x70] sm:$0xf]
        %v2263 = vld [vmem:[%s2233 + $0x74] sm:$0xf]
        %v2264 = vld [vmem:[%s2233 + $0x78] sm:$0xf]
        %v2265 = vld [vmem:[%s2233 + $0x7c] sm:$0xf]
        %v2266 = vld [vmem:[%s2233 + $0x80] sm:$0xf]
        %v2267 = vld [vmem:[%s2233 + $0x84] sm:$0xf]
        %v2268 = vld [vmem:[%s2233 + $0x88] sm:$0xf]
        %v2269 = vld [vmem:[%s2233 + $0x8c] sm:$0xf]
        %v2270 = vld [vmem:[%s2233 + $0x90] sm:$0xf]
        %v2271 = vld [vmem:[%s2233 + $0x94] sm:$0xf]
        %v2272 = vld [vmem:[%s2233 + $0x98] sm:$0xf]
        %v2273 = vld [vmem:[%s2233 + $0x9c] sm:$0xf]
        %v2274 = vld [vmem:[%s2233 + $0xa0] sm:$0xf]
        %v2275 = vld [vmem:[%s2233 + $0xa4] sm:$0xf]
        %v2276 = vld [vmem:[%s2233 + $0xa8] sm:$0xf]
        %v2277 = vld [vmem:[%s2233 + $0xac] sm:$0xf]
        %v2278 = vld [vmem:[%s2233 + $0xb0] sm:$0xf]
        %v2279 = vld [vmem:[%s2233 + $0xb4] sm:$0xf]
        %v2280 = vld [vmem:[%s2233 + $0xb8] sm:$0xf]
        %v2281 = vld [vmem:[%s2233 + $0xbc] sm:$0xf]
        %v2282 = vld [vmem:[%s2233 + $0xc0] sm:$0xf]
        %v2283 = vld [vmem:[%s2233 + $0xc4] sm:$0xf]
        %v2284 = vld [vmem:[%s2233 + $0xc8] sm:$0xf]
        %v2285 = vld [vmem:[%s2233 + $0xcc] sm:$0xf]
        %v2286 = vld [vmem:[%s2233 + $0xd0] sm:$0xf]
        %v2287 = vld [vmem:[%s2233 + $0xd4] sm:$0xf]
        %v2288 = vld [vmem:[%s2233 + $0xd8] sm:$0xf]
        %v2289 = vld [vmem:[%s2233 + $0xdc] sm:$0xf]
        %v2290 = vld [vmem:[%s2233 + $0xe0] sm:$0xf]
        %v2291 = vld [vmem:[%s2233 + $0xe4] sm:$0xf]
        %v2292 = vld [vmem:[%s2233 + $0xe8] sm:$0xf]
        %v2293 = vld [vmem:[%s2233 + $0xec] sm:$0xf]
        %v2294 = vld [vmem:[%s2233 + $0xf0] sm:$0xf]
        %v2295 = vld [vmem:[%s2233 + $0xf4] sm:$0xf]
        %v2296 = vld [vmem:[%s2233 + $0xf8] sm:$0xf]
        %v2297 = vld [vmem:[%s2233 + $0xfc] sm:$0xf]
        %v2362 = vunpack.c.l.b16 %v2234
        %v2363 = vunpack.c.l.b16 %v2235
        %v2364 = vunpack.c.l.b16 %v2236
        %v2365 = vunpack.c.l.b16 %v2237
        %v2366 = vunpack.c.l.b16 %v2238
        %v2367 = vunpack.c.l.b16 %v2239
        %v2368 = vunpack.c.l.b16 %v2240
        %v2369 = vunpack.c.l.b16 %v2241
        %v2370 = vunpack.c.l.b16 %v2242
        %v2371 = vunpack.c.l.b16 %v2243
        %v2372 = vunpack.c.l.b16 %v2244
        %v2373 = vunpack.c.l.b16 %v2245
        %v2374 = vunpack.c.l.b16 %v2246
        %v2375 = vunpack.c.l.b16 %v2247
        %v2376 = vunpack.c.l.b16 %v2248
        %v2377 = vunpack.c.l.b16 %v2249
        %v2378 = vunpack.c.l.b16 %v2250
        %v2379 = vunpack.c.l.b16 %v2251
        %v2380 = vunpack.c.l.b16 %v2252
        %v2381 = vunpack.c.l.b16 %v2253
        %v2382 = vunpack.c.l.b16 %v2254
        %v2383 = vunpack.c.l.b16 %v2255
        %v2384 = vunpack.c.l.b16 %v2256
        %v2385 = vunpack.c.l.b16 %v2257
        %v2386 = vunpack.c.l.b16 %v2258
        %v2387 = vunpack.c.l.b16 %v2259
        %v2388 = vunpack.c.l.b16 %v2260
        %v2389 = vunpack.c.l.b16 %v2261
        %v2390 = vunpack.c.l.b16 %v2262
        %v2391 = vunpack.c.l.b16 %v2263
        %v2392 = vunpack.c.l.b16 %v2264
        %v2393 = vunpack.c.l.b16 %v2265
        %v2394 = vunpack.c.l.b16 %v2266
        %v2395 = vunpack.c.l.b16 %v2267
        %v2396 = vunpack.c.l.b16 %v2268
        %v2397 = vunpack.c.l.b16 %v2269
        %v2398 = vunpack.c.l.b16 %v2270
        %v2399 = vunpack.c.l.b16 %v2271
        %v2400 = vunpack.c.l.b16 %v2272
        %v2401 = vunpack.c.l.b16 %v2273
        %v2402 = vunpack.c.l.b16 %v2274
        %v2403 = vunpack.c.l.b16 %v2275
        %v2404 = vunpack.c.l.b16 %v2276
        %v2405 = vunpack.c.l.b16 %v2277
        %v2406 = vunpack.c.l.b16 %v2278
        %v2407 = vunpack.c.l.b16 %v2279
        %v2408 = vunpack.c.l.b16 %v2280
        %v2409 = vunpack.c.l.b16 %v2281
        %v2410 = vunpack.c.l.b16 %v2282
        %v2411 = vunpack.c.l.b16 %v2283
        %v2412 = vunpack.c.l.b16 %v2284
        %v2413 = vunpack.c.l.b16 %v2285
        %v2414 = vunpack.c.l.b16 %v2286
        %v2415 = vunpack.c.l.b16 %v2287
        %v2416 = vunpack.c.l.b16 %v2288
        %v2417 = vunpack.c.l.b16 %v2289
        %v2418 = vunpack.c.l.b16 %v2290
        %v2419 = vunpack.c.l.b16 %v2291
        %v2420 = vunpack.c.l.b16 %v2292
        %v2421 = vunpack.c.l.b16 %v2293
        %v2422 = vunpack.c.l.b16 %v2294
        %v2423 = vunpack.c.l.b16 %v2295
        %v2424 = vunpack.c.l.b16 %v2296
        %v2425 = vunpack.c.l.b16 %v2297
        %v2426 = vpack.c.b16 %v2363, %v2362
        %v2427 = vpack.c.b16 %v2365, %v2364
        %v2428 = vpack.c.b16 %v2367, %v2366
        %v2429 = vpack.c.b16 %v2369, %v2368
        %v2430 = vpack.c.b16 %v2371, %v2370
        %v2431 = vpack.c.b16 %v2373, %v2372
        %v2432 = vpack.c.b16 %v2375, %v2374
        %v2433 = vpack.c.b16 %v2377, %v2376
        %v2434 = vpack.c.b16 %v2379, %v2378
        %v2435 = vpack.c.b16 %v2381, %v2380
        %v2436 = vpack.c.b16 %v2383, %v2382
        %v2437 = vpack.c.b16 %v2385, %v2384
        %v2438 = vpack.c.b16 %v2387, %v2386
        %v2439 = vpack.c.b16 %v2389, %v2388
        %v2440 = vpack.c.b16 %v2391, %v2390
        %v2441 = vpack.c.b16 %v2393, %v2392
        %v2442 = vpack.c.b16 %v2395, %v2394
        %v2443 = vpack.c.b16 %v2397, %v2396
        %v2444 = vpack.c.b16 %v2399, %v2398
        %v2445 = vpack.c.b16 %v2401, %v2400
        %v2446 = vpack.c.b16 %v2403, %v2402
        %v2447 = vpack.c.b16 %v2405, %v2404
        %v2448 = vpack.c.b16 %v2407, %v2406
        %v2449 = vpack.c.b16 %v2409, %v2408
        %v2450 = vpack.c.b16 %v2411, %v2410
        %v2451 = vpack.c.b16 %v2413, %v2412
        %v2452 = vpack.c.b16 %v2415, %v2414
        %v2453 = vpack.c.b16 %v2417, %v2416
        %v2454 = vpack.c.b16 %v2419, %v2418
        %v2455 = vpack.c.b16 %v2421, %v2420
        %v2456 = vpack.c.b16 %v2423, %v2422
        %v2457 = vpack.c.b16 %v2425, %v2424
        %2490 = vmatprep.subr.bf16.mxu0 0
        %2491 = vmatpush1.bf16.msra.mxu0 %v2426
        %2492 = vmatprep.subr.bf16.mxu0 0
        %2493 = vmatpush1.bf16.msra.mxu0 %v2427
        %2494 = vmatprep.subr.bf16.mxu0 0
        %2495 = vmatpush1.bf16.msra.mxu0 %v2428
        %2496 = vmatprep.subr.bf16.mxu0 0
        %2497 = vmatpush1.bf16.msra.mxu0 %v2429
        %2498 = vmatprep.subr.bf16.mxu0 0
        %2499 = vmatpush1.bf16.msra.mxu0 %v2430
        %2500 = vmatprep.subr.bf16.mxu0 0
        %2501 = vmatpush1.bf16.msra.mxu0 %v2431
        %2502 = vmatprep.subr.bf16.mxu0 0
        %2503 = vmatpush1.bf16.msra.mxu0 %v2432
        %2504 = vmatprep.subr.bf16.mxu0 0
        %2505 = vmatpush1.bf16.msra.mxu0 %v2433
        %2506 = vmatprep.subr.bf16.mxu0 0
        %2507 = vmatpush1.bf16.msra.mxu0 %v2434
        %2508 = vmatprep.subr.bf16.mxu0 0
        %2509 = vmatpush1.bf16.msra.mxu0 %v2435
        %2510 = vmatprep.subr.bf16.mxu0 0
        %2511 = vmatpush1.bf16.msra.mxu0 %v2436
        %2512 = vmatprep.subr.bf16.mxu0 0
        %2513 = vmatpush1.bf16.msra.mxu0 %v2437
        %2514 = vmatprep.subr.bf16.mxu0 0
        %2515 = vmatpush1.bf16.msra.mxu0 %v2438
        %2516 = vmatprep.subr.bf16.mxu0 0
        %2517 = vmatpush1.bf16.msra.mxu0 %v2439
        %2518 = vmatprep.subr.bf16.mxu0 0
        %2519 = vmatpush1.bf16.msra.mxu0 %v2440
        %2520 = vmatprep.subr.bf16.mxu0 0
        %2521 = vmatpush1.bf16.msra.mxu0 %v2441
        %2522 = vmatprep.mubr.bf16.mxu0 %v2230
        %2523 = vmatmul.mubr.bf16.gmra.mrb[0].mxu0 %v2229
        %v2524 = vpop.f32.mrb[0].mxu0
        %v2525 = vadd.f32 0.0, %v2524
        %v2526 = vpop.f32.mrb[0].mxu0
        %v2527 = vpop.f32.mrb[0].mxu0
        %v2528 = vadd.f32 0.0, %v2527
        %v2529 = vpop.f32.mrb[0].mxu0
        %2530 = vdwg.mxu0
        %2531 = vmatprep.subr.bf16.mxu0 0
        %2532 = vmatpush1.bf16.msra.mxu0 %v2442
        %2533 = vmatprep.subr.bf16.mxu0 0
        %2534 = vmatpush1.bf16.msra.mxu0 %v2443
        %2535 = vmatprep.subr.bf16.mxu0 0
        %2536 = vmatpush1.bf16.msra.mxu0 %v2444
        %2537 = vmatprep.subr.bf16.mxu0 0
        %2538 = vmatpush1.bf16.msra.mxu0 %v2445
        %2539 = vmatprep.subr.bf16.mxu0 0
        %2540 = vmatpush1.bf16.msra.mxu0 %v2446
        %2541 = vmatprep.subr.bf16.mxu0 0
        %2542 = vmatpush1.bf16.msra.mxu0 %v2447
        %2543 = vmatprep.subr.bf16.mxu0 0
        %2544 = vmatpush1.bf16.msra.mxu0 %v2448
        %2545 = vmatprep.subr.bf16.mxu0 0
        %2546 = vmatpush1.bf16.msra.mxu0 %v2449
        %2547 = vmatprep.subr.bf16.mxu0 0
        %2548 = vmatpush1.bf16.msra.mxu0 %v2450
        %2549 = vmatprep.subr.bf16.mxu0 0
        %2550 = vmatpush1.bf16.msra.mxu0 %v2451
        %2551 = vmatprep.subr.bf16.mxu0 0
        %2552 = vmatpush1.bf16.msra.mxu0 %v2452
        %2553 = vmatprep.subr.bf16.mxu0 0
        %2554 = vmatpush1.bf16.msra.mxu0 %v2453
        %2555 = vmatprep.subr.bf16.mxu0 0
        %2556 = vmatpush1.bf16.msra.mxu0 %v2454
        %2557 = vmatprep.subr.bf16.mxu0 0
        %2558 = vmatpush1.bf16.msra.mxu0 %v2455
        %2559 = vmatprep.subr.bf16.mxu0 0
        %2560 = vmatpush1.bf16.msra.mxu0 %v2456
        %2561 = vmatprep.subr.bf16.mxu0 0
        %2562 = vmatpush1.bf16.msra.mxu0 %v2457
        %2563 = vmatprep.mubr.bf16.mxu0 %v2232
        %2564 = vmatmul.mubr.bf16.gmra.mrb[0].mxu0 %v2231
        %v2565 = vpop.f32.mrb[0].mxu0
        %v2566 = vadd.f32 %v2525, %v2565
        %v2567 = vpop.f32.mrb[0].mxu0
        %v2568 = vpop.f32.mrb[0].mxu0
        %v2569 = vadd.f32 %v2528, %v2568
        %v2570 = vpop.f32.mrb[0].mxu0
        %2571 = vdwg.mxu0
        %v2636 = vunpack.c.l.b16 %v1999
        %v2637 = vunpack.c.l.b16 %v2000
        %v2638 = vunpack.c.l.b16 %v2001
        %v2639 = vunpack.c.l.b16 %v2002
        %v2640 = vunpack.c.l.b16 %v2003
        %v2641 = vunpack.c.l.b16 %v2004
        %v2642 = vunpack.c.l.b16 %v2005
        %v2643 = vunpack.c.l.b16 %v2006
        %v2644 = vunpack.c.l.b16 %v2007
        %v2645 = vunpack.c.l.b16 %v2008
        %v2646 = vunpack.c.l.b16 %v2009
        %v2647 = vunpack.c.l.b16 %v2010
        %v2648 = vunpack.c.l.b16 %v2011
        %v2649 = vunpack.c.l.b16 %v2012
        %v2650 = vunpack.c.l.b16 %v2013
        %v2651 = vunpack.c.l.b16 %v2014
        %v2652 = vunpack.c.l.b16 %v2015
        %v2653 = vunpack.c.l.b16 %v2016
        %v2654 = vunpack.c.l.b16 %v2017
        %v2655 = vunpack.c.l.b16 %v2018
        %v2656 = vunpack.c.l.b16 %v2019
        %v2657 = vunpack.c.l.b16 %v2020
        %v2658 = vunpack.c.l.b16 %v2021
        %v2659 = vunpack.c.l.b16 %v2022
        %v2660 = vunpack.c.l.b16 %v2023
        %v2661 = vunpack.c.l.b16 %v2024
        %v2662 = vunpack.c.l.b16 %v2025
        %v2663 = vunpack.c.l.b16 %v2026
        %v2664 = vunpack.c.l.b16 %v2027
        %v2665 = vunpack.c.l.b16 %v2028
        %v2666 = vunpack.c.l.b16 %v2029
        %v2667 = vunpack.c.l.b16 %v2030
        %v2668 = vunpack.c.l.b16 %v2031
        %v2669 = vunpack.c.l.b16 %v2032
        %v2670 = vunpack.c.l.b16 %v2033
        %v2671 = vunpack.c.l.b16 %v2034
        %v2672 = vunpack.c.l.b16 %v2035
        %v2673 = vunpack.c.l.b16 %v2036
        %v2674 = vunpack.c.l.b16 %v2037
        %v2675 = vunpack.c.l.b16 %v2038
        %v2676 = vunpack.c.l.b16 %v2039
        %v2677 = vunpack.c.l.b16 %v2040
        %v2678 = vunpack.c.l.b16 %v2041
        %v2679 = vunpack.c.l.b16 %v2042
        %v2680 = vunpack.c.l.b16 %v2043
        %v2681 = vunpack.c.l.b16 %v2044
        %v2682 = vunpack.c.l.b16 %v2045
        %v2683 = vunpack.c.l.b16 %v2046
        %v2684 = vunpack.c.l.b16 %v2047
        %v2685 = vunpack.c.l.b16 %v2048
        %v2686 = vunpack.c.l.b16 %v2049
        %v2687 = vunpack.c.l.b16 %v2050
        %v2688 = vunpack.c.l.b16 %v2051
        %v2689 = vunpack.c.l.b16 %v2052
        %v2690 = vunpack.c.l.b16 %v2053
        %v2691 = vunpack.c.l.b16 %v2054
        %v2692 = vunpack.c.l.b16 %v2055
        %v2693 = vunpack.c.l.b16 %v2056
        %v2694 = vunpack.c.l.b16 %v2057
        %v2695 = vunpack.c.l.b16 %v2058
        %v2696 = vunpack.c.l.b16 %v2059
        %v2697 = vunpack.c.l.b16 %v2060
        %v2698 = vunpack.c.l.b16 %v2061
        %v2699 = vunpack.c.l.b16 %v2062
        %v2700 = vpack.c.b16 %v2637, %v2636
        %v2701 = vpack.c.b16 %v2639, %v2638
        %v2702 = vpack.c.b16 %v2641, %v2640
        %v2703 = vpack.c.b16 %v2643, %v2642
        %v2704 = vpack.c.b16 %v2645, %v2644
        %v2705 = vpack.c.b16 %v2647, %v2646
        %v2706 = vpack.c.b16 %v2649, %v2648
        %v2707 = vpack.c.b16 %v2651, %v2650
        %v2708 = vpack.c.b16 %v2653, %v2652
        %v2709 = vpack.c.b16 %v2655, %v2654
        %v2710 = vpack.c.b16 %v2657, %v2656
        %v2711 = vpack.c.b16 %v2659, %v2658
        %v2712 = vpack.c.b16 %v2661, %v2660
        %v2713 = vpack.c.b16 %v2663, %v2662
        %v2714 = vpack.c.b16 %v2665, %v2664
        %v2715 = vpack.c.b16 %v2667, %v2666
        %v2716 = vpack.c.b16 %v2669, %v2668
        %v2717 = vpack.c.b16 %v2671, %v2670
        %v2718 = vpack.c.b16 %v2673, %v2672
        %v2719 = vpack.c.b16 %v2675, %v2674
        %v2720 = vpack.c.b16 %v2677, %v2676
        %v2721 = vpack.c.b16 %v2679, %v2678
        %v2722 = vpack.c.b16 %v2681, %v2680
        %v2723 = vpack.c.b16 %v2683, %v2682
        %v2724 = vpack.c.b16 %v2685, %v2684
        %v2725 = vpack.c.b16 %v2687, %v2686
        %v2726 = vpack.c.b16 %v2689, %v2688
        %v2727 = vpack.c.b16 %v2691, %v2690
        %v2728 = vpack.c.b16 %v2693, %v2692
        %v2729 = vpack.c.b16 %v2695, %v2694
        %v2730 = vpack.c.b16 %v2697, %v2696
        %v2731 = vpack.c.b16 %v2699, %v2698
        %2764 = vmatprep.subr.bf16.mxu0 0
        %2765 = vmatpush1.bf16.msra.mxu0 %v2700
        %2766 = vmatprep.subr.bf16.mxu0 0
        %2767 = vmatpush1.bf16.msra.mxu0 %v2701
        %2768 = vmatprep.subr.bf16.mxu0 0
        %2769 = vmatpush1.bf16.msra.mxu0 %v2702
        %2770 = vmatprep.subr.bf16.mxu0 0
        %2771 = vmatpush1.bf16.msra.mxu0 %v2703
        %2772 = vmatprep.subr.bf16.mxu0 0
        %2773 = vmatpush1.bf16.msra.mxu0 %v2704
        %2774 = vmatprep.subr.bf16.mxu0 0
        %2775 = vmatpush1.bf16.msra.mxu0 %v2705
        %2776 = vmatprep.subr.bf16.mxu0 0
        %2777 = vmatpush1.bf16.msra.mxu0 %v2706
        %2778 = vmatprep.subr.bf16.mxu0 0
        %2779 = vmatpush1.bf16.msra.mxu0 %v2707
        %2780 = vmatprep.subr.bf16.mxu0 0
        %2781 = vmatpush1.bf16.msra.mxu0 %v2708
        %2782 = vmatprep.subr.bf16.mxu0 0
        %2783 = vmatpush1.bf16.msra.mxu0 %v2709
        %2784 = vmatprep.subr.bf16.mxu0 0
        %2785 = vmatpush1.bf16.msra.mxu0 %v2710
        %2786 = vmatprep.subr.bf16.mxu0 0
        %2787 = vmatpush1.bf16.msra.mxu0 %v2711
        %2788 = vmatprep.subr.bf16.mxu0 0
        %2789 = vmatpush1.bf16.msra.mxu0 %v2712
        %2790 = vmatprep.subr.bf16.mxu0 0
        %2791 = vmatpush1.bf16.msra.mxu0 %v2713
        %2792 = vmatprep.subr.bf16.mxu0 0
        %2793 = vmatpush1.bf16.msra.mxu0 %v2714
        %2794 = vmatprep.subr.bf16.mxu0 0
        %2795 = vmatpush1.bf16.msra.mxu0 %v2715
        %2796 = vmatprep.mubr.bf16.mxu0 %v1996
        %2797 = vmatmul.mubr.bf16.gmra.mrb[0].mxu0 %v1995
        %v2798 = vpop.f32.mrb[0].mxu0
        %v2799 = vadd.f32 %v2566, %v2798
        %v2800 = vpop.f32.mrb[0].mxu0
        %v2801 = vpop.f32.mrb[0].mxu0
        %v2802 = vadd.f32 %v2569, %v2801
        %v2803 = vpop.f32.mrb[0].mxu0
        %2804 = vdwg.mxu0
        %2805 = vmatprep.subr.bf16.mxu0 0
        %2806 = vmatpush1.bf16.msra.mxu0 %v2716
        %2807 = vmatprep.subr.bf16.mxu0 0
        %2808 = vmatpush1.bf16.msra.mxu0 %v2717
        %2809 = vmatprep.subr.bf16.mxu0 0
        %2810 = vmatpush1.bf16.msra.mxu0 %v2718
        %2811 = vmatprep.subr.bf16.mxu0 0
        %2812 = vmatpush1.bf16.msra.mxu0 %v2719
        %2813 = vmatprep.subr.bf16.mxu0 0
        %2814 = vmatpush1.bf16.msra.mxu0 %v2720
        %2815 = vmatprep.subr.bf16.mxu0 0
        %2816 = vmatpush1.bf16.msra.mxu0 %v2721
        %2817 = vmatprep.subr.bf16.mxu0 0
        %2818 = vmatpush1.bf16.msra.mxu0 %v2722
        %2819 = vmatprep.subr.bf16.mxu0 0
        %2820 = vmatpush1.bf16.msra.mxu0 %v2723
        %2821 = vmatprep.subr.bf16.mxu0 0
        %2822 = vmatpush1.bf16.msra.mxu0 %v2724
        %2823 = vmatprep.subr.bf16.mxu0 0
        %2824 = vmatpush1.bf16.msra.mxu0 %v2725
        %2825 = vmatprep.subr.bf16.mxu0 0
        %2826 = vmatpush1.bf16.msra.mxu0 %v2726
        %2827 = vmatprep.subr.bf16.mxu0 0
        %2828 = vmatpush1.bf16.msra.mxu0 %v2727
        %2829 = vmatprep.subr.bf16.mxu0 0
        %2830 = vmatpush1.bf16.msra.mxu0 %v2728
        %2831 = vmatprep.subr.bf16.mxu0 0
        %2832 = vmatpush1.bf16.msra.mxu0 %v2729
        %2833 = vmatprep.subr.bf16.mxu0 0
        %2834 = vmatpush1.bf16.msra.mxu0 %v2730
        %2835 = vmatprep.subr.bf16.mxu0 0
        %2836 = vmatpush1.bf16.msra.mxu0 %v2731
        %2837 = vmatprep.mubr.bf16.mxu0 %v1998
        %2838 = vmatmul.mubr.bf16.gmra.mrb[0].mxu0 %v1997
        %v2839 = vpop.f32.mrb[0].mxu0
        %v2840 = vadd.f32 %v2799, %v2839
        %v2841 = vpop.f32.mrb[0].mxu0
        %v2842 = vpop.f32.mrb[0].mxu0
        %v2843 = vadd.f32 %v2802, %v2842
        %v2844 = vpop.f32.mrb[0].mxu0
        %2845 = vdwg.mxu0
        %s2846 = scalar_lea.vmem %s823, 128
        %v2847 = vld [vmem:[%s2846] sm:$0xff]
        %v2848 = vld [vmem:[%s2846 + $0x8] sm:$0xff]
        %v2849 = vld [vmem:[%s2846 + $0x10] sm:$0xff]
        %v2850 = vld [vmem:[%s2846 + $0x18] sm:$0xff]
        %v2851 = vld [vmem:[%s2846 + $0x20] sm:$0xff]
        %v2852 = vld [vmem:[%s2846 + $0x28] sm:$0xff]
        %v2853 = vld [vmem:[%s2846 + $0x30] sm:$0xff]
        %v2854 = vld [vmem:[%s2846 + $0x38] sm:$0xff]
        %s2855 = scalar_lea.vmem %s827, 8
        %v2856 = vld [vmem:[%s2855] sm:$0xf]
        %v2858 = vlaneseq
        %v2859 = vshrl.u32 %v2858, 7
        %v2860 = vsub.s32 0, %v2859
        %v2861 = vrot.slane %v2856, %v2860
        %v2862 = vlaneseq
        %v2863 = vshrl.u32 %v2862, 7
        %v2864 = vsub.s32 1, %v2863
        %v2865 = vrot.slane %v2856, %v2864
        %v2866 = vlaneseq
        %v2867 = vshrl.u32 %v2866, 7
        %v2868 = vsub.s32 2, %v2867
        %v2869 = vrot.slane %v2856, %v2868
        %v2870 = vlaneseq
        %v2871 = vshrl.u32 %v2870, 7
        %v2872 = vsub.s32 3, %v2871
        %v2873 = vrot.slane %v2856, %v2872
        %v2886 = vunpack.c.l.b16 %v2847
        %v2887 = vunpack.c.h.b16 %v2847
        %v2888 = vunpack.c.l.b16 %v2848
        %v2889 = vunpack.c.h.b16 %v2848
        %v2890 = vunpack.c.l.b16 %v2849
        %v2891 = vunpack.c.h.b16 %v2849
        %v2892 = vunpack.c.l.b16 %v2850
        %v2893 = vunpack.c.h.b16 %v2850
        %v2894 = vunpack.c.l.b16 %v2851
        %v2895 = vunpack.c.h.b16 %v2851
        %v2896 = vunpack.c.l.b16 %v2852
        %v2897 = vunpack.c.h.b16 %v2852
        %v2898 = vunpack.c.l.b16 %v2853
        %v2899 = vunpack.c.h.b16 %v2853
        %v2900 = vunpack.c.l.b16 %v2854
        %v2901 = vunpack.c.h.b16 %v2854
        %v2902 = vpack.c.b16 %v2890, %v2886
        %v2903 = vpack.c.b16 %v2891, %v2887
        %v2904 = vpack.c.b16 %v2892, %v2888
        %v2905 = vpack.c.b16 %v2893, %v2889
        %v2906 = vpack.c.b16 %v2898, %v2894
        %v2907 = vpack.c.b16 %v2899, %v2895
        %v2908 = vpack.c.b16 %v2900, %v2896
        %v2909 = vpack.c.b16 %v2901, %v2897
        %2918 = vmatprep.subr.bf16.mxu0 %v2903
        %2919 = vmatpush1.bf16.msra.mxu0 %v2902
        %2920 = vmatprep.subr.bf16.mxu0 %v2907
        %2921 = vmatpush1.bf16.msra.mxu0 %v2906
        %2922 = vmatprep.subr.bf16.mxu0 0
        %2923 = vmatpush1.bf16.msra.mxu0 0
        %2924 = vmatprep.subr.bf16.mxu0 0
        %2925 = vmatpush1.bf16.msra.mxu0 0
        %2926 = vmatprep.subr.bf16.mxu0 0
        %2927 = vmatpush1.bf16.msra.mxu0 0
        %2928 = vmatprep.subr.bf16.mxu0 0
        %2929 = vmatpush1.bf16.msra.mxu0 0
        %2930 = vmatprep.subr.bf16.mxu0 0
        %2931 = vmatpush1.bf16.msra.mxu0 0
        %2932 = vmatprep.subr.bf16.mxu0 0
        %2933 = vmatpush1.bf16.msra.mxu0 0
        %2934 = vmatprep.subr.bf16.mxu0 0
        %2935 = vmatpush1.bf16.msra.mxu0 0
        %2936 = vmatprep.subr.bf16.mxu0 0
        %2937 = vmatpush1.bf16.msra.mxu0 0
        %2938 = vmatprep.subr.bf16.mxu0 0
        %2939 = vmatpush1.bf16.msra.mxu0 0
        %2940 = vmatprep.subr.bf16.mxu0 0
        %2941 = vmatpush1.bf16.msra.mxu0 0
        %2942 = vmatprep.subr.bf16.mxu0 0
        %2943 = vmatpush1.bf16.msra.mxu0 0
        %2944 = vmatprep.subr.bf16.mxu0 0
        %2945 = vmatpush1.bf16.msra.mxu0 0
        %2946 = vmatprep.subr.bf16.mxu0 0
        %2947 = vmatpush1.bf16.msra.mxu0 0
        %2948 = vmatprep.subr.bf16.mxu0 0
        %2949 = vmatpush1.bf16.msra.mxu0 0
        %2950 = vmatprep.mubr.bf16.mxu0 0
        %2951 = vmatmul.mubr.bf16.gmra.mrb[0].mxu0 %v1899
        %v2952 = vpop.f32.mrb[0].mxu0
        %v2953 = vadd.f32 %v2861, %v2952
        %v2954 = vpop.f32.mrb[0].mxu0
        %v2955 = vadd.f32 %v2865, %v2954
        %v2956 = vpop.f32.mrb[0].mxu0
        %v2957 = vadd.f32 %v2861, %v2956
        %v2958 = vpop.f32.mrb[0].mxu0
        %v2959 = vadd.f32 %v2865, %v2958
        %2960 = vdwg.mxu0
        %2961 = vmatprep.subr.bf16.mxu0 %v2905
        %2962 = vmatpush1.bf16.msra.mxu0 %v2904
        %2963 = vmatprep.subr.bf16.mxu0 %v2909
        %2964 = vmatpush1.bf16.msra.mxu0 %v2908
        %2965 = vmatprep.subr.bf16.mxu0 0
        %2966 = vmatpush1.bf16.msra.mxu0 0
        %2967 = vmatprep.subr.bf16.mxu0 0
        %2968 = vmatpush1.bf16.msra.mxu0 0
        %2969 = vmatprep.subr.bf16.mxu0 0
        %2970 = vmatpush1.bf16.msra.mxu0 0
        %2971 = vmatprep.subr.bf16.mxu0 0
        %2972 = vmatpush1.bf16.msra.mxu0 0
        %2973 = vmatprep.subr.bf16.mxu0 0
        %2974 = vmatpush1.bf16.msra.mxu0 0
        %2975 = vmatprep.subr.bf16.mxu0 0
        %2976 = vmatpush1.bf16.msra.mxu0 0
        %2977 = vmatprep.subr.bf16.mxu0 0
        %2978 = vmatpush1.bf16.msra.mxu0 0
        %2979 = vmatprep.subr.bf16.mxu0 0
        %2980 = vmatpush1.bf16.msra.mxu0 0
        %2981 = vmatprep.subr.bf16.mxu0 0
        %2982 = vmatpush1.bf16.msra.mxu0 0
        %2983 = vmatprep.subr.bf16.mxu0 0
        %2984 = vmatpush1.bf16.msra.mxu0 0
        %2985 = vmatprep.subr.bf16.mxu0 0
        %2986 = vmatpush1.bf16.msra.mxu0 0
        %2987 = vmatprep.subr.bf16.mxu0 0
        %2988 = vmatpush1.bf16.msra.mxu0 0
        %2989 = vmatprep.subr.bf16.mxu0 0
        %2990 = vmatpush1.bf16.msra.mxu0 0
        %2991 = vmatprep.subr.bf16.mxu0 0
        %2992 = vmatpush1.bf16.msra.mxu0 0
        %2993 = vmatprep.mubr.bf16.mxu0 0
        %2994 = vmatmul.mubr.bf16.gmra.mrb[0].mxu0 %v1899
        %v2995 = vpop.f32.mrb[0].mxu0
        %v2996 = vadd.f32 %v2869, %v2995
        %v2997 = vpop.f32.mrb[0].mxu0
        %v2998 = vadd.f32 %v2873, %v2997
        %v2999 = vpop.f32.mrb[0].mxu0
        %v3000 = vadd.f32 %v2869, %v2999
        %v3001 = vpop.f32.mrb[0].mxu0
        %v3002 = vadd.f32 %v2873, %v3001
        %3003 = vdwg.mxu0
        %v3004 = vmax.f32 %v2953, 0.0
        %v3005 = vmax.f32 %v2955, 0.0
        %v3006 = vmax.f32 %v2996, 0.0
        %v3007 = vmax.f32 %v2998, 0.0
        %v3008 = vmax.f32 %v2957, 0.0
        %v3009 = vmax.f32 %v2959, 0.0
        %v3010 = vmax.f32 %v3000, 0.0
        %v3011 = vmax.f32 %v3002, 0.0
        %v3012 = vpack.c.bf16 %v3008, %v3004
        %v3013 = vpack.c.bf16 %v3009, %v3005
        %v3014 = vpack.c.bf16 %v3010, %v3006
        %v3015 = vpack.c.bf16 %v3011, %v3007
        %s3016 = scalar_lea.vmem %s832, 512
        %v3017 = vld [vmem:[%s3016] sm:$0xf]
        %v3018 = vld [vmem:[%s3016 + $0x4] sm:$0xf]
        %v3019 = vld [vmem:[%s3016 + $0x8] sm:$0xf]
        %v3020 = vld [vmem:[%s3016 + $0xc] sm:$0xf]
        %v3021 = vld [vmem:[%s3016 + $0x10] sm:$0xf]
        %v3022 = vld [vmem:[%s3016 + $0x14] sm:$0xf]
        %v3023 = vld [vmem:[%s3016 + $0x18] sm:$0xf]
        %v3024 = vld [vmem:[%s3016 + $0x1c] sm:$0xf]
        %v3025 = vld [vmem:[%s3016 + $0x20] sm:$0xf]
        %v3026 = vld [vmem:[%s3016 + $0x24] sm:$0xf]
        %v3027 = vld [vmem:[%s3016 + $0x28] sm:$0xf]
        %v3028 = vld [vmem:[%s3016 + $0x2c] sm:$0xf]
        %v3029 = vld [vmem:[%s3016 + $0x30] sm:$0xf]
        %v3030 = vld [vmem:[%s3016 + $0x34] sm:$0xf]
        %v3031 = vld [vmem:[%s3016 + $0x38] sm:$0xf]
        %v3032 = vld [vmem:[%s3016 + $0x3c] sm:$0xf]
        %v3033 = vld [vmem:[%s3016 + $0x40] sm:$0xf]
        %v3034 = vld [vmem:[%s3016 + $0x44] sm:$0xf]
        %v3035 = vld [vmem:[%s3016 + $0x48] sm:$0xf]
        %v3036 = vld [vmem:[%s3016 + $0x4c] sm:$0xf]
        %v3037 = vld [vmem:[%s3016 + $0x50] sm:$0xf]
        %v3038 = vld [vmem:[%s3016 + $0x54] sm:$0xf]
        %v3039 = vld [vmem:[%s3016 + $0x58] sm:$0xf]
        %v3040 = vld [vmem:[%s3016 + $0x5c] sm:$0xf]
        %v3041 = vld [vmem:[%s3016 + $0x60] sm:$0xf]
        %v3042 = vld [vmem:[%s3016 + $0x64] sm:$0xf]
        %v3043 = vld [vmem:[%s3016 + $0x68] sm:$0xf]
        %v3044 = vld [vmem:[%s3016 + $0x6c] sm:$0xf]
        %v3045 = vld [vmem:[%s3016 + $0x70] sm:$0xf]
        %v3046 = vld [vmem:[%s3016 + $0x74] sm:$0xf]
        %v3047 = vld [vmem:[%s3016 + $0x78] sm:$0xf]
        %v3048 = vld [vmem:[%s3016 + $0x7c] sm:$0xf]
        %v3049 = vld [vmem:[%s3016 + $0x80] sm:$0xf]
        %v3050 = vld [vmem:[%s3016 + $0x84] sm:$0xf]
        %v3051 = vld [vmem:[%s3016 + $0x88] sm:$0xf]
        %v3052 = vld [vmem:[%s3016 + $0x8c] sm:$0xf]
        %v3053 = vld [vmem:[%s3016 + $0x90] sm:$0xf]
        %v3054 = vld [vmem:[%s3016 + $0x94] sm:$0xf]
        %v3055 = vld [vmem:[%s3016 + $0x98] sm:$0xf]
        %v3056 = vld [vmem:[%s3016 + $0x9c] sm:$0xf]
        %v3057 = vld [vmem:[%s3016 + $0xa0] sm:$0xf]
        %v3058 = vld [vmem:[%s3016 + $0xa4] sm:$0xf]
        %v3059 = vld [vmem:[%s3016 + $0xa8] sm:$0xf]
        %v3060 = vld [vmem:[%s3016 + $0xac] sm:$0xf]
        %v3061 = vld [vmem:[%s3016 + $0xb0] sm:$0xf]
        %v3062 = vld [vmem:[%s3016 + $0xb4] sm:$0xf]
        %v3063 = vld [vmem:[%s3016 + $0xb8] sm:$0xf]
        %v3064 = vld [vmem:[%s3016 + $0xbc] sm:$0xf]
        %v3065 = vld [vmem:[%s3016 + $0xc0] sm:$0xf]
        %v3066 = vld [vmem:[%s3016 + $0xc4] sm:$0xf]
        %v3067 = vld [vmem:[%s3016 + $0xc8] sm:$0xf]
        %v3068 = vld [vmem:[%s3016 + $0xcc] sm:$0xf]
        %v3069 = vld [vmem:[%s3016 + $0xd0] sm:$0xf]
        %v3070 = vld [vmem:[%s3016 + $0xd4] sm:$0xf]
        %v3071 = vld [vmem:[%s3016 + $0xd8] sm:$0xf]
        %v3072 = vld [vmem:[%s3016 + $0xdc] sm:$0xf]
        %v3073 = vld [vmem:[%s3016 + $0xe0] sm:$0xf]
        %v3074 = vld [vmem:[%s3016 + $0xe4] sm:$0xf]
        %v3075 = vld [vmem:[%s3016 + $0xe8] sm:$0xf]
        %v3076 = vld [vmem:[%s3016 + $0xec] sm:$0xf]
        %v3077 = vld [vmem:[%s3016 + $0xf0] sm:$0xf]
        %v3078 = vld [vmem:[%s3016 + $0xf4] sm:$0xf]
        %v3079 = vld [vmem:[%s3016 + $0xf8] sm:$0xf]
        %v3080 = vld [vmem:[%s3016 + $0xfc] sm:$0xf]
        %v3145 = vunpack.c.l.b16 %v3017
        %v3146 = vunpack.c.l.b16 %v3018
        %v3147 = vunpack.c.l.b16 %v3019
        %v3148 = vunpack.c.l.b16 %v3020
        %v3149 = vunpack.c.l.b16 %v3021
        %v3150 = vunpack.c.l.b16 %v3022
        %v3151 = vunpack.c.l.b16 %v3023
        %v3152 = vunpack.c.l.b16 %v3024
        %v3153 = vunpack.c.l.b16 %v3025
        %v3154 = vunpack.c.l.b16 %v3026
        %v3155 = vunpack.c.l.b16 %v3027
        %v3156 = vunpack.c.l.b16 %v3028
        %v3157 = vunpack.c.l.b16 %v3029
        %v3158 = vunpack.c.l.b16 %v3030
        %v3159 = vunpack.c.l.b16 %v3031
        %v3160 = vunpack.c.l.b16 %v3032
        %v3161 = vunpack.c.l.b16 %v3033
        %v3162 = vunpack.c.l.b16 %v3034
        %v3163 = vunpack.c.l.b16 %v3035
        %v3164 = vunpack.c.l.b16 %v3036
        %v3165 = vunpack.c.l.b16 %v3037
        %v3166 = vunpack.c.l.b16 %v3038
        %v3167 = vunpack.c.l.b16 %v3039
        %v3168 = vunpack.c.l.b16 %v3040
        %v3169 = vunpack.c.l.b16 %v3041
        %v3170 = vunpack.c.l.b16 %v3042
        %v3171 = vunpack.c.l.b16 %v3043
        %v3172 = vunpack.c.l.b16 %v3044
        %v3173 = vunpack.c.l.b16 %v3045
        %v3174 = vunpack.c.l.b16 %v3046
        %v3175 = vunpack.c.l.b16 %v3047
        %v3176 = vunpack.c.l.b16 %v3048
        %v3177 = vunpack.c.l.b16 %v3049
        %v3178 = vunpack.c.l.b16 %v3050
        %v3179 = vunpack.c.l.b16 %v3051
        %v3180 = vunpack.c.l.b16 %v3052
        %v3181 = vunpack.c.l.b16 %v3053
        %v3182 = vunpack.c.l.b16 %v3054
        %v3183 = vunpack.c.l.b16 %v3055
        %v3184 = vunpack.c.l.b16 %v3056
        %v3185 = vunpack.c.l.b16 %v3057
        %v3186 = vunpack.c.l.b16 %v3058
        %v3187 = vunpack.c.l.b16 %v3059
        %v3188 = vunpack.c.l.b16 %v3060
        %v3189 = vunpack.c.l.b16 %v3061
        %v3190 = vunpack.c.l.b16 %v3062
        %v3191 = vunpack.c.l.b16 %v3063
        %v3192 = vunpack.c.l.b16 %v3064
        %v3193 = vunpack.c.l.b16 %v3065
        %v3194 = vunpack.c.l.b16 %v3066
        %v3195 = vunpack.c.l.b16 %v3067
        %v3196 = vunpack.c.l.b16 %v3068
        %v3197 = vunpack.c.l.b16 %v3069
        %v3198 = vunpack.c.l.b16 %v3070
        %v3199 = vunpack.c.l.b16 %v3071
        %v3200 = vunpack.c.l.b16 %v3072
        %v3201 = vunpack.c.l.b16 %v3073
        %v3202 = vunpack.c.l.b16 %v3074
        %v3203 = vunpack.c.l.b16 %v3075
        %v3204 = vunpack.c.l.b16 %v3076
        %v3205 = vunpack.c.l.b16 %v3077
        %v3206 = vunpack.c.l.b16 %v3078
        %v3207 = vunpack.c.l.b16 %v3079
        %v3208 = vunpack.c.l.b16 %v3080
        %v3209 = vpack.c.b16 %v3146, %v3145
        %v3210 = vpack.c.b16 %v3148, %v3147
        %v3211 = vpack.c.b16 %v3150, %v3149
        %v3212 = vpack.c.b16 %v3152, %v3151
        %v3213 = vpack.c.b16 %v3154, %v3153
        %v3214 = vpack.c.b16 %v3156, %v3155
        %v3215 = vpack.c.b16 %v3158, %v3157
        %v3216 = vpack.c.b16 %v3160, %v3159
        %v3217 = vpack.c.b16 %v3162, %v3161
        %v3218 = vpack.c.b16 %v3164, %v3163
        %v3219 = vpack.c.b16 %v3166, %v3165
        %v3220 = vpack.c.b16 %v3168, %v3167
        %v3221 = vpack.c.b16 %v3170, %v3169
        %v3222 = vpack.c.b16 %v3172, %v3171
        %v3223 = vpack.c.b16 %v3174, %v3173
        %v3224 = vpack.c.b16 %v3176, %v3175
        %v3225 = vpack.c.b16 %v3178, %v3177
        %v3226 = vpack.c.b16 %v3180, %v3179
        %v3227 = vpack.c.b16 %v3182, %v3181
        %v3228 = vpack.c.b16 %v3184, %v3183
        %v3229 = vpack.c.b16 %v3186, %v3185
        %v3230 = vpack.c.b16 %v3188, %v3187
        %v3231 = vpack.c.b16 %v3190, %v3189
        %v3232 = vpack.c.b16 %v3192, %v3191
        %v3233 = vpack.c.b16 %v3194, %v3193
        %v3234 = vpack.c.b16 %v3196, %v3195
        %v3235 = vpack.c.b16 %v3198, %v3197
        %v3236 = vpack.c.b16 %v3200, %v3199
        %v3237 = vpack.c.b16 %v3202, %v3201
        %v3238 = vpack.c.b16 %v3204, %v3203
        %v3239 = vpack.c.b16 %v3206, %v3205
        %v3240 = vpack.c.b16 %v3208, %v3207
        %3273 = vmatprep.subr.bf16.mxu0 0
        %3274 = vmatpush1.bf16.msra.mxu0 %v3209
        %3275 = vmatprep.subr.bf16.mxu0 0
        %3276 = vmatpush1.bf16.msra.mxu0 %v3210
        %3277 = vmatprep.subr.bf16.mxu0 0
        %3278 = vmatpush1.bf16.msra.mxu0 %v3211
        %3279 = vmatprep.subr.bf16.mxu0 0
        %3280 = vmatpush1.bf16.msra.mxu0 %v3212
        %3281 = vmatprep.subr.bf16.mxu0 0
        %3282 = vmatpush1.bf16.msra.mxu0 %v3213
        %3283 = vmatprep.subr.bf16.mxu0 0
        %3284 = vmatpush1.bf16.msra.mxu0 %v3214
        %3285 = vmatprep.subr.bf16.mxu0 0
        %3286 = vmatpush1.bf16.msra.mxu0 %v3215
        %3287 = vmatprep.subr.bf16.mxu0 0
        %3288 = vmatpush1.bf16.msra.mxu0 %v3216
        %3289 = vmatprep.subr.bf16.mxu0 0
        %3290 = vmatpush1.bf16.msra.mxu0 %v3217
        %3291 = vmatprep.subr.bf16.mxu0 0
        %3292 = vmatpush1.bf16.msra.mxu0 %v3218
        %3293 = vmatprep.subr.bf16.mxu0 0
        %3294 = vmatpush1.bf16.msra.mxu0 %v3219
        %3295 = vmatprep.subr.bf16.mxu0 0
        %3296 = vmatpush1.bf16.msra.mxu0 %v3220
        %3297 = vmatprep.subr.bf16.mxu0 0
        %3298 = vmatpush1.bf16.msra.mxu0 %v3221
        %3299 = vmatprep.subr.bf16.mxu0 0
        %3300 = vmatpush1.bf16.msra.mxu0 %v3222
        %3301 = vmatprep.subr.bf16.mxu0 0
        %3302 = vmatpush1.bf16.msra.mxu0 %v3223
        %3303 = vmatprep.subr.bf16.mxu0 0
        %3304 = vmatpush1.bf16.msra.mxu0 %v3224
        %3305 = vmatprep.mubr.bf16.mxu0 %v3013
        %3306 = vmatmul.mubr.bf16.gmra.mrb[0].mxu0 %v3012
        %v3307 = vpop.f32.mrb[0].mxu0
        %v3308 = vadd.f32 0.0, %v3307
        %v3309 = vpop.f32.mrb[0].mxu0
        %v3310 = vpop.f32.mrb[0].mxu0
        %v3311 = vadd.f32 0.0, %v3310
        %v3312 = vpop.f32.mrb[0].mxu0
        %3313 = vdwg.mxu0
        %3314 = vmatprep.subr.bf16.mxu0 0
        %3315 = vmatpush1.bf16.msra.mxu0 %v3225
        %3316 = vmatprep.subr.bf16.mxu0 0
        %3317 = vmatpush1.bf16.msra.mxu0 %v3226
        %3318 = vmatprep.subr.bf16.mxu0 0
        %3319 = vmatpush1.bf16.msra.mxu0 %v3227
        %3320 = vmatprep.subr.bf16.mxu0 0
        %3321 = vmatpush1.bf16.msra.mxu0 %v3228
        %3322 = vmatprep.subr.bf16.mxu0 0
        %3323 = vmatpush1.bf16.msra.mxu0 %v3229
        %3324 = vmatprep.subr.bf16.mxu0 0
        %3325 = vmatpush1.bf16.msra.mxu0 %v3230
        %3326 = vmatprep.subr.bf16.mxu0 0
        %3327 = vmatpush1.bf16.msra.mxu0 %v3231
        %3328 = vmatprep.subr.bf16.mxu0 0
        %3329 = vmatpush1.bf16.msra.mxu0 %v3232
        %3330 = vmatprep.subr.bf16.mxu0 0
        %3331 = vmatpush1.bf16.msra.mxu0 %v3233
        %3332 = vmatprep.subr.bf16.mxu0 0
        %3333 = vmatpush1.bf16.msra.mxu0 %v3234
        %3334 = vmatprep.subr.bf16.mxu0 0
        %3335 = vmatpush1.bf16.msra.mxu0 %v3235
        %3336 = vmatprep.subr.bf16.mxu0 0
        %3337 = vmatpush1.bf16.msra.mxu0 %v3236
        %3338 = vmatprep.subr.bf16.mxu0 0
        %3339 = vmatpush1.bf16.msra.mxu0 %v3237
        %3340 = vmatprep.subr.bf16.mxu0 0
        %3341 = vmatpush1.bf16.msra.mxu0 %v3238
        %3342 = vmatprep.subr.bf16.mxu0 0
        %3343 = vmatpush1.bf16.msra.mxu0 %v3239
        %3344 = vmatprep.subr.bf16.mxu0 0
        %3345 = vmatpush1.bf16.msra.mxu0 %v3240
        %3346 = vmatprep.mubr.bf16.mxu0 %v3015
        %3347 = vmatmul.mubr.bf16.gmra.mrb[0].mxu0 %v3014
        %v3348 = vpop.f32.mrb[0].mxu0
        %v3349 = vadd.f32 %v3308, %v3348
        %v3350 = vpop.f32.mrb[0].mxu0
        %v3351 = vpop.f32.mrb[0].mxu0
        %v3352 = vadd.f32 %v3311, %v3351
        %v3353 = vpop.f32.mrb[0].mxu0
        %3354 = vdwg.mxu0
        %v3355 = vadd.f32 %v2840, %v3349
        %v3356 = vadd.f32 %v2843, %v3352
        %s3357 = scalar_lea.vmem %s823, 192
        %v3358 = vld [vmem:[%s3357] sm:$0xff]
        %v3359 = vld [vmem:[%s3357 + $0x8] sm:$0xff]
        %v3360 = vld [vmem:[%s3357 + $0x10] sm:$0xff]
        %v3361 = vld [vmem:[%s3357 + $0x18] sm:$0xff]
        %v3362 = vld [vmem:[%s3357 + $0x20] sm:$0xff]
        %v3363 = vld [vmem:[%s3357 + $0x28] sm:$0xff]
        %v3364 = vld [vmem:[%s3357 + $0x30] sm:$0xff]
        %v3365 = vld [vmem:[%s3357 + $0x38] sm:$0xff]
        %s3366 = scalar_lea.vmem %s827, 12
        %v3367 = vld [vmem:[%s3366] sm:$0xf]
        %v3369 = vlaneseq
        %v3370 = vshrl.u32 %v3369, 7
        %v3371 = vsub.s32 0, %v3370
        %v3372 = vrot.slane %v3367, %v3371
        %v3373 = vlaneseq
        %v3374 = vshrl.u32 %v3373, 7
        %v3375 = vsub.s32 1, %v3374
        %v3376 = vrot.slane %v3367, %v3375
        %v3377 = vlaneseq
        %v3378 = vshrl.u32 %v3377, 7
        %v3379 = vsub.s32 2, %v3378
        %v3380 = vrot.slane %v3367, %v3379
        %v3381 = vlaneseq
        %v3382 = vshrl.u32 %v3381, 7
        %v3383 = vsub.s32 3, %v3382
        %v3384 = vrot.slane %v3367, %v3383
        %v3397 = vunpack.c.l.b16 %v3358
        %v3398 = vunpack.c.h.b16 %v3358
        %v3399 = vunpack.c.l.b16 %v3359
        %v3400 = vunpack.c.h.b16 %v3359
        %v3401 = vunpack.c.l.b16 %v3360
        %v3402 = vunpack.c.h.b16 %v3360
        %v3403 = vunpack.c.l.b16 %v3361
        %v3404 = vunpack.c.h.b16 %v3361
        %v3405 = vunpack.c.l.b16 %v3362
        %v3406 = vunpack.c.h.b16 %v3362
        %v3407 = vunpack.c.l.b16 %v3363
        %v3408 = vunpack.c.h.b16 %v3363
        %v3409 = vunpack.c.l.b16 %v3364
        %v3410 = vunpack.c.h.b16 %v3364
        %v3411 = vunpack.c.l.b16 %v3365
        %v3412 = vunpack.c.h.b16 %v3365
        %v3413 = vpack.c.b16 %v3401, %v3397
        %v3414 = vpack.c.b16 %v3402, %v3398
        %v3415 = vpack.c.b16 %v3403, %v3399
        %v3416 = vpack.c.b16 %v3404, %v3400
        %v3417 = vpack.c.b16 %v3409, %v3405
        %v3418 = vpack.c.b16 %v3410, %v3406
        %v3419 = vpack.c.b16 %v3411, %v3407
        %v3420 = vpack.c.b16 %v3412, %v3408
        %3429 = vmatprep.subr.bf16.mxu0 %v3414
        %3430 = vmatpush1.bf16.msra.mxu0 %v3413
        %3431 = vmatprep.subr.bf16.mxu0 %v3418
        %3432 = vmatpush1.bf16.msra.mxu0 %v3417
        %3433 = vmatprep.subr.bf16.mxu0 0
        %3434 = vmatpush1.bf16.msra.mxu0 0
        %3435 = vmatprep.subr.bf16.mxu0 0
        %3436 = vmatpush1.bf16.msra.mxu0 0
        %3437 = vmatprep.subr.bf16.mxu0 0
        %3438 = vmatpush1.bf16.msra.mxu0 0
        %3439 = vmatprep.subr.bf16.mxu0 0
        %3440 = vmatpush1.bf16.msra.mxu0 0
        %3441 = vmatprep.subr.bf16.mxu0 0
        %3442 = vmatpush1.bf16.msra.mxu0 0
        %3443 = vmatprep.subr.bf16.mxu0 0
        %3444 = vmatpush1.bf16.msra.mxu0 0
        %3445 = vmatprep.subr.bf16.mxu0 0
        %3446 = vmatpush1.bf16.msra.mxu0 0
        %3447 = vmatprep.subr.bf16.mxu0 0
        %3448 = vmatpush1.bf16.msra.mxu0 0
        %3449 = vmatprep.subr.bf16.mxu0 0
        %3450 = vmatpush1.bf16.msra.mxu0 0
        %3451 = vmatprep.subr.bf16.mxu0 0
        %3452 = vmatpush1.bf16.msra.mxu0 0
        %3453 = vmatprep.subr.bf16.mxu0 0
        %3454 = vmatpush1.bf16.msra.mxu0 0
        %3455 = vmatprep.subr.bf16.mxu0 0
        %3456 = vmatpush1.bf16.msra.mxu0 0
        %3457 = vmatprep.subr.bf16.mxu0 0
        %3458 = vmatpush1.bf16.msra.mxu0 0
        %3459 = vmatprep.subr.bf16.mxu0 0
        %3460 = vmatpush1.bf16.msra.mxu0 0
        %3461 = vmatprep.mubr.bf16.mxu0 0
        %3462 = vmatmul.mubr.bf16.gmra.mrb[0].mxu0 %v1899
        %v3463 = vpop.f32.mrb[0].mxu0
        %v3464 = vadd.f32 %v3372, %v3463
        %v3465 = vpop.f32.mrb[0].mxu0
        %v3466 = vadd.f32 %v3376, %v3465
        %v3467 = vpop.f32.mrb[0].mxu0
        %v3468 = vadd.f32 %v3372, %v3467
        %v3469 = vpop.f32.mrb[0].mxu0
        %v3470 = vadd.f32 %v3376, %v3469
        %3471 = vdwg.mxu0
        %3472 = vmatprep.subr.bf16.mxu0 %v3416
        %3473 = vmatpush1.bf16.msra.mxu0 %v3415
        %3474 = vmatprep.subr.bf16.mxu0 %v3420
        %3475 = vmatpush1.bf16.msra.mxu0 %v3419
        %3476 = vmatprep.subr.bf16.mxu0 0
        %3477 = vmatpush1.bf16.msra.mxu0 0
        %3478 = vmatprep.subr.bf16.mxu0 0
        %3479 = vmatpush1.bf16.msra.mxu0 0
        %3480 = vmatprep.subr.bf16.mxu0 0
        %3481 = vmatpush1.bf16.msra.mxu0 0
        %3482 = vmatprep.subr.bf16.mxu0 0
        %3483 = vmatpush1.bf16.msra.mxu0 0
        %3484 = vmatprep.subr.bf16.mxu0 0
        %3485 = vmatpush1.bf16.msra.mxu0 0
        %3486 = vmatprep.subr.bf16.mxu0 0
        %3487 = vmatpush1.bf16.msra.mxu0 0
        %3488 = vmatprep.subr.bf16.mxu0 0
        %3489 = vmatpush1.bf16.msra.mxu0 0
        %3490 = vmatprep.subr.bf16.mxu0 0
        %3491 = vmatpush1.bf16.msra.mxu0 0
        %3492 = vmatprep.subr.bf16.mxu0 0
        %3493 = vmatpush1.bf16.msra.mxu0 0
        %3494 = vmatprep.subr.bf16.mxu0 0
        %3495 = vmatpush1.bf16.msra.mxu0 0
        %3496 = vmatprep.subr.bf16.mxu0 0
        %3497 = vmatpush1.bf16.msra.mxu0 0
        %3498 = vmatprep.subr.bf16.mxu0 0
        %3499 = vmatpush1.bf16.msra.mxu0 0
        %3500 = vmatprep.subr.bf16.mxu0 0
        %3501 = vmatpush1.bf16.msra.mxu0 0
        %3502 = vmatprep.subr.bf16.mxu0 0
        %3503 = vmatpush1.bf16.msra.mxu0 0
        %3504 = vmatprep.mubr.bf16.mxu0 0
        %3505 = vmatmul.mubr.bf16.gmra.mrb[0].mxu0 %v1899
        %v3506 = vpop.f32.mrb[0].mxu0
        %v3507 = vadd.f32 %v3380, %v3506
        %v3508 = vpop.f32.mrb[0].mxu0
        %v3509 = vadd.f32 %v3384, %v3508
        %v3510 = vpop.f32.mrb[0].mxu0
        %v3511 = vadd.f32 %v3380, %v3510
        %v3512 = vpop.f32.mrb[0].mxu0
        %v3513 = vadd.f32 %v3384, %v3512
        %3514 = vdwg.mxu0
        %v3515 = vmax.f32 %v3464, 0.0
        %v3516 = vmax.f32 %v3466, 0.0
        %v3517 = vmax.f32 %v3507, 0.0
        %v3518 = vmax.f32 %v3509, 0.0
        %v3519 = vmax.f32 %v3468, 0.0
        %v3520 = vmax.f32 %v3470, 0.0
        %v3521 = vmax.f32 %v3511, 0.0
        %v3522 = vmax.f32 %v3513, 0.0
        %v3523 = vpack.c.bf16 %v3519, %v3515
        %v3524 = vpack.c.bf16 %v3520, %v3516
        %v3525 = vpack.c.bf16 %v3521, %v3517
        %v3526 = vpack.c.bf16 %v3522, %v3518
        %s3527 = scalar_lea.vmem %s832, 768
        %v3528 = vld [vmem:[%s3527] sm:$0xf]
        %v3529 = vld [vmem:[%s3527 + $0x4] sm:$0xf]
        %v3530 = vld [vmem:[%s3527 + $0x8] sm:$0xf]
        %v3531 = vld [vmem:[%s3527 + $0xc] sm:$0xf]
        %v3532 = vld [vmem:[%s3527 + $0x10] sm:$0xf]
        %v3533 = vld [vmem:[%s3527 + $0x14] sm:$0xf]
        %v3534 = vld [vmem:[%s3527 + $0x18] sm:$0xf]
        %v3535 = vld [vmem:[%s3527 + $0x1c] sm:$0xf]
        %v3536 = vld [vmem:[%s3527 + $0x20] sm:$0xf]
        %v3537 = vld [vmem:[%s3527 + $0x24] sm:$0xf]
        %v3538 = vld [vmem:[%s3527 + $0x28] sm:$0xf]
        %v3539 = vld [vmem:[%s3527 + $0x2c] sm:$0xf]
        %v3540 = vld [vmem:[%s3527 + $0x30] sm:$0xf]
        %v3541 = vld [vmem:[%s3527 + $0x34] sm:$0xf]
        %v3542 = vld [vmem:[%s3527 + $0x38] sm:$0xf]
        %v3543 = vld [vmem:[%s3527 + $0x3c] sm:$0xf]
        %v3544 = vld [vmem:[%s3527 + $0x40] sm:$0xf]
        %v3545 = vld [vmem:[%s3527 + $0x44] sm:$0xf]
        %v3546 = vld [vmem:[%s3527 + $0x48] sm:$0xf]
        %v3547 = vld [vmem:[%s3527 + $0x4c] sm:$0xf]
        %v3548 = vld [vmem:[%s3527 + $0x50] sm:$0xf]
        %v3549 = vld [vmem:[%s3527 + $0x54] sm:$0xf]
        %v3550 = vld [vmem:[%s3527 + $0x58] sm:$0xf]
        %v3551 = vld [vmem:[%s3527 + $0x5c] sm:$0xf]
        %v3552 = vld [vmem:[%s3527 + $0x60] sm:$0xf]
        %v3553 = vld [vmem:[%s3527 + $0x64] sm:$0xf]
        %v3554 = vld [vmem:[%s3527 + $0x68] sm:$0xf]
        %v3555 = vld [vmem:[%s3527 + $0x6c] sm:$0xf]
        %v3556 = vld [vmem:[%s3527 + $0x70] sm:$0xf]
        %v3557 = vld [vmem:[%s3527 + $0x74] sm:$0xf]
        %v3558 = vld [vmem:[%s3527 + $0x78] sm:$0xf]
        %v3559 = vld [vmem:[%s3527 + $0x7c] sm:$0xf]
        %v3560 = vld [vmem:[%s3527 + $0x80] sm:$0xf]
        %v3561 = vld [vmem:[%s3527 + $0x84] sm:$0xf]
        %v3562 = vld [vmem:[%s3527 + $0x88] sm:$0xf]
        %v3563 = vld [vmem:[%s3527 + $0x8c] sm:$0xf]
        %v3564 = vld [vmem:[%s3527 + $0x90] sm:$0xf]
        %v3565 = vld [vmem:[%s3527 + $0x94] sm:$0xf]
        %v3566 = vld [vmem:[%s3527 + $0x98] sm:$0xf]
        %v3567 = vld [vmem:[%s3527 + $0x9c] sm:$0xf]
        %v3568 = vld [vmem:[%s3527 + $0xa0] sm:$0xf]
        %v3569 = vld [vmem:[%s3527 + $0xa4] sm:$0xf]
        %v3570 = vld [vmem:[%s3527 + $0xa8] sm:$0xf]
        %v3571 = vld [vmem:[%s3527 + $0xac] sm:$0xf]
        %v3572 = vld [vmem:[%s3527 + $0xb0] sm:$0xf]
        %v3573 = vld [vmem:[%s3527 + $0xb4] sm:$0xf]
        %v3574 = vld [vmem:[%s3527 + $0xb8] sm:$0xf]
        %v3575 = vld [vmem:[%s3527 + $0xbc] sm:$0xf]
        %v3576 = vld [vmem:[%s3527 + $0xc0] sm:$0xf]
        %v3577 = vld [vmem:[%s3527 + $0xc4] sm:$0xf]
        %v3578 = vld [vmem:[%s3527 + $0xc8] sm:$0xf]
        %v3579 = vld [vmem:[%s3527 + $0xcc] sm:$0xf]
        %v3580 = vld [vmem:[%s3527 + $0xd0] sm:$0xf]
        %v3581 = vld [vmem:[%s3527 + $0xd4] sm:$0xf]
        %v3582 = vld [vmem:[%s3527 + $0xd8] sm:$0xf]
        %v3583 = vld [vmem:[%s3527 + $0xdc] sm:$0xf]
        %v3584 = vld [vmem:[%s3527 + $0xe0] sm:$0xf]
        %v3585 = vld [vmem:[%s3527 + $0xe4] sm:$0xf]
        %v3586 = vld [vmem:[%s3527 + $0xe8] sm:$0xf]
        %v3587 = vld [vmem:[%s3527 + $0xec] sm:$0xf]
        %v3588 = vld [vmem:[%s3527 + $0xf0] sm:$0xf]
        %v3589 = vld [vmem:[%s3527 + $0xf4] sm:$0xf]
        %v3590 = vld [vmem:[%s3527 + $0xf8] sm:$0xf]
        %v3591 = vld [vmem:[%s3527 + $0xfc] sm:$0xf]
        %v3656 = vunpack.c.l.b16 %v3528
        %v3657 = vunpack.c.l.b16 %v3529
        %v3658 = vunpack.c.l.b16 %v3530
        %v3659 = vunpack.c.l.b16 %v3531
        %v3660 = vunpack.c.l.b16 %v3532
        %v3661 = vunpack.c.l.b16 %v3533
        %v3662 = vunpack.c.l.b16 %v3534
        %v3663 = vunpack.c.l.b16 %v3535
        %v3664 = vunpack.c.l.b16 %v3536
        %v3665 = vunpack.c.l.b16 %v3537
        %v3666 = vunpack.c.l.b16 %v3538
        %v3667 = vunpack.c.l.b16 %v3539
        %v3668 = vunpack.c.l.b16 %v3540
        %v3669 = vunpack.c.l.b16 %v3541
        %v3670 = vunpack.c.l.b16 %v3542
        %v3671 = vunpack.c.l.b16 %v3543
        %v3672 = vunpack.c.l.b16 %v3544
        %v3673 = vunpack.c.l.b16 %v3545
        %v3674 = vunpack.c.l.b16 %v3546
        %v3675 = vunpack.c.l.b16 %v3547
        %v3676 = vunpack.c.l.b16 %v3548
        %v3677 = vunpack.c.l.b16 %v3549
        %v3678 = vunpack.c.l.b16 %v3550
        %v3679 = vunpack.c.l.b16 %v3551
        %v3680 = vunpack.c.l.b16 %v3552
        %v3681 = vunpack.c.l.b16 %v3553
        %v3682 = vunpack.c.l.b16 %v3554
        %v3683 = vunpack.c.l.b16 %v3555
        %v3684 = vunpack.c.l.b16 %v3556
        %v3685 = vunpack.c.l.b16 %v3557
        %v3686 = vunpack.c.l.b16 %v3558
        %v3687 = vunpack.c.l.b16 %v3559
        %v3688 = vunpack.c.l.b16 %v3560
        %v3689 = vunpack.c.l.b16 %v3561
        %v3690 = vunpack.c.l.b16 %v3562
        %v3691 = vunpack.c.l.b16 %v3563
        %v3692 = vunpack.c.l.b16 %v3564
        %v3693 = vunpack.c.l.b16 %v3565
        %v3694 = vunpack.c.l.b16 %v3566
        %v3695 = vunpack.c.l.b16 %v3567
        %v3696 = vunpack.c.l.b16 %v3568
        %v3697 = vunpack.c.l.b16 %v3569
        %v3698 = vunpack.c.l.b16 %v3570
        %v3699 = vunpack.c.l.b16 %v3571
        %v3700 = vunpack.c.l.b16 %v3572
        %v3701 = vunpack.c.l.b16 %v3573
        %v3702 = vunpack.c.l.b16 %v3574
        %v3703 = vunpack.c.l.b16 %v3575
        %v3704 = vunpack.c.l.b16 %v3576
        %v3705 = vunpack.c.l.b16 %v3577
        %v3706 = vunpack.c.l.b16 %v3578
        %v3707 = vunpack.c.l.b16 %v3579
        %v3708 = vunpack.c.l.b16 %v3580
        %v3709 = vunpack.c.l.b16 %v3581
        %v3710 = vunpack.c.l.b16 %v3582
        %v3711 = vunpack.c.l.b16 %v3583
        %v3712 = vunpack.c.l.b16 %v3584
        %v3713 = vunpack.c.l.b16 %v3585
        %v3714 = vunpack.c.l.b16 %v3586
        %v3715 = vunpack.c.l.b16 %v3587
        %v3716 = vunpack.c.l.b16 %v3588
        %v3717 = vunpack.c.l.b16 %v3589
        %v3718 = vunpack.c.l.b16 %v3590
        %v3719 = vunpack.c.l.b16 %v3591
        %v3720 = vpack.c.b16 %v3657, %v3656
        %v3721 = vpack.c.b16 %v3659, %v3658
        %v3722 = vpack.c.b16 %v3661, %v3660
        %v3723 = vpack.c.b16 %v3663, %v3662
        %v3724 = vpack.c.b16 %v3665, %v3664
        %v3725 = vpack.c.b16 %v3667, %v3666
        %v3726 = vpack.c.b16 %v3669, %v3668
        %v3727 = vpack.c.b16 %v3671, %v3670
        %v3728 = vpack.c.b16 %v3673, %v3672
        %v3729 = vpack.c.b16 %v3675, %v3674
        %v3730 = vpack.c.b16 %v3677, %v3676
        %v3731 = vpack.c.b16 %v3679, %v3678
        %v3732 = vpack.c.b16 %v3681, %v3680
        %v3733 = vpack.c.b16 %v3683, %v3682
        %v3734 = vpack.c.b16 %v3685, %v3684
        %v3735 = vpack.c.b16 %v3687, %v3686
        %v3736 = vpack.c.b16 %v3689, %v3688
        %v3737 = vpack.c.b16 %v3691, %v3690
        %v3738 = vpack.c.b16 %v3693, %v3692
        %v3739 = vpack.c.b16 %v3695, %v3694
        %v3740 = vpack.c.b16 %v3697, %v3696
        %v3741 = vpack.c.b16 %v3699, %v3698
        %v3742 = vpack.c.b16 %v3701, %v3700
        %v3743 = vpack.c.b16 %v3703, %v3702
        %v3744 = vpack.c.b16 %v3705, %v3704
        %v3745 = vpack.c.b16 %v3707, %v3706
        %v3746 = vpack.c.b16 %v3709, %v3708
        %v3747 = vpack.c.b16 %v3711, %v3710
        %v3748 = vpack.c.b16 %v3713, %v3712
        %v3749 = vpack.c.b16 %v3715, %v3714
        %v3750 = vpack.c.b16 %v3717, %v3716
        %v3751 = vpack.c.b16 %v3719, %v3718
        %3784 = vmatprep.subr.bf16.mxu0 0
        %3785 = vmatpush1.bf16.msra.mxu0 %v3720
        %3786 = vmatprep.subr.bf16.mxu0 0
        %3787 = vmatpush1.bf16.msra.mxu0 %v3721
        %3788 = vmatprep.subr.bf16.mxu0 0
        %3789 = vmatpush1.bf16.msra.mxu0 %v3722
        %3790 = vmatprep.subr.bf16.mxu0 0
        %3791 = vmatpush1.bf16.msra.mxu0 %v3723
        %3792 = vmatprep.subr.bf16.mxu0 0
        %3793 = vmatpush1.bf16.msra.mxu0 %v3724
        %3794 = vmatprep.subr.bf16.mxu0 0
        %3795 = vmatpush1.bf16.msra.mxu0 %v3725
        %3796 = vmatprep.subr.bf16.mxu0 0
        %3797 = vmatpush1.bf16.msra.mxu0 %v3726
        %3798 = vmatprep.subr.bf16.mxu0 0
        %3799 = vmatpush1.bf16.msra.mxu0 %v3727
        %3800 = vmatprep.subr.bf16.mxu0 0
        %3801 = vmatpush1.bf16.msra.mxu0 %v3728
        %3802 = vmatprep.subr.bf16.mxu0 0
        %3803 = vmatpush1.bf16.msra.mxu0 %v3729
        %3804 = vmatprep.subr.bf16.mxu0 0
        %3805 = vmatpush1.bf16.msra.mxu0 %v3730
        %3806 = vmatprep.subr.bf16.mxu0 0
        %3807 = vmatpush1.bf16.msra.mxu0 %v3731
        %3808 = vmatprep.subr.bf16.mxu0 0
        %3809 = vmatpush1.bf16.msra.mxu0 %v3732
        %3810 = vmatprep.subr.bf16.mxu0 0
        %3811 = vmatpush1.bf16.msra.mxu0 %v3733
        %3812 = vmatprep.subr.bf16.mxu0 0
        %3813 = vmatpush1.bf16.msra.mxu0 %v3734
        %3814 = vmatprep.subr.bf16.mxu0 0
        %3815 = vmatpush1.bf16.msra.mxu0 %v3735
        %3816 = vmatprep.mubr.bf16.mxu0 %v3524
        %3817 = vmatmul.mubr.bf16.gmra.mrb[0].mxu0 %v3523
        %v3818 = vpop.f32.mrb[0].mxu0
        %v3819 = vadd.f32 0.0, %v3818
        %v3820 = vpop.f32.mrb[0].mxu0
        %v3821 = vpop.f32.mrb[0].mxu0
        %v3822 = vadd.f32 0.0, %v3821
        %v3823 = vpop.f32.mrb[0].mxu0
        %3824 = vdwg.mxu0
        %3825 = vmatprep.subr.bf16.mxu0 0
        %3826 = vmatpush1.bf16.msra.mxu0 %v3736
        %3827 = vmatprep.subr.bf16.mxu0 0
        %3828 = vmatpush1.bf16.msra.mxu0 %v3737
        %3829 = vmatprep.subr.bf16.mxu0 0
        %3830 = vmatpush1.bf16.msra.mxu0 %v3738
        %3831 = vmatprep.subr.bf16.mxu0 0
        %3832 = vmatpush1.bf16.msra.mxu0 %v3739
        %3833 = vmatprep.subr.bf16.mxu0 0
        %3834 = vmatpush1.bf16.msra.mxu0 %v3740
        %3835 = vmatprep.subr.bf16.mxu0 0
        %3836 = vmatpush1.bf16.msra.mxu0 %v3741
        %3837 = vmatprep.subr.bf16.mxu0 0
        %3838 = vmatpush1.bf16.msra.mxu0 %v3742
        %3839 = vmatprep.subr.bf16.mxu0 0
        %3840 = vmatpush1.bf16.msra.mxu0 %v3743
        %3841 = vmatprep.subr.bf16.mxu0 0
        %3842 = vmatpush1.bf16.msra.mxu0 %v3744
        %3843 = vmatprep.subr.bf16.mxu0 0
        %3844 = vmatpush1.bf16.msra.mxu0 %v3745
        %3845 = vmatprep.subr.bf16.mxu0 0
        %3846 = vmatpush1.bf16.msra.mxu0 %v3746
        %3847 = vmatprep.subr.bf16.mxu0 0
        %3848 = vmatpush1.bf16.msra.mxu0 %v3747
        %3849 = vmatprep.subr.bf16.mxu0 0
        %3850 = vmatpush1.bf16.msra.mxu0 %v3748
        %3851 = vmatprep.subr.bf16.mxu0 0
        %3852 = vmatpush1.bf16.msra.mxu0 %v3749
        %3853 = vmatprep.subr.bf16.mxu0 0
        %3854 = vmatpush1.bf16.msra.mxu0 %v3750
        %3855 = vmatprep.subr.bf16.mxu0 0
        %3856 = vmatpush1.bf16.msra.mxu0 %v3751
        %3857 = vmatprep.mubr.bf16.mxu0 %v3526
        %3858 = vmatmul.mubr.bf16.gmra.mrb[0].mxu0 %v3525
        %v3859 = vpop.f32.mrb[0].mxu0
        %v3860 = vadd.f32 %v3819, %v3859
        %v3861 = vpop.f32.mrb[0].mxu0
        %v3862 = vpop.f32.mrb[0].mxu0
        %v3863 = vadd.f32 %v3822, %v3862
        %v3864 = vpop.f32.mrb[0].mxu0
        %3865 = vdwg.mxu0
        %v3866 = vadd.f32 %v3355, %v3860
        %v3867 = vadd.f32 %v3356, %v3863
        %v3868 = vadd.f32 %v1825, %v3866
        %v3869 = vadd.f32 %v1826, %v3867
        %v3870 = vld [vmem:[%s835] sm:$0x1]
        %v3872 = vlaneseq
        %v3873 = vshrl.u32 %v3872, 7
        %v3874 = vsub.s32 0, %v3873
        %v3875 = vrot.slane %v3870, %v3874
        %v3877 = vadd.f32 %v3868, %v3875
        %v3878 = vadd.f32 %v3869, %v3875
        %v3879 = vld [vmem:[%s838] sm:$0x1]
        %v3880 = vld [vmem:[%s841] sm:$0x1]
        %v3881 = vsel %vm1142, %v3877, 0.0
        %3882 = vadd.xlane.f32.xlu0 %v3881
        %v3883 = vpop.xlane.xlu0 %3882
        %v3884 = vsel %vm1142, %v3878, 0.0
        %3885 = vadd.xlane.f32.xlu0 %v3884
        %v3886 = vpop.xlane.xlu0 %3885
        %v3887 = vmul.f32 %v3883, %v1790
        %v3888 = vmul.f32 %v3886, %v1790
        %v3889 = vsub.f32 %v3877, %v3887
        %v3890 = vsub.f32 %v3878, %v3888
        %v3891 = vmul.f32 %v3889, %v3889
        %v3892 = vmul.f32 %v3890, %v3890
        %v3893 = vsel %vm1142, %v3891, 0.0
        %3894 = vadd.xlane.f32.xlu0 %v3893
        %v3895 = vpop.xlane.xlu0 %3894
        %v3896 = vsel %vm1142, %v3892, 0.0
        %3897 = vadd.xlane.f32.xlu0 %v3896
        %v3898 = vpop.xlane.xlu0 %3897
        %v3899 = vmul.f32 %v3895, %v1790
        %v3900 = vmul.f32 %v3898, %v1790
        %v3901 = vadd.f32 %v3899, 1e-05
        %v3902 = vadd.f32 %v3900, 1e-05
        %v3903 = vrsqrt.pop %v3901
        %v3904 = vrsqrt.pop %v3902
        %v3905 = vmul.f32 %v3889, %v3903
        %v3906 = vmul.f32 %v3890, %v3904
        %v3908 = vlaneseq
        %v3909 = vshrl.u32 %v3908, 7
        %v3910 = vsub.s32 0, %v3909
        %v3911 = vrot.slane %v3879, %v3910
        %v3913 = vmul.f32 %v3905, %v3911
        %v3914 = vmul.f32 %v3906, %v3911
        %v3916 = vlaneseq
        %v3917 = vshrl.u32 %v3916, 7
        %v3918 = vsub.s32 0, %v3917
        %v3919 = vrot.slane %v3880, %v3918
        %v3921 = vadd.f32 %v3913, %v3919
        %v3922 = vadd.f32 %v3914, %v3919
        %3923 = vst.msk [vmem:[#allocation2] sm:$0xff] %vm1142, %v3921
        %3924 = vst.msk [vmem:[#allocation2 + $0x8] sm:$0xff] %vm1142, %v3922
        %p3925 = scmp.eq.s32.totalorder %s38, 1
        // Predicated region
        $region101: #{tpu_custom_call.1} parent=95 // pred_check
          %p3926 = pneg %p3925
        $region102: #{tpu_custom_call.1} parent=95 // pred_check_branch
          %3928 = sbr.rel (%p3926) target = $region104
        $region103: #{tpu_custom_call.1} parent=95 // pred_region
          %3929 = vst.msk [vmem:[%s783] sm:$0xff] %vm1142, %v3921
          %3930 = vst.msk [vmem:[%s783 + $0x8] sm:$0xff] %vm1142, %v3922
        $region104: #{tpu_custom_call.1} parent=95 // pred_fallthru
          _
        %s3931 = sand.u32 %s527, 1
        %s3932 = scalar_lea.sflag [#allocation4], %s3931
        %s3933 = sand.u32 %s527, 1
        %s3934 = smul.addr %s3933, 16
        %s3935 = scalar_lea.vmem [#allocation3], %s3934
        // Predicated region
        $region105: #{tpu_custom_call.1} parent=95 // pred_check
          %p3936 = pneg %p537
        $region106: #{tpu_custom_call.1} parent=95 // pred_check_branch
          %3938 = sbr.rel (%p3936) target = $region108
        $region107: #{tpu_custom_call.1} parent=95 // pred_region
          %s3940 = ssub.s32 256, 256
          %3941 = vsyncadd %s3932, %s3940
          %s3942 = smul.addr %s37, 2
          %s3943 = smul.addr %s3942, 128
          %s3944 = scalar_lea.hbm %s19, %s3943
          %s3945 = sshll.u32 %s3935, 4
          %s3946 = int_to_ptr.vmem [resolvable:$true] %s3945
          %3951 = dma.vmem_to_hbm [thread:$0]  %s3946, 256, %s3944, %s3932, 128, 128, 8
        $region108: #{tpu_custom_call.1} parent=95 // pred_fallthru
          _
      $region96: #{tpu_custom_call.1} parent=5 // pred_fallthru
        _
      %p3952 = scmp.le.s32.totalorder 2, %s28
      // Predicated region
      $region109: #{tpu_custom_call.1} parent=5 // pred_check
        %p3953 = pneg %p3952
      $region110: #{tpu_custom_call.1} parent=5 // pred_check_branch
        %3955 = sbr.rel (%p3953) target = $region112
      $region111: #{tpu_custom_call.1} parent=5 // pred_region
        %s3956 = ssub.s32 %s28, 2
        // Predicated region
        $region113: #{tpu_custom_call.1} parent=111 // pred_check
          %p3957 = pneg %p543
        $region114: #{tpu_custom_call.1} parent=111 // pred_check_branch
          %3959 = sbr.rel (%p3957) target = $region116
        $region115: #{tpu_custom_call.1} parent=111 // pred_region
          %s3960 = sand.u32 %s528, 1
          %s3961 = scalar_lea.sflag [#allocation4], %s3960
          %s3962 = sand.u32 %s528, 1
          %s3963 = smul.addr %s3962, 16
          %s3964 = scalar_lea.vmem [#allocation3], %s3963
          %3965 = dma.done %s3961, 256
        $region116: #{tpu_custom_call.1} parent=111 // pred_fallthru
          _
      $region112: #{tpu_custom_call.1} parent=5 // pred_fallthru
        _
    $region6: #{tpu_custom_call.1} parent=1 // loop_footer
      %s32 = sadd.s32 1, %s28
    $region7: #{tpu_custom_call.1} parent=1 // loop_footer_branch
      %27 = sbr.rel target = $region3
    $region8: #{tpu_custom_call.1} parent=1 // loop_exit
      _
    %3966 = vsyncpa [#allocation4], 1
    %s3967 = scalar_lea.sflag [#allocation4], 1
    %3968 = vsyncpa %s3967, 1

</llo_original>
